<compile_context>
chip_gen: v7x
topology: tpu7x:2x2x1
jax: 0.10.0
libtpu: 0.0.40
codegen_flags: <defaults>
</compile_context>

<pallas_src>
import jax
import jax.numpy as jnp
from jax.experimental import pallas as pl
from jax.experimental.pallas import tpu as pltpu

SEQ = 49               # tokens
FEAT = 7 * 16          # 112 per-token features
FLAT = SEQ * FEAT      # 5488 flattened features
D = 512                # model / output dim
CHUNK = 8              # token chunk (one sublane tile) for the streaming max


# ---------------------------------------------------------------------------
# Kernel 1: 'mlp' semantic head, single grid step per hidden-dim split.
#   part_n = relu(x @ W1[:, n] + b1[n]) @ W2[n, :]          (bf16 MXU, f32 acc)
#   out    = sum_n part_n + b2                               (tiny JAX-side add)
# With n_split == 1 (default) this is one whole-block step: W1 streams through
# VMEM once with no K-grid / accumulator machinery.  With n_split == 2 the
# grid axis is truly "parallel" (disjoint output blocks) and shards across
# v7x's two TensorCores.
# ---------------------------------------------------------------------------
def _mlp_head_kernel(x_ref, w1_ref, b1_ref, w2_ref, part_ref):
    x = x_ref[...].astype(jnp.bfloat16)                          # (B, FLAT)
    h = jnp.dot(x, w1_ref[...],
                preferred_element_type=jnp.float32) + b1_ref[...]  # f32 (B, hblk)
    h = jnp.maximum(h, 0.0)
    part_ref[0] = jnp.dot(h.astype(jnp.bfloat16), w2_ref[...],
                          preferred_element_type=jnp.float32)    # (B, D)


def mlp_sem_head(x_flat, w1, b1, w2, b2, *, n_split=1):
    """x_flat: (B, 5488) f32; w1: (5488, 512) bf16; biases f32.
    n_split=2 gives v7x a parallel axis over the hidden dim (neutral on
    v5e/v6e, which have one TensorCore)."""
    B = x_flat.shape[0]
    assert D % n_split == 0
    hblk = D // n_split
    parts = pl.pallas_call(
        _mlp_head_kernel,
        out_shape=jax.ShapeDtypeStruct((n_split, B, D), jnp.float32),
        grid=(n_split,),
        in_specs=[
            pl.BlockSpec((B, FLAT), lambda n: (0, 0)),
            pl.BlockSpec((FLAT, hblk), lambda n: (0, n)),
            pl.BlockSpec((1, hblk), lambda n: (0, n)),
            pl.BlockSpec((hblk, D), lambda n: (n, 0)),
        ],
        out_specs=pl.BlockSpec((1, B, D), lambda n: (n, 0, 0)),
        compiler_params=pltpu.CompilerParams(
            dimension_semantics=("parallel",),
            vmem_limit_bytes=32 * 1024 * 1024,   # ~12.5 MB actually used
        ),
    )(x_flat, w1, b1, w2)
    return parts.sum(axis=0) + b2


# ---------------------------------------------------------------------------
# Kernel 2: SemTransEncoder ('transen') head, TB batch elements per grid step.
# Token-chunked streaming max:
#   for each 8-token chunk c:
#     f_c   = (x_c flattened to (TB*8, 112)) @ Win + bin     one 2-D MXU matmul
#     f_c  *= mask_c
#     run   = max(run, max_over_chunk_tokens(f_c))           (TB, 512)
#   out = relu(run @ W1 + b1) @ W2 + b2
# The last chunk starts at SEQ-8 (re-reads tokens 41..47); max is idempotent,
# so the result is exactly the max over the 49 real tokens.
# ---------------------------------------------------------------------------
def _sem_transen_kernel(lat_ref, mask_ref, win_ref, bin_ref,
                        w1_ref, b1_ref, w2_ref, b2_ref, o_ref):
    tb = lat_ref.shape[0]
    win = win_ref[...]                                           # bf16 (112, 512)
    bias_in = bin_ref[...]                                       # f32  (1, 512)

    starts = list(range(0, SEQ - CHUNK + 1, CHUNK))              # 0,8,...,40
    if starts[-1] + CHUNK < SEQ:
        starts.append(SEQ - CHUNK)                               # 41 (overlap OK)

    run = jnp.full((tb, D), -jnp.inf, dtype=jnp.float32)
    for start in starts:
        x_c = lat_ref[:, pl.ds(start, CHUNK), :]                 # (TB, 8, 112) f32
        m_c = mask_ref[:, pl.ds(start, CHUNK), :]                # (TB, 8, 1)   f32
        x2d = x_c.reshape(tb * CHUNK, FEAT).astype(jnp.bfloat16)
        f = jnp.dot(x2d, win,
                    preferred_element_type=jnp.float32) + bias_in  # (TB*8, 512)
        # TODO(synk): TransformerEncoder self-attention layers unspecified in reference.
        f = f * m_c.reshape(tb * CHUNK, 1)
        f = jnp.max(f.reshape(tb, CHUNK, D), axis=1)             # (TB, 512)
        run = jnp.maximum(run, f)

    h = jnp.dot(run.astype(jnp.bfloat16), w1_ref[...],
                preferred_element_type=jnp.float32) + b1_ref[...]
    h = jnp.maximum(h, 0.0)
    o = jnp.dot(h.astype(jnp.bfloat16), w2_ref[...],
                preferred_element_type=jnp.float32) + b2_ref[...]
    o_ref[...] = o.astype(o_ref.dtype)


def _pick_tb(batch, tb):
    """Largest legal batch tile: either the full batch (single step) or a
    multiple-of-8 divisor of B (keeps blocked specs (8,128)-legal without
    padding the batch)."""
    if batch <= tb:
        return batch
    cap = tb - (tb % 8)
    for cand in range(cap, 7, -8):
        if batch % cand == 0:
            return cand
    return batch   # fallback: single whole-batch block


def transen_sem_head(latent_tokens, mask, win, bin_, w1, b1, w2, b2, *, tb=64):
    """latent_tokens: (B, 49, 112) f32; mask: (B, 49, 1) f32; win: (112,512) bf16.
    tb: target batch tile (64-128 amortises per-step overhead and fills MXU
    rows; pick tb so n_b >= 2 on v7x to use both TensorCores)."""
    B = latent_tokens.shape[0]
    TB = _pick_tb(B, tb)
    n_b = B // TB
    return pl.pallas_call(
        _sem_transen_kernel,
        out_shape=jax.ShapeDtypeStruct((B, D), jnp.float32),
        grid=(n_b,),
        in_specs=[
            pl.BlockSpec((TB, SEQ, FEAT), lambda b: (b, 0, 0)),
            pl.BlockSpec((TB, SEQ, 1), lambda b: (b, 0, 0)),
            pl.BlockSpec((FEAT, D), lambda b: (0, 0)),
            pl.BlockSpec((1, D), lambda b: (0, 0)),
            pl.BlockSpec((D, D), lambda b: (0, 0)),
            pl.BlockSpec((1, D), lambda b: (0, 0)),
            pl.BlockSpec((D, D), lambda b: (0, 0)),
            pl.BlockSpec((1, D), lambda b: (0, 0)),
        ],
        out_specs=pl.BlockSpec((TB, D), lambda b: (b, 0)),
        compiler_params=pltpu.CompilerParams(
            dimension_semantics=("parallel",),            # megacore-shardable
            vmem_limit_bytes=32 * 1024 * 1024,
        ),
    )(latent_tokens, mask, win, bin_, w1, b1, w2, b2)


# ---------------------------------------------------------------------------
# Parameter init (deterministic, synthetic) and kernel-side prep (bf16 weights).
# ---------------------------------------------------------------------------
def _linear_init(key, fan_in, fan_out):
    kw, kb = jax.random.split(key)
    scale = 1.0 / jnp.sqrt(jnp.float32(fan_in))
    w = jax.random.normal(kw, (fan_in, fan_out), jnp.float32) * scale
    b = jax.random.normal(kb, (1, fan_out), jnp.float32) * scale
    return w, b


def init_params(key):
    k = jax.random.split(key, 5)
    params = {}
    # 'mlp' semantic head
    params["mlp_w1"], params["mlp_b1"] = _linear_init(k[0], FLAT, D)
    params["mlp_w2"], params["mlp_b2"] = _linear_init(k[1], D, D)
    # SemTransEncoder: encoder input projection + post-max MLP
    params["enc_win"], params["enc_bin"] = _linear_init(k[2], FEAT, D)
    params["t_w1"], params["t_b1"] = _linear_init(k[3], D, D)
    params["t_w2"], params["t_b2"] = _linear_init(k[4], D, D)
    return params


def prepare_kernel_params(p):
    """Cast weights to bf16 (halves HBM weight traffic); biases stay f32
    (elementwise path).  No padding: full-dim blocks handle 5488 / 112."""
    kp = {}
    kp["mlp_w1"] = p["mlp_w1"].astype(jnp.bfloat16)
    kp["mlp_b1"] = p["mlp_b1"]
    kp["mlp_w2"] = p["mlp_w2"].astype(jnp.bfloat16)
    kp["mlp_b2"] = p["mlp_b2"]
    kp["enc_win"] = p["enc_win"].astype(jnp.bfloat16)
    kp["enc_bin"] = p["enc_bin"]
    kp["t_w1"] = p["t_w1"].astype(jnp.bfloat16)
    kp["t_b1"] = p["t_b1"]
    kp["t_w2"] = p["t_w2"].astype(jnp.bfloat16)
    kp["t_b2"] = p["t_b2"]
    return kp


def motion_clip_forward(kparams, batch_data, sem_head="transen"):
    # TODO(synk): CLIP text encoding skipped (frozen pretrained model); passed through.
    real_smpl_text_emd = batch_data["real_smpl_input"]["token_text_emd"]
    latent = batch_data["real_smpl_input"]["smpl_latent"]      # (B, 49, 7, 16)
    B = latent.shape[0]

    if sem_head == "mlp":
        x_flat = latent.reshape(B, FLAT)
        pred = mlp_sem_head(x_flat, kparams["mlp_w1"], kparams["mlp_b1"],
                            kparams["mlp_w2"], kparams["mlp_b2"])
    elif sem_head == "transen":
        tokens = latent.reshape(B, SEQ, FEAT)
        mask = batch_data["real_smpl_input"]["mask"]            # (B, 49, 1, 1)
        mask = jnp.squeeze(mask, axis=-1)                       # (B, 49, 1)
        pred = transen_sem_head(tokens, mask,
                                kparams["enc_win"], kparams["enc_bin"],
                                kparams["t_w1"], kparams["t_b1"],
                                kparams["t_w2"], kparams["t_b2"])
    else:
        raise NotImplementedError(sem_head)

    return {"real_smpl_text_emd": real_smpl_text_emd,
            "real_smpl_text_emd_pred": pred}


# ---------------------------------------------------------------------------
# Pure-JAX references (precision-matched: bf16 MXU operands, f32 accumulate).
# ---------------------------------------------------------------------------
def _ref_mlp(latent, p):
    x = latent.reshape(latent.shape[0], FLAT).astype(jnp.bfloat16)
    w1 = p["mlp_w1"].astype(jnp.bfloat16)
    w2 = p["mlp_w2"].astype(jnp.bfloat16)
    h = jnp.dot(x, w1, preferred_element_type=jnp.float32) + p["mlp_b1"]
    h = jnp.maximum(h, 0.0)
    return jnp.dot(h.astype(jnp.bfloat16), w2,
                   preferred_element_type=jnp.float32) + p["mlp_b2"]


def _ref_transen(latent, mask, p):
    x = latent.reshape(latent.shape[0], SEQ, FEAT).astype(jnp.bfloat16)
    win = p["enc_win"].astype(jnp.bfloat16)
    feat = jnp.einsum("bsf,fd->bsd", x, win,
                      preferred_element_type=jnp.float32) + p["enc_bin"]
    feat = feat * jnp.squeeze(mask, axis=-1)                    # (B, 49, 1) broadcast
    maxf = jnp.max(feat, axis=1)                                # (B, 512)
    h = jnp.maximum(jnp.dot(maxf.astype(jnp.bfloat16),
                            p["t_w1"].astype(jnp.bfloat16),
                            preferred_element_type=jnp.float32) + p["t_b1"], 0.0)
    return jnp.dot(h.astype(jnp.bfloat16), p["t_w2"].astype(jnp.bfloat16),
                   preferred_element_type=jnp.float32) + p["t_b2"]


if __name__ == "__main__":
    key = jax.random.PRNGKey(0)
    k_lat, k_mask, k_txt, k_par = jax.random.split(key, 4)

    B = 2
    latent = jax.random.normal(k_lat, (B, SEQ, 7, 16), jnp.float32)
    mask = (jax.random.uniform(k_mask, (B, SEQ, 1, 1)) > 0.2).astype(jnp.float32)
    text_emd = jax.random.normal(k_txt, (B, D), jnp.float32)    # stand-in CLIP text emb

    params = init_params(k_par)
    kparams = prepare_kernel_params(params)
    batch_data = {"real_smpl_input": {"smpl_latent": latent,
                                      "mask": mask,
                                      "token_text_emd": text_emd}}

    # transen (SemTransEncoder) head
    out_t = motion_clip_forward(kparams, batch_data, sem_head="transen")
    pred_t = jax.block_until_ready(out_t["real_smpl_text_emd_pred"])
    ref_t = _ref_transen(latent, mask, params)
    assert pred_t.shape == (B, D)
    assert jnp.allclose(pred_t, ref_t, atol=1e-2, rtol=1e-2), \
        float(jnp.max(jnp.abs(pred_t - ref_t)))

    # mlp head
    out_m = motion_clip_forward(kparams, batch_data, sem_head="mlp")
    pred_m = jax.block_until_ready(out_m["real_smpl_text_emd_pred"])
    ref_m = _ref_mlp(latent, params)
    assert pred_m.shape == (B, D)
    assert jnp.allclose(pred_m, ref_m, atol=1e-2, rtol=1e-2), \
        float(jnp.max(jnp.abs(pred_m - ref_m)))

    print("KERNEL_OK")
</pallas_src>

<mosaic_0001>
module attributes {stable_mosaic.version = 11 : i64} {
  func.func @_sem_transen_kernel(%arg0: i32, %arg1: memref<2x49x112xf32, #tpu.memory_space<vmem>>, %arg2: memref<2x49x1xf32, #tpu.memory_space<vmem>>, %arg3: memref<112x512xbf16, #tpu.memory_space<vmem>>, %arg4: memref<1x512xf32, #tpu.memory_space<vmem>>, %arg5: memref<512x512xbf16, #tpu.memory_space<vmem>>, %arg6: memref<1x512xf32, #tpu.memory_space<vmem>>, %arg7: memref<512x512xbf16, #tpu.memory_space<vmem>>, %arg8: memref<1x512xf32, #tpu.memory_space<vmem>>, %arg9: memref<2x512xf32, #tpu.memory_space<vmem>>) attributes {dimension_semantics = [#tpu.dimension_semantics<parallel>], iteration_bounds = array<i64: 1>, scalar_prefetch = 0 : i64, scratch_operands = 0 : i64, tpu.core_type = #tpu.core_type<tc>, window_params = [{transform_indices = @transform_0, window_bounds = array<i64: 2, 49, 112>}, {transform_indices = @transform_1, window_bounds = array<i64: 2, 49, 1>}, {pipeline_mode = #tpu.pipeline_mode<synchronous>, transform_indices = @transform_2, window_bounds = array<i64: 112, 512>}, {pipeline_mode = #tpu.pipeline_mode<synchronous>, transform_indices = @transform_3, window_bounds = array<i64: 1, 512>}, {pipeline_mode = #tpu.pipeline_mode<synchronous>, transform_indices = @transform_4, window_bounds = array<i64: 512, 512>}, {pipeline_mode = #tpu.pipeline_mode<synchronous>, transform_indices = @transform_5, window_bounds = array<i64: 1, 512>}, {pipeline_mode = #tpu.pipeline_mode<synchronous>, transform_indices = @transform_6, window_bounds = array<i64: 512, 512>}, {pipeline_mode = #tpu.pipeline_mode<synchronous>, transform_indices = @transform_7, window_bounds = array<i64: 1, 512>}, {transform_indices = @transform_8, window_bounds = array<i64: 2, 512>}]} {
    %c0 = arith.constant 0 : index
    %c0_0 = arith.constant 0 : index
    %0 = vector.load %arg3[%c0, %c0_0] : memref<112x512xbf16, #tpu.memory_space<vmem>>, vector<112x512xbf16>
    %c0_1 = arith.constant 0 : index
    %c0_2 = arith.constant 0 : index
    %1 = vector.load %arg4[%c0_1, %c0_2] : memref<1x512xf32, #tpu.memory_space<vmem>>, vector<1x512xf32>
    %cst = arith.constant 0xFF800000 : f32
    %2 = vector.broadcast %cst : f32 to vector<2x512xf32>
    %c0_3 = arith.constant 0 : index
    %c0_4 = arith.constant 0 : index
    %c0_5 = arith.constant 0 : index
    %3 = vector.load %arg1[%c0_3, %c0_4, %c0_5] : memref<2x49x112xf32, #tpu.memory_space<vmem>>, vector<2x8x112xf32>
    %c0_6 = arith.constant 0 : index
    %c0_7 = arith.constant 0 : index
    %c0_8 = arith.constant 0 : index
    %4 = vector.load %arg2[%c0_6, %c0_7, %c0_8] : memref<2x49x1xf32, #tpu.memory_space<vmem>>, vector<2x8x1xf32>
    %5 = vector.shape_cast %3 : vector<2x8x112xf32> to vector<16x112xf32>
    %6 = arith.truncf %5 : vector<16x112xf32> to vector<16x112xbf16>
    %cst_9 = arith.constant dense<0.000000e+00> : vector<16x512xf32>
    %7 = tpu.matmul %6, %0, %cst_9 {dimension_numbers = #tpu.dot_dimension_numbers<[1], [0], [0], [1], [0, 0, 1, 1], [], []>} : vector<16x112xbf16>, vector<112x512xbf16>, vector<16x512xf32> -> vector<16x512xf32>
    %8 = vector.broadcast %1 : vector<1x512xf32> to vector<16x512xf32>
    %9 = arith.addf %7, %8 : vector<16x512xf32>
    %10 = vector.shape_cast %4 : vector<2x8x1xf32> to vector<16x1xf32>
    %11 = vector.broadcast %10 : vector<16x1xf32> to vector<16x512xf32>
    %12 = arith.mulf %9, %11 : vector<16x512xf32>
    %13 = vector.shape_cast %12 : vector<16x512xf32> to vector<2x8x512xf32>
    %cst_10 = arith.constant dense<0xFF800000> : vector<2x512xf32>
    %14 = vector.multi_reduction <maximumf>, %13, %cst_10 [1] : vector<2x8x512xf32> to vector<2x512xf32>
    %15 = arith.maximumf %2, %14 : vector<2x512xf32>
    %c0_11 = arith.constant 0 : index
    %c8 = arith.constant 8 : index
    %c0_12 = arith.constant 0 : index
    %16 = vector.load %arg1[%c0_11, %c8, %c0_12] : memref<2x49x112xf32, #tpu.memory_space<vmem>>, vector<2x8x112xf32>
    %c0_13 = arith.constant 0 : index
    %c8_14 = arith.constant 8 : index
    %c0_15 = arith.constant 0 : index
    %17 = vector.load %arg2[%c0_13, %c8_14, %c0_15] : memref<2x49x1xf32, #tpu.memory_space<vmem>>, vector<2x8x1xf32>
    %18 = vector.shape_cast %16 : vector<2x8x112xf32> to vector<16x112xf32>
    %19 = arith.truncf %18 : vector<16x112xf32> to vector<16x112xbf16>
    %cst_16 = arith.constant dense<0.000000e+00> : vector<16x512xf32>
    %20 = tpu.matmul %19, %0, %cst_16 {dimension_numbers = #tpu.dot_dimension_numbers<[1], [0], [0], [1], [0, 0, 1, 1], [], []>} : vector<16x112xbf16>, vector<112x512xbf16>, vector<16x512xf32> -> vector<16x512xf32>
    %21 = vector.broadcast %1 : vector<1x512xf32> to vector<16x512xf32>
    %22 = arith.addf %20, %21 : vector<16x512xf32>
    %23 = vector.shape_cast %17 : vector<2x8x1xf32> to vector<16x1xf32>
    %24 = vector.broadcast %23 : vector<16x1xf32> to vector<16x512xf32>
    %25 = arith.mulf %22, %24 : vector<16x512xf32>
    %26 = vector.shape_cast %25 : vector<16x512xf32> to vector<2x8x512xf32>
    %cst_17 = arith.constant dense<0xFF800000> : vector<2x512xf32>
    %27 = vector.multi_reduction <maximumf>, %26, %cst_17 [1] : vector<2x8x512xf32> to vector<2x512xf32>
    %28 = arith.maximumf %15, %27 : vector<2x512xf32>
    %c0_18 = arith.constant 0 : index
    %c16 = arith.constant 16 : index
    %c0_19 = arith.constant 0 : index
    %29 = vector.load %arg1[%c0_18, %c16, %c0_19] : memref<2x49x112xf32, #tpu.memory_space<vmem>>, vector<2x8x112xf32>
    %c0_20 = arith.constant 0 : index
    %c16_21 = arith.constant 16 : index
    %c0_22 = arith.constant 0 : index
    %30 = vector.load %arg2[%c0_20, %c16_21, %c0_22] : memref<2x49x1xf32, #tpu.memory_space<vmem>>, vector<2x8x1xf32>
    %31 = vector.shape_cast %29 : vector<2x8x112xf32> to vector<16x112xf32>
    %32 = arith.truncf %31 : vector<16x112xf32> to vector<16x112xbf16>
    %cst_23 = arith.constant dense<0.000000e+00> : vector<16x512xf32>
    %33 = tpu.matmul %32, %0, %cst_23 {dimension_numbers = #tpu.dot_dimension_numbers<[1], [0], [0], [1], [0, 0, 1, 1], [], []>} : vector<16x112xbf16>, vector<112x512xbf16>, vector<16x512xf32> -> vector<16x512xf32>
    %34 = vector.broadcast %1 : vector<1x512xf32> to vector<16x512xf32>
    %35 = arith.addf %33, %34 : vector<16x512xf32>
    %36 = vector.shape_cast %30 : vector<2x8x1xf32> to vector<16x1xf32>
    %37 = vector.broadcast %36 : vector<16x1xf32> to vector<16x512xf32>
    %38 = arith.mulf %35, %37 : vector<16x512xf32>
    %39 = vector.shape_cast %38 : vector<16x512xf32> to vector<2x8x512xf32>
    %cst_24 = arith.constant dense<0xFF800000> : vector<2x512xf32>
    %40 = vector.multi_reduction <maximumf>, %39, %cst_24 [1] : vector<2x8x512xf32> to vector<2x512xf32>
    %41 = arith.maximumf %28, %40 : vector<2x512xf32>
    %c0_25 = arith.constant 0 : index
    %c24 = arith.constant 24 : index
    %c0_26 = arith.constant 0 : index
    %42 = vector.load %arg1[%c0_25, %c24, %c0_26] : memref<2x49x112xf32, #tpu.memory_space<vmem>>, vector<2x8x112xf32>
    %c0_27 = arith.constant 0 : index
    %c24_28 = arith.constant 24 : index
    %c0_29 = arith.constant 0 : index
    %43 = vector.load %arg2[%c0_27, %c24_28, %c0_29] : memref<2x49x1xf32, #tpu.memory_space<vmem>>, vector<2x8x1xf32>
    %44 = vector.shape_cast %42 : vector<2x8x112xf32> to vector<16x112xf32>
    %45 = arith.truncf %44 : vector<16x112xf32> to vector<16x112xbf16>
    %cst_30 = arith.constant dense<0.000000e+00> : vector<16x512xf32>
    %46 = tpu.matmul %45, %0, %cst_30 {dimension_numbers = #tpu.dot_dimension_numbers<[1], [0], [0], [1], [0, 0, 1, 1], [], []>} : vector<16x112xbf16>, vector<112x512xbf16>, vector<16x512xf32> -> vector<16x512xf32>
    %47 = vector.broadcast %1 : vector<1x512xf32> to vector<16x512xf32>
    %48 = arith.addf %46, %47 : vector<16x512xf32>
    %49 = vector.shape_cast %43 : vector<2x8x1xf32> to vector<16x1xf32>
    %50 = vector.broadcast %49 : vector<16x1xf32> to vector<16x512xf32>
    %51 = arith.mulf %48, %50 : vector<16x512xf32>
    %52 = vector.shape_cast %51 : vector<16x512xf32> to vector<2x8x512xf32>
    %cst_31 = arith.constant dense<0xFF800000> : vector<2x512xf32>
    %53 = vector.multi_reduction <maximumf>, %52, %cst_31 [1] : vector<2x8x512xf32> to vector<2x512xf32>
    %54 = arith.maximumf %41, %53 : vector<2x512xf32>
    %c0_32 = arith.constant 0 : index
    %c32 = arith.constant 32 : index
    %c0_33 = arith.constant 0 : index
    %55 = vector.load %arg1[%c0_32, %c32, %c0_33] : memref<2x49x112xf32, #tpu.memory_space<vmem>>, vector<2x8x112xf32>
    %c0_34 = arith.constant 0 : index
    %c32_35 = arith.constant 32 : index
    %c0_36 = arith.constant 0 : index
    %56 = vector.load %arg2[%c0_34, %c32_35, %c0_36] : memref<2x49x1xf32, #tpu.memory_space<vmem>>, vector<2x8x1xf32>
    %57 = vector.shape_cast %55 : vector<2x8x112xf32> to vector<16x112xf32>
    %58 = arith.truncf %57 : vector<16x112xf32> to vector<16x112xbf16>
    %cst_37 = arith.constant dense<0.000000e+00> : vector<16x512xf32>
    %59 = tpu.matmul %58, %0, %cst_37 {dimension_numbers = #tpu.dot_dimension_numbers<[1], [0], [0], [1], [0, 0, 1, 1], [], []>} : vector<16x112xbf16>, vector<112x512xbf16>, vector<16x512xf32> -> vector<16x512xf32>
    %60 = vector.broadcast %1 : vector<1x512xf32> to vector<16x512xf32>
    %61 = arith.addf %59, %60 : vector<16x512xf32>
    %62 = vector.shape_cast %56 : vector<2x8x1xf32> to vector<16x1xf32>
    %63 = vector.broadcast %62 : vector<16x1xf32> to vector<16x512xf32>
    %64 = arith.mulf %61, %63 : vector<16x512xf32>
    %65 = vector.shape_cast %64 : vector<16x512xf32> to vector<2x8x512xf32>
    %cst_38 = arith.constant dense<0xFF800000> : vector<2x512xf32>
    %66 = vector.multi_reduction <maximumf>, %65, %cst_38 [1] : vector<2x8x512xf32> to vector<2x512xf32>
    %67 = arith.maximumf %54, %66 : vector<2x512xf32>
    %c0_39 = arith.constant 0 : index
    %c40 = arith.constant 40 : index
    %c0_40 = arith.constant 0 : index
    %68 = vector.load %arg1[%c0_39, %c40, %c0_40] : memref<2x49x112xf32, #tpu.memory_space<vmem>>, vector<2x8x112xf32>
    %c0_41 = arith.constant 0 : index
    %c40_42 = arith.constant 40 : index
    %c0_43 = arith.constant 0 : index
    %69 = vector.load %arg2[%c0_41, %c40_42, %c0_43] : memref<2x49x1xf32, #tpu.memory_space<vmem>>, vector<2x8x1xf32>
    %70 = vector.shape_cast %68 : vector<2x8x112xf32> to vector<16x112xf32>
    %71 = arith.truncf %70 : vector<16x112xf32> to vector<16x112xbf16>
    %cst_44 = arith.constant dense<0.000000e+00> : vector<16x512xf32>
    %72 = tpu.matmul %71, %0, %cst_44 {dimension_numbers = #tpu.dot_dimension_numbers<[1], [0], [0], [1], [0, 0, 1, 1], [], []>} : vector<16x112xbf16>, vector<112x512xbf16>, vector<16x512xf32> -> vector<16x512xf32>
    %73 = vector.broadcast %1 : vector<1x512xf32> to vector<16x512xf32>
    %74 = arith.addf %72, %73 : vector<16x512xf32>
    %75 = vector.shape_cast %69 : vector<2x8x1xf32> to vector<16x1xf32>
    %76 = vector.broadcast %75 : vector<16x1xf32> to vector<16x512xf32>
    %77 = arith.mulf %74, %76 : vector<16x512xf32>
    %78 = vector.shape_cast %77 : vector<16x512xf32> to vector<2x8x512xf32>
    %cst_45 = arith.constant dense<0xFF800000> : vector<2x512xf32>
    %79 = vector.multi_reduction <maximumf>, %78, %cst_45 [1] : vector<2x8x512xf32> to vector<2x512xf32>
    %80 = arith.maximumf %67, %79 : vector<2x512xf32>
    %c0_46 = arith.constant 0 : index
    %c41 = arith.constant 41 : index
    %c0_47 = arith.constant 0 : index
    %81 = vector.load %arg1[%c0_46, %c41, %c0_47] : memref<2x49x112xf32, #tpu.memory_space<vmem>>, vector<2x8x112xf32>
    %c0_48 = arith.constant 0 : index
    %c41_49 = arith.constant 41 : index
    %c0_50 = arith.constant 0 : index
    %82 = vector.load %arg2[%c0_48, %c41_49, %c0_50] : memref<2x49x1xf32, #tpu.memory_space<vmem>>, vector<2x8x1xf32>
    %83 = vector.shape_cast %81 : vector<2x8x112xf32> to vector<16x112xf32>
    %84 = arith.truncf %83 : vector<16x112xf32> to vector<16x112xbf16>
    %cst_51 = arith.constant dense<0.000000e+00> : vector<16x512xf32>
    %85 = tpu.matmul %84, %0, %cst_51 {dimension_numbers = #tpu.dot_dimension_numbers<[1], [0], [0], [1], [0, 0, 1, 1], [], []>} : vector<16x112xbf16>, vector<112x512xbf16>, vector<16x512xf32> -> vector<16x512xf32>
    %86 = vector.broadcast %1 : vector<1x512xf32> to vector<16x512xf32>
    %87 = arith.addf %85, %86 : vector<16x512xf32>
    %88 = vector.shape_cast %82 : vector<2x8x1xf32> to vector<16x1xf32>
    %89 = vector.broadcast %88 : vector<16x1xf32> to vector<16x512xf32>
    %90 = arith.mulf %87, %89 : vector<16x512xf32>
    %91 = vector.shape_cast %90 : vector<16x512xf32> to vector<2x8x512xf32>
    %cst_52 = arith.constant dense<0xFF800000> : vector<2x512xf32>
    %92 = vector.multi_reduction <maximumf>, %91, %cst_52 [1] : vector<2x8x512xf32> to vector<2x512xf32>
    %93 = arith.maximumf %80, %92 : vector<2x512xf32>
    %94 = arith.truncf %93 : vector<2x512xf32> to vector<2x512xbf16>
    %c0_53 = arith.constant 0 : index
    %c0_54 = arith.constant 0 : index
    %95 = vector.load %arg5[%c0_53, %c0_54] : memref<512x512xbf16, #tpu.memory_space<vmem>>, vector<512x512xbf16>
    %cst_55 = arith.constant dense<0.000000e+00> : vector<2x512xf32>
    %96 = tpu.matmul %94, %95, %cst_55 {dimension_numbers = #tpu.dot_dimension_numbers<[1], [0], [0], [1], [0, 0, 1, 1], [], []>} : vector<2x512xbf16>, vector<512x512xbf16>, vector<2x512xf32> -> vector<2x512xf32>
    %c0_56 = arith.constant 0 : index
    %c0_57 = arith.constant 0 : index
    %97 = vector.load %arg6[%c0_56, %c0_57] : memref<1x512xf32, #tpu.memory_space<vmem>>, vector<1x512xf32>
    %98 = vector.broadcast %97 : vector<1x512xf32> to vector<2x512xf32>
    %99 = arith.addf %96, %98 : vector<2x512xf32>
    %cst_58 = arith.constant 0.000000e+00 : f32
    %100 = vector.broadcast %cst_58 : f32 to vector<2x512xf32>
    %101 = arith.maximumf %99, %100 : vector<2x512xf32>
    %102 = arith.truncf %101 : vector<2x512xf32> to vector<2x512xbf16>
    %c0_59 = arith.constant 0 : index
    %c0_60 = arith.constant 0 : index
    %103 = vector.load %arg7[%c0_59, %c0_60] : memref<512x512xbf16, #tpu.memory_space<vmem>>, vector<512x512xbf16>
    %cst_61 = arith.constant dense<0.000000e+00> : vector<2x512xf32>
    %104 = tpu.matmul %102, %103, %cst_61 {dimension_numbers = #tpu.dot_dimension_numbers<[1], [0], [0], [1], [0, 0, 1, 1], [], []>} : vector<2x512xbf16>, vector<512x512xbf16>, vector<2x512xf32> -> vector<2x512xf32>
    %c0_62 = arith.constant 0 : index
    %c0_63 = arith.constant 0 : index
    %105 = vector.load %arg8[%c0_62, %c0_63] : memref<1x512xf32, #tpu.memory_space<vmem>>, vector<1x512xf32>
    %106 = vector.broadcast %105 : vector<1x512xf32> to vector<2x512xf32>
    %107 = arith.addf %104, %106 : vector<2x512xf32>
    %c0_64 = arith.constant 0 : index
    %c0_65 = arith.constant 0 : index
    %108 = vector.load %arg9[%c0_64, %c0_65] : memref<2x512xf32, #tpu.memory_space<vmem>>, vector<2x512xf32>
    tpu.vector_store %arg9[%c0_64, %c0_65], %107 {strides = array<i32>} : memref<2x512xf32, #tpu.memory_space<vmem>>, vector<2x512xf32>,
    return
  }
  func.func @transform_0(%arg0: i32) -> (i32, i32, i32) {
    %c0_i32 = arith.constant 0 : i32
    %c0_i32_0 = arith.constant 0 : i32
    %c0_i32_1 = arith.constant 0 : i32
    return %arg0, %c0_i32, %c0_i32_0 : i32, i32, i32
  }
  func.func @transform_1(%arg0: i32) -> (i32, i32, i32) {
    %c0_i32 = arith.constant 0 : i32
    %c0_i32_0 = arith.constant 0 : i32
    %c0_i32_1 = arith.constant 0 : i32
    return %arg0, %c0_i32, %c0_i32_0 : i32, i32, i32
  }
  func.func @transform_2(%arg0: i32) -> (i32, i32) {
    %c0_i32 = arith.constant 0 : i32
    %c0_i32_0 = arith.constant 0 : i32
    %c0_i32_1 = arith.constant 0 : i32
    return %c0_i32, %c0_i32_0 : i32, i32
  }
  func.func @transform_3(%arg0: i32) -> (i32, i32) {
    %c0_i32 = arith.constant 0 : i32
    %c0_i32_0 = arith.constant 0 : i32
    %c0_i32_1 = arith.constant 0 : i32
    return %c0_i32, %c0_i32_0 : i32, i32
  }
  func.func @transform_4(%arg0: i32) -> (i32, i32) {
    %c0_i32 = arith.constant 0 : i32
    %c0_i32_0 = arith.constant 0 : i32
    %c0_i32_1 = arith.constant 0 : i32
    return %c0_i32, %c0_i32_0 : i32, i32
  }
  func.func @transform_5(%arg0: i32) -> (i32, i32) {
    %c0_i32 = arith.constant 0 : i32
    %c0_i32_0 = arith.constant 0 : i32
    %c0_i32_1 = arith.constant 0 : i32
    return %c0_i32, %c0_i32_0 : i32, i32
  }
  func.func @transform_6(%arg0: i32) -> (i32, i32) {
    %c0_i32 = arith.constant 0 : i32
    %c0_i32_0 = arith.constant 0 : i32
    %c0_i32_1 = arith.constant 0 : i32
    return %c0_i32, %c0_i32_0 : i32, i32
  }
  func.func @transform_7(%arg0: i32) -> (i32, i32) {
    %c0_i32 = arith.constant 0 : i32
    %c0_i32_0 = arith.constant 0 : i32
    %c0_i32_1 = arith.constant 0 : i32
    return %c0_i32, %c0_i32_0 : i32, i32
  }
  func.func @transform_8(%arg0: i32) -> (i32, i32) {
    %c0_i32 = arith.constant 0 : i32
    %c0_i32_0 = arith.constant 0 : i32
    return %arg0, %c0_i32 : i32, i32
  }
}

</mosaic_0001>

<llo_original>
// kernel: tpu_custom_call.1
$region0: #{tpu_custom_call.1}
  #allocation0 [shape = 'u32[]', space=smem, size = 0x4, offset = 0x4, fixed_abs, tag = 'smem constant byte address 0x4 - core index']
  #allocation1 [shape = 'u32[144,128]{1,0:T(1,128)}', space=vmem, size = 0x12000, scoped, tag = 'internal scratch']
  %s0 = inlined_call_operand.vmem [shape: f32[2,49,112], index: 0, kind: input, shape index: {}]
  %s1 = inlined_call_operand.vmem [shape: f32[2,49,1], index: 1, kind: input, shape index: {}]
  %s2 = inlined_call_operand.vmem [shape: bf16[112,512], index: 2, kind: input, shape index: {}]
  %s3 = inlined_call_operand.vmem [shape: f32[1,512], index: 3, kind: input, shape index: {}]
  %s4 = inlined_call_operand.hbm [shape: bf16[512,512], index: 4, kind: input, shape index: {}]
  %s5 = inlined_call_operand.vmem [shape: f32[1,512], index: 5, kind: input, shape index: {}]
  %s6 = inlined_call_operand.hbm [shape: bf16[512,512], index: 6, kind: input, shape index: {}]
  %s7 = inlined_call_operand.vmem [shape: f32[1,512], index: 7, kind: input, shape index: {}]
  %s8 = inlined_call_operand.hbm [shape: f32[2,512], index: 8, kind: output, shape index: {}]
  %s9 = sld [smem:[#allocation0]]
  $region50: #{tpu_custom_call.1} parent=0
    _
  %s11 = ssub.s32 1, %s9
  %s12 = scalar_select 0, %s11, %s9
  $region1: #{tpu_custom_call.1} parent=0
    #allocation2 [shape = 'u8[524288]{0}', space=vmem, size = 0x80000, scoped, tag = 'input window, operand 4, single buffered']
    #allocation3 [shape = 's32[1]{0}', space=sflag, size = 0x4, scoped, tag = 'scoped memory for tpu_custom_call.1']
    #allocation4 [shape = 's32[1]{0}', space=sflag, size = 0x4, scoped, tag = 'scoped memory for tpu_custom_call.1']
    #allocation5 [shape = 'u8[524288]{0}', space=vmem, size = 0x80000, scoped, tag = 'input window, operand 6, single buffered']
    #allocation6 [shape = 's32[1]{0}', space=sflag, size = 0x4, scoped, tag = 'scoped memory for tpu_custom_call.1']
    #allocation7 [shape = 'u8[4096]{0}', space=vmem, size = 0x1000, scoped, tag = 'output window, operand 0, single buffered']
    %13 = vsyncpa [#allocation3], 0
    %14 = vsyncpa [#allocation6], 0
    %15 = vsyncpa [#allocation4], 0
    // Predicated region
    $region2: #{tpu_custom_call.1} parent=1 // pred_check
      _
    $region3: #{tpu_custom_call.1} parent=1 // pred_check_branch
      %17 = sbr.rel (0) target = $region5
    $region4: #{tpu_custom_call.1} parent=1 // pred_region
      _
    $region5: #{tpu_custom_call.1} parent=1 // pred_fallthru
      _
    // Predicated region
    $region6: #{tpu_custom_call.1} parent=1 // pred_check
      _
    $region7: #{tpu_custom_call.1} parent=1 // pred_check_branch
      %19 = sbr.rel (0) target = $region9
    $region8: #{tpu_custom_call.1} parent=1 // pred_region
      _
    $region9: #{tpu_custom_call.1} parent=1 // pred_fallthru
      _
    // Predicated region
    $region10: #{tpu_custom_call.1} parent=1 // pred_check
      _
    $region11: #{tpu_custom_call.1} parent=1 // pred_check_branch
      %21 = sbr.rel (0) target = $region13
    $region12: #{tpu_custom_call.1} parent=1 // pred_region
      _
    $region13: #{tpu_custom_call.1} parent=1 // pred_fallthru
      _
    // Predicated region
    $region14: #{tpu_custom_call.1} parent=1 // pred_check
      _
    $region15: #{tpu_custom_call.1} parent=1 // pred_check_branch
      %23 = sbr.rel (0) target = $region17
    $region16: #{tpu_custom_call.1} parent=1 // pred_region
      _
    $region17: #{tpu_custom_call.1} parent=1 // pred_fallthru
      _
    // Predicated region
    $region18: #{tpu_custom_call.1} parent=1 // pred_check
      _
    $region19: #{tpu_custom_call.1} parent=1 // pred_check_branch
      %25 = sbr.rel (0) target = $region21
    $region20: #{tpu_custom_call.1} parent=1 // pred_region
      %s27 = ssub.s32 16384, 16384
      %28 = vsyncadd [#allocation3], %s27
      %s29 = sshll.u32 [#allocation2], 4
      %s30 = int_to_ptr.vmem [resolvable:$true] %s29
      %35 = dma.hbm_to_vmem [thread:$0]  %s4, 16384, %s30, [#allocation3], 256, 256, 16
    $region21: #{tpu_custom_call.1} parent=1 // pred_fallthru
      _
    // Predicated region
    $region22: #{tpu_custom_call.1} parent=1 // pred_check
      _
    $region23: #{tpu_custom_call.1} parent=1 // pred_check_branch
      %37 = sbr.rel (0) target = $region25
    $region24: #{tpu_custom_call.1} parent=1 // pred_region
      _
    $region25: #{tpu_custom_call.1} parent=1 // pred_fallthru
      _
    // Predicated region
    $region26: #{tpu_custom_call.1} parent=1 // pred_check
      _
    $region27: #{tpu_custom_call.1} parent=1 // pred_check_branch
      %39 = sbr.rel (0) target = $region29
    $region28: #{tpu_custom_call.1} parent=1 // pred_region
      %s41 = ssub.s32 16384, 16384
      %42 = vsyncadd [#allocation6], %s41
      %s43 = sshll.u32 [#allocation5], 4
      %s44 = int_to_ptr.vmem [resolvable:$true] %s43
      %49 = dma.hbm_to_vmem [thread:$0]  %s6, 16384, %s44, [#allocation6], 256, 256, 16
    $region29: #{tpu_custom_call.1} parent=1 // pred_fallthru
      _
    // Predicated region
    $region30: #{tpu_custom_call.1} parent=1 // pred_check
      _
    $region31: #{tpu_custom_call.1} parent=1 // pred_check_branch
      %51 = sbr.rel (0) target = $region33
    $region32: #{tpu_custom_call.1} parent=1 // pred_region
      _
    $region33: #{tpu_custom_call.1} parent=1 // pred_fallthru
      _
    // Predicated region
    $region34: #{tpu_custom_call.1} parent=1 // pred_check
      _
    $region35: #{tpu_custom_call.1} parent=1 // pred_check_branch
      %53 = sbr.rel (0) target = $region37
    $region36: #{tpu_custom_call.1} parent=1 // pred_region
      %54 = dma.done [#allocation3], 16384
    $region37: #{tpu_custom_call.1} parent=1 // pred_fallthru
      _
    // Predicated region
    $region38: #{tpu_custom_call.1} parent=1 // pred_check
      _
    $region39: #{tpu_custom_call.1} parent=1 // pred_check_branch
      %56 = sbr.rel (0) target = $region41
    $region40: #{tpu_custom_call.1} parent=1 // pred_region
      %57 = dma.done [#allocation6], 16384
    $region41: #{tpu_custom_call.1} parent=1 // pred_fallthru
      _
    %v59 = vld [vmem:[%s2] sm:$0xff]
    %v60 = vld [vmem:[%s2 + $0x8] sm:$0xff]
    %v61 = vld [vmem:[%s2 + $0x10] sm:$0xff]
    %v62 = vld [vmem:[%s2 + $0x18] sm:$0xff]
    %v63 = vld [vmem:[%s2 + $0x20] sm:$0xff]
    %v64 = vld [vmem:[%s2 + $0x28] sm:$0xff]
    %v65 = vld [vmem:[%s2 + $0x30] sm:$0xff]
    %v66 = vld [vmem:[%s2 + $0x38] sm:$0xff]
    %v67 = vld [vmem:[%s2 + $0x40] sm:$0xff]
    %v68 = vld [vmem:[%s2 + $0x48] sm:$0xff]
    %v69 = vld [vmem:[%s2 + $0x50] sm:$0xff]
    %v70 = vld [vmem:[%s2 + $0x58] sm:$0xff]
    %v71 = vld [vmem:[%s2 + $0x60] sm:$0xff]
    %v72 = vld [vmem:[%s2 + $0x68] sm:$0xff]
    %v73 = vld [vmem:[%s2 + $0x70] sm:$0xff]
    %v74 = vld [vmem:[%s2 + $0x78] sm:$0xff]
    %v75 = vld [vmem:[%s2 + $0x80] sm:$0xff]
    %v76 = vld [vmem:[%s2 + $0x88] sm:$0xff]
    %v77 = vld [vmem:[%s2 + $0x90] sm:$0xff]
    %v78 = vld [vmem:[%s2 + $0x98] sm:$0xff]
    %v79 = vld [vmem:[%s2 + $0xa0] sm:$0xff]
    %v80 = vld [vmem:[%s2 + $0xa8] sm:$0xff]
    %v81 = vld [vmem:[%s2 + $0xb0] sm:$0xff]
    %v82 = vld [vmem:[%s2 + $0xb8] sm:$0xff]
    %v83 = vld [vmem:[%s2 + $0xc0] sm:$0xff]
    %v84 = vld [vmem:[%s2 + $0xc8] sm:$0xff]
    %v85 = vld [vmem:[%s2 + $0xd0] sm:$0xff]
    %v86 = vld [vmem:[%s2 + $0xd8] sm:$0xff]
    %v87 = vld [vmem:[%s3] sm:$0xf]
    %v88 = vld [vmem:[%s0] sm:$0xff]
    %v89 = vld [vmem:[%s0 + $0x38] sm:$0xff]
    %v90 = vld [vmem:[%s1] sm:$0xff]
    %v91 = vld [vmem:[%s1 + $0x38] sm:$0xff]
    %v92 = vpack.c.bf16 %v89, %v88
    %v94 = vlaneseq
    %v95 = vshrl.u32 %v94, 7
    %v96 = vsub.s32 0, %v95
    %v97 = vrot.slane %v87, %v96
    %v98 = vlaneseq
    %v99 = vshrl.u32 %v98, 7
    %v100 = vsub.s32 1, %v99
    %v101 = vrot.slane %v87, %v100
    %v102 = vlaneseq
    %v103 = vshrl.u32 %v102, 7
    %v104 = vsub.s32 2, %v103
    %v105 = vrot.slane %v87, %v104
    %v106 = vlaneseq
    %v107 = vshrl.u32 %v106, 7
    %v108 = vsub.s32 3, %v107
    %v109 = vrot.slane %v87, %v108
    %v142 = vunpack.c.l.b16 %v59
    %v143 = vunpack.c.h.b16 %v59
    %v144 = vunpack.c.l.b16 %v60
    %v145 = vunpack.c.h.b16 %v60
    %v146 = vunpack.c.l.b16 %v61
    %v147 = vunpack.c.h.b16 %v61
    %v148 = vunpack.c.l.b16 %v62
    %v149 = vunpack.c.h.b16 %v62
    %v150 = vunpack.c.l.b16 %v63
    %v151 = vunpack.c.h.b16 %v63
    %v152 = vunpack.c.l.b16 %v64
    %v153 = vunpack.c.h.b16 %v64
    %v154 = vunpack.c.l.b16 %v65
    %v155 = vunpack.c.h.b16 %v65
    %v156 = vunpack.c.l.b16 %v66
    %v157 = vunpack.c.h.b16 %v66
    %v158 = vunpack.c.l.b16 %v67
    %v159 = vunpack.c.h.b16 %v67
    %v160 = vunpack.c.l.b16 %v68
    %v161 = vunpack.c.h.b16 %v68
    %v162 = vunpack.c.l.b16 %v69
    %v163 = vunpack.c.h.b16 %v69
    %v164 = vunpack.c.l.b16 %v70
    %v165 = vunpack.c.h.b16 %v70
    %v166 = vunpack.c.l.b16 %v71
    %v167 = vunpack.c.h.b16 %v71
    %v168 = vunpack.c.l.b16 %v72
    %v169 = vunpack.c.h.b16 %v72
    %v170 = vunpack.c.l.b16 %v73
    %v171 = vunpack.c.h.b16 %v73
    %v172 = vunpack.c.l.b16 %v74
    %v173 = vunpack.c.h.b16 %v74
    %v174 = vunpack.c.l.b16 %v75
    %v175 = vunpack.c.h.b16 %v75
    %v176 = vunpack.c.l.b16 %v76
    %v177 = vunpack.c.h.b16 %v76
    %v178 = vunpack.c.l.b16 %v77
    %v179 = vunpack.c.h.b16 %v77
    %v180 = vunpack.c.l.b16 %v78
    %v181 = vunpack.c.h.b16 %v78
    %v182 = vunpack.c.l.b16 %v79
    %v183 = vunpack.c.h.b16 %v79
    %v184 = vunpack.c.l.b16 %v80
    %v185 = vunpack.c.h.b16 %v80
    %v186 = vunpack.c.l.b16 %v81
    %v187 = vunpack.c.h.b16 %v81
    %v188 = vunpack.c.l.b16 %v82
    %v189 = vunpack.c.h.b16 %v82
    %v190 = vunpack.c.l.b16 %v83
    %v191 = vunpack.c.h.b16 %v83
    %v192 = vunpack.c.l.b16 %v84
    %v193 = vunpack.c.h.b16 %v84
    %v194 = vunpack.c.l.b16 %v85
    %v195 = vunpack.c.h.b16 %v85
    %v196 = vunpack.c.l.b16 %v86
    %v197 = vunpack.c.h.b16 %v86
    %v198 = vpack.c.b16 %v146, %v142
    %v199 = vpack.c.b16 %v147, %v143
    %v200 = vpack.c.b16 %v148, %v144
    %v201 = vpack.c.b16 %v149, %v145
    %v202 = vpack.c.b16 %v154, %v150
    %v203 = vpack.c.b16 %v155, %v151
    %v204 = vpack.c.b16 %v156, %v152
    %v205 = vpack.c.b16 %v157, %v153
    %v206 = vpack.c.b16 %v162, %v158
    %v207 = vpack.c.b16 %v163, %v159
    %v208 = vpack.c.b16 %v164, %v160
    %v209 = vpack.c.b16 %v165, %v161
    %v210 = vpack.c.b16 %v170, %v166
    %v211 = vpack.c.b16 %v171, %v167
    %v212 = vpack.c.b16 %v172, %v168
    %v213 = vpack.c.b16 %v173, %v169
    %v214 = vpack.c.b16 %v178, %v174
    %v215 = vpack.c.b16 %v179, %v175
    %v216 = vpack.c.b16 %v180, %v176
    %v217 = vpack.c.b16 %v181, %v177
    %v218 = vpack.c.b16 %v186, %v182
    %v219 = vpack.c.b16 %v187, %v183
    %v220 = vpack.c.b16 %v188, %v184
    %v221 = vpack.c.b16 %v189, %v185
    %v222 = vpack.c.b16 %v194, %v190
    %v223 = vpack.c.b16 %v195, %v191
    %v224 = vpack.c.b16 %v196, %v192
    %v225 = vpack.c.b16 %v197, %v193
    %vm254 = vcmask 916480
    %v256 = vsel %vm254, %v92, 0
    %258 = vmatprep.subr.bf16.mxu0 %v199
    %259 = vmatpush1.bf16.msra.mxu0 %v198
    %260 = vmatprep.subr.bf16.mxu0 %v203
    %261 = vmatpush1.bf16.msra.mxu0 %v202
    %262 = vmatprep.subr.bf16.mxu0 %v207
    %263 = vmatpush1.bf16.msra.mxu0 %v206
    %264 = vmatprep.subr.bf16.mxu0 %v211
    %265 = vmatpush1.bf16.msra.mxu0 %v210
    %266 = vmatprep.subr.bf16.mxu0 %v215
    %267 = vmatpush1.bf16.msra.mxu0 %v214
    %268 = vmatprep.subr.bf16.mxu0 %v219
    %269 = vmatpush1.bf16.msra.mxu0 %v218
    %270 = vmatprep.subr.bf16.mxu0 %v223
    %271 = vmatpush1.bf16.msra.mxu0 %v222
    %272 = vmatprep.subr.bf16.mxu0 0
    %273 = vmatpush1.bf16.msra.mxu0 0
    %274 = vmatprep.subr.bf16.mxu0 0
    %275 = vmatpush1.bf16.msra.mxu0 0
    %276 = vmatprep.subr.bf16.mxu0 0
    %277 = vmatpush1.bf16.msra.mxu0 0
    %278 = vmatprep.subr.bf16.mxu0 0
    %279 = vmatpush1.bf16.msra.mxu0 0
    %280 = vmatprep.subr.bf16.mxu0 0
    %281 = vmatpush1.bf16.msra.mxu0 0
    %282 = vmatprep.subr.bf16.mxu0 0
    %283 = vmatpush1.bf16.msra.mxu0 0
    %284 = vmatprep.subr.bf16.mxu0 0
    %285 = vmatpush1.bf16.msra.mxu0 0
    %286 = vmatprep.subr.bf16.mxu0 0
    %287 = vmatpush1.bf16.msra.mxu0 0
    %288 = vmatprep.subr.bf16.mxu0 0
    %289 = vmatpush1.bf16.msra.mxu0 0
    %290 = vmatprep.mubr.bf16.mxu0 0
    %291 = vmatmul.mubr.bf16.gmra.mrb[0].mxu0 %v256
    %v292 = vpop.f32.mrb[0].mxu0
    %v293 = vadd.f32 %v97, %v292
    %v294 = vpop.f32.mrb[0].mxu0
    %v295 = vadd.f32 %v101, %v294
    %v296 = vpop.f32.mrb[0].mxu0
    %v297 = vadd.f32 %v97, %v296
    %v298 = vpop.f32.mrb[0].mxu0
    %v299 = vadd.f32 %v101, %v298
    %300 = vdwg.mxu0
    %301 = vmatprep.subr.bf16.mxu0 %v201
    %302 = vmatpush1.bf16.msra.mxu0 %v200
    %303 = vmatprep.subr.bf16.mxu0 %v205
    %304 = vmatpush1.bf16.msra.mxu0 %v204
    %305 = vmatprep.subr.bf16.mxu0 %v209
    %306 = vmatpush1.bf16.msra.mxu0 %v208
    %307 = vmatprep.subr.bf16.mxu0 %v213
    %308 = vmatpush1.bf16.msra.mxu0 %v212
    %309 = vmatprep.subr.bf16.mxu0 %v217
    %310 = vmatpush1.bf16.msra.mxu0 %v216
    %311 = vmatprep.subr.bf16.mxu0 %v221
    %312 = vmatpush1.bf16.msra.mxu0 %v220
    %313 = vmatprep.subr.bf16.mxu0 %v225
    %314 = vmatpush1.bf16.msra.mxu0 %v224
    %315 = vmatprep.subr.bf16.mxu0 0
    %316 = vmatpush1.bf16.msra.mxu0 0
    %317 = vmatprep.subr.bf16.mxu0 0
    %318 = vmatpush1.bf16.msra.mxu0 0
    %319 = vmatprep.subr.bf16.mxu0 0
    %320 = vmatpush1.bf16.msra.mxu0 0
    %321 = vmatprep.subr.bf16.mxu0 0
    %322 = vmatpush1.bf16.msra.mxu0 0
    %323 = vmatprep.subr.bf16.mxu0 0
    %324 = vmatpush1.bf16.msra.mxu0 0
    %325 = vmatprep.subr.bf16.mxu0 0
    %326 = vmatpush1.bf16.msra.mxu0 0
    %327 = vmatprep.subr.bf16.mxu0 0
    %328 = vmatpush1.bf16.msra.mxu0 0
    %329 = vmatprep.subr.bf16.mxu0 0
    %330 = vmatpush1.bf16.msra.mxu0 0
    %331 = vmatprep.subr.bf16.mxu0 0
    %332 = vmatpush1.bf16.msra.mxu0 0
    %333 = vmatprep.mubr.bf16.mxu0 0
    %334 = vmatmul.mubr.bf16.gmra.mrb[0].mxu0 %v256
    %v335 = vpop.f32.mrb[0].mxu0
    %v336 = vadd.f32 %v105, %v335
    %v337 = vpop.f32.mrb[0].mxu0
    %v338 = vadd.f32 %v109, %v337
    %v339 = vpop.f32.mrb[0].mxu0
    %v340 = vadd.f32 %v105, %v339
    %v341 = vpop.f32.mrb[0].mxu0
    %v342 = vadd.f32 %v109, %v341
    %343 = vdwg.mxu0
    %345 = vset.pattern.permute.xlu0 0
    %346 = vperm.xlu0 %345, %v90
    %v347 = vpop.permute.xlu0 %346
    %350 = vset.pattern.permute.xlu0 0
    %351 = vperm.xlu0 %350, %v91
    %v352 = vpop.permute.xlu0 %351
    %v354 = vmul.f32 %v293, %v347
    %v355 = vmul.f32 %v295, %v347
    %v356 = vmul.f32 %v336, %v347
    %v357 = vmul.f32 %v338, %v347
    %v358 = vmul.f32 %v297, %v352
    %v359 = vmul.f32 %v299, %v352
    %v360 = vmul.f32 %v340, %v352
    %v361 = vmul.f32 %v342, %v352
    %v362 = vrot.slane %v354, 4
    %v363 = vmax.f32 %v354, %v362
    %v364 = vrot.slane %v363, 2
    %v365 = vmax.f32 %v363, %v364
    %v366 = vrot.slane %v365, 1
    %v367 = vmax.f32 %v365, %v366
    %v368 = vrot.slane %v355, 4
    %v369 = vmax.f32 %v355, %v368
    %v370 = vrot.slane %v369, 2
    %v371 = vmax.f32 %v369, %v370
    %v372 = vrot.slane %v371, 1
    %v373 = vmax.f32 %v371, %v372
    %v374 = vrot.slane %v356, 4
    %v375 = vmax.f32 %v356, %v374
    %v376 = vrot.slane %v375, 2
    %v377 = vmax.f32 %v375, %v376
    %v378 = vrot.slane %v377, 1
    %v379 = vmax.f32 %v377, %v378
    %v380 = vrot.slane %v357, 4
    %v381 = vmax.f32 %v357, %v380
    %v382 = vrot.slane %v381, 2
    %v383 = vmax.f32 %v381, %v382
    %v384 = vrot.slane %v383, 1
    %v385 = vmax.f32 %v383, %v384
    %v386 = vrot.slane %v358, 4
    %v387 = vmax.f32 %v358, %v386
    %v388 = vrot.slane %v387, 2
    %v389 = vmax.f32 %v387, %v388
    %v390 = vrot.slane %v389, 1
    %v391 = vmax.f32 %v389, %v390
    %v392 = vrot.slane %v359, 4
    %v393 = vmax.f32 %v359, %v392
    %v394 = vrot.slane %v393, 2
    %v395 = vmax.f32 %v393, %v394
    %v396 = vrot.slane %v395, 1
    %v397 = vmax.f32 %v395, %v396
    %v398 = vrot.slane %v360, 4
    %v399 = vmax.f32 %v360, %v398
    %v400 = vrot.slane %v399, 2
    %v401 = vmax.f32 %v399, %v400
    %v402 = vrot.slane %v401, 1
    %v403 = vmax.f32 %v401, %v402
    %v404 = vrot.slane %v361, 4
    %v405 = vmax.f32 %v361, %v404
    %v406 = vrot.slane %v405, 2
    %v407 = vmax.f32 %v405, %v406
    %v408 = vrot.slane %v407, 1
    %v409 = vmax.f32 %v407, %v408
    %v410 = vld [vmem:[%s0 + $0x8] sm:$0xff]
    %v411 = vld [vmem:[%s0 + $0x40] sm:$0xff]
    %v412 = vld [vmem:[%s1 + $0x8] sm:$0xff]
    %v413 = vld [vmem:[%s1 + $0x40] sm:$0xff]
    %v414 = vpack.c.bf16 %v411, %v410
    %v416 = vsel %vm254, %v414, 0
    %418 = vmatprep.subr.bf16.mxu0 %v199
    %419 = vmatpush1.bf16.msra.mxu0 %v198
    %420 = vmatprep.subr.bf16.mxu0 %v203
    %421 = vmatpush1.bf16.msra.mxu0 %v202
    %422 = vmatprep.subr.bf16.mxu0 %v207
    %423 = vmatpush1.bf16.msra.mxu0 %v206
    %424 = vmatprep.subr.bf16.mxu0 %v211
    %425 = vmatpush1.bf16.msra.mxu0 %v210
    %426 = vmatprep.subr.bf16.mxu0 %v215
    %427 = vmatpush1.bf16.msra.mxu0 %v214
    %428 = vmatprep.subr.bf16.mxu0 %v219
    %429 = vmatpush1.bf16.msra.mxu0 %v218
    %430 = vmatprep.subr.bf16.mxu0 %v223
    %431 = vmatpush1.bf16.msra.mxu0 %v222
    %432 = vmatprep.subr.bf16.mxu0 0
    %433 = vmatpush1.bf16.msra.mxu0 0
    %434 = vmatprep.subr.bf16.mxu0 0
    %435 = vmatpush1.bf16.msra.mxu0 0
    %436 = vmatprep.subr.bf16.mxu0 0
    %437 = vmatpush1.bf16.msra.mxu0 0
    %438 = vmatprep.subr.bf16.mxu0 0
    %439 = vmatpush1.bf16.msra.mxu0 0
    %440 = vmatprep.subr.bf16.mxu0 0
    %441 = vmatpush1.bf16.msra.mxu0 0
    %442 = vmatprep.subr.bf16.mxu0 0
    %443 = vmatpush1.bf16.msra.mxu0 0
    %444 = vmatprep.subr.bf16.mxu0 0
    %445 = vmatpush1.bf16.msra.mxu0 0
    %446 = vmatprep.subr.bf16.mxu0 0
    %447 = vmatpush1.bf16.msra.mxu0 0
    %448 = vmatprep.subr.bf16.mxu0 0
    %449 = vmatpush1.bf16.msra.mxu0 0
    %450 = vmatprep.mubr.bf16.mxu0 0
    %451 = vmatmul.mubr.bf16.gmra.mrb[0].mxu0 %v416
    %v452 = vpop.f32.mrb[0].mxu0
    %v453 = vadd.f32 %v97, %v452
    %v454 = vpop.f32.mrb[0].mxu0
    %v455 = vadd.f32 %v101, %v454
    %v456 = vpop.f32.mrb[0].mxu0
    %v457 = vadd.f32 %v97, %v456
    %v458 = vpop.f32.mrb[0].mxu0
    %v459 = vadd.f32 %v101, %v458
    %460 = vdwg.mxu0
    %461 = vmatprep.subr.bf16.mxu0 %v201
    %462 = vmatpush1.bf16.msra.mxu0 %v200
    %463 = vmatprep.subr.bf16.mxu0 %v205
    %464 = vmatpush1.bf16.msra.mxu0 %v204
    %465 = vmatprep.subr.bf16.mxu0 %v209
    %466 = vmatpush1.bf16.msra.mxu0 %v208
    %467 = vmatprep.subr.bf16.mxu0 %v213
    %468 = vmatpush1.bf16.msra.mxu0 %v212
    %469 = vmatprep.subr.bf16.mxu0 %v217
    %470 = vmatpush1.bf16.msra.mxu0 %v216
    %471 = vmatprep.subr.bf16.mxu0 %v221
    %472 = vmatpush1.bf16.msra.mxu0 %v220
    %473 = vmatprep.subr.bf16.mxu0 %v225
    %474 = vmatpush1.bf16.msra.mxu0 %v224
    %475 = vmatprep.subr.bf16.mxu0 0
    %476 = vmatpush1.bf16.msra.mxu0 0
    %477 = vmatprep.subr.bf16.mxu0 0
    %478 = vmatpush1.bf16.msra.mxu0 0
    %479 = vmatprep.subr.bf16.mxu0 0
    %480 = vmatpush1.bf16.msra.mxu0 0
    %481 = vmatprep.subr.bf16.mxu0 0
    %482 = vmatpush1.bf16.msra.mxu0 0
    %483 = vmatprep.subr.bf16.mxu0 0
    %484 = vmatpush1.bf16.msra.mxu0 0
    %485 = vmatprep.subr.bf16.mxu0 0
    %486 = vmatpush1.bf16.msra.mxu0 0
    %487 = vmatprep.subr.bf16.mxu0 0
    %488 = vmatpush1.bf16.msra.mxu0 0
    %489 = vmatprep.subr.bf16.mxu0 0
    %490 = vmatpush1.bf16.msra.mxu0 0
    %491 = vmatprep.subr.bf16.mxu0 0
    %492 = vmatpush1.bf16.msra.mxu0 0
    %493 = vmatprep.mubr.bf16.mxu0 0
    %494 = vmatmul.mubr.bf16.gmra.mrb[0].mxu0 %v416
    %v495 = vpop.f32.mrb[0].mxu0
    %v496 = vadd.f32 %v105, %v495
    %v497 = vpop.f32.mrb[0].mxu0
    %v498 = vadd.f32 %v109, %v497
    %v499 = vpop.f32.mrb[0].mxu0
    %v500 = vadd.f32 %v105, %v499
    %v501 = vpop.f32.mrb[0].mxu0
    %v502 = vadd.f32 %v109, %v501
    %503 = vdwg.mxu0
    %505 = vset.pattern.permute.xlu0 0
    %506 = vperm.xlu0 %505, %v412
    %v507 = vpop.permute.xlu0 %506
    %510 = vset.pattern.permute.xlu0 0
    %511 = vperm.xlu0 %510, %v413
    %v512 = vpop.permute.xlu0 %511
    %v514 = vmul.f32 %v453, %v507
    %v515 = vmul.f32 %v455, %v507
    %v516 = vmul.f32 %v496, %v507
    %v517 = vmul.f32 %v498, %v507
    %v518 = vmul.f32 %v457, %v512
    %v519 = vmul.f32 %v459, %v512
    %v520 = vmul.f32 %v500, %v512
    %v521 = vmul.f32 %v502, %v512
    %v522 = vrot.slane %v514, 4
    %v523 = vmax.f32 %v514, %v522
    %v524 = vrot.slane %v523, 2
    %v525 = vmax.f32 %v523, %v524
    %v526 = vrot.slane %v525, 1
    %v527 = vmax.f32 %v525, %v526
    %v528 = vrot.slane %v515, 4
    %v529 = vmax.f32 %v515, %v528
    %v530 = vrot.slane %v529, 2
    %v531 = vmax.f32 %v529, %v530
    %v532 = vrot.slane %v531, 1
    %v533 = vmax.f32 %v531, %v532
    %v534 = vrot.slane %v516, 4
    %v535 = vmax.f32 %v516, %v534
    %v536 = vrot.slane %v535, 2
    %v537 = vmax.f32 %v535, %v536
    %v538 = vrot.slane %v537, 1
    %v539 = vmax.f32 %v537, %v538
    %v540 = vrot.slane %v517, 4
    %v541 = vmax.f32 %v517, %v540
    %v542 = vrot.slane %v541, 2
    %v543 = vmax.f32 %v541, %v542
    %v544 = vrot.slane %v543, 1
    %v545 = vmax.f32 %v543, %v544
    %v546 = vrot.slane %v518, 4
    %v547 = vmax.f32 %v518, %v546
    %v548 = vrot.slane %v547, 2
    %v549 = vmax.f32 %v547, %v548
    %v550 = vrot.slane %v549, 1
    %v551 = vmax.f32 %v549, %v550
    %v552 = vrot.slane %v519, 4
    %v553 = vmax.f32 %v519, %v552
    %v554 = vrot.slane %v553, 2
    %v555 = vmax.f32 %v553, %v554
    %v556 = vrot.slane %v555, 1
    %v557 = vmax.f32 %v555, %v556
    %v558 = vrot.slane %v520, 4
    %v559 = vmax.f32 %v520, %v558
    %v560 = vrot.slane %v559, 2
    %v561 = vmax.f32 %v559, %v560
    %v562 = vrot.slane %v561, 1
    %v563 = vmax.f32 %v561, %v562
    %v564 = vrot.slane %v521, 4
    %v565 = vmax.f32 %v521, %v564
    %v566 = vrot.slane %v565, 2
    %v567 = vmax.f32 %v565, %v566
    %v568 = vrot.slane %v567, 1
    %v569 = vmax.f32 %v567, %v568
    %v570 = vmax.f32 %v367, %v527
    %v571 = vmax.f32 %v373, %v533
    %v572 = vmax.f32 %v379, %v539
    %v573 = vmax.f32 %v385, %v545
    %v574 = vmax.f32 %v391, %v551
    %v575 = vmax.f32 %v397, %v557
    %v576 = vmax.f32 %v403, %v563
    %v577 = vmax.f32 %v409, %v569
    %v578 = vld [vmem:[%s0 + $0x10] sm:$0xff]
    %v579 = vld [vmem:[%s0 + $0x48] sm:$0xff]
    %v580 = vld [vmem:[%s1 + $0x10] sm:$0xff]
    %v581 = vld [vmem:[%s1 + $0x48] sm:$0xff]
    %v582 = vpack.c.bf16 %v579, %v578
    %v584 = vsel %vm254, %v582, 0
    %586 = vmatprep.subr.bf16.mxu0 %v199
    %587 = vmatpush1.bf16.msra.mxu0 %v198
    %588 = vmatprep.subr.bf16.mxu0 %v203
    %589 = vmatpush1.bf16.msra.mxu0 %v202
    %590 = vmatprep.subr.bf16.mxu0 %v207
    %591 = vmatpush1.bf16.msra.mxu0 %v206
    %592 = vmatprep.subr.bf16.mxu0 %v211
    %593 = vmatpush1.bf16.msra.mxu0 %v210
    %594 = vmatprep.subr.bf16.mxu0 %v215
    %595 = vmatpush1.bf16.msra.mxu0 %v214
    %596 = vmatprep.subr.bf16.mxu0 %v219
    %597 = vmatpush1.bf16.msra.mxu0 %v218
    %598 = vmatprep.subr.bf16.mxu0 %v223
    %599 = vmatpush1.bf16.msra.mxu0 %v222
    %600 = vmatprep.subr.bf16.mxu0 0
    %601 = vmatpush1.bf16.msra.mxu0 0
    %602 = vmatprep.subr.bf16.mxu0 0
    %603 = vmatpush1.bf16.msra.mxu0 0
    %604 = vmatprep.subr.bf16.mxu0 0
    %605 = vmatpush1.bf16.msra.mxu0 0
    %606 = vmatprep.subr.bf16.mxu0 0
    %607 = vmatpush1.bf16.msra.mxu0 0
    %608 = vmatprep.subr.bf16.mxu0 0
    %609 = vmatpush1.bf16.msra.mxu0 0
    %610 = vmatprep.subr.bf16.mxu0 0
    %611 = vmatpush1.bf16.msra.mxu0 0
    %612 = vmatprep.subr.bf16.mxu0 0
    %613 = vmatpush1.bf16.msra.mxu0 0
    %614 = vmatprep.subr.bf16.mxu0 0
    %615 = vmatpush1.bf16.msra.mxu0 0
    %616 = vmatprep.subr.bf16.mxu0 0
    %617 = vmatpush1.bf16.msra.mxu0 0
    %618 = vmatprep.mubr.bf16.mxu0 0
    %619 = vmatmul.mubr.bf16.gmra.mrb[0].mxu0 %v584
    %v620 = vpop.f32.mrb[0].mxu0
    %v621 = vadd.f32 %v97, %v620
    %v622 = vpop.f32.mrb[0].mxu0
    %v623 = vadd.f32 %v101, %v622
    %v624 = vpop.f32.mrb[0].mxu0
    %v625 = vadd.f32 %v97, %v624
    %v626 = vpop.f32.mrb[0].mxu0
    %v627 = vadd.f32 %v101, %v626
    %628 = vdwg.mxu0
    %629 = vmatprep.subr.bf16.mxu0 %v201
    %630 = vmatpush1.bf16.msra.mxu0 %v200
    %631 = vmatprep.subr.bf16.mxu0 %v205
    %632 = vmatpush1.bf16.msra.mxu0 %v204
    %633 = vmatprep.subr.bf16.mxu0 %v209
    %634 = vmatpush1.bf16.msra.mxu0 %v208
    %635 = vmatprep.subr.bf16.mxu0 %v213
    %636 = vmatpush1.bf16.msra.mxu0 %v212
    %637 = vmatprep.subr.bf16.mxu0 %v217
    %638 = vmatpush1.bf16.msra.mxu0 %v216
    %639 = vmatprep.subr.bf16.mxu0 %v221
    %640 = vmatpush1.bf16.msra.mxu0 %v220
    %641 = vmatprep.subr.bf16.mxu0 %v225
    %642 = vmatpush1.bf16.msra.mxu0 %v224
    %643 = vmatprep.subr.bf16.mxu0 0
    %644 = vmatpush1.bf16.msra.mxu0 0
    %645 = vmatprep.subr.bf16.mxu0 0
    %646 = vmatpush1.bf16.msra.mxu0 0
    %647 = vmatprep.subr.bf16.mxu0 0
    %648 = vmatpush1.bf16.msra.mxu0 0
    %649 = vmatprep.subr.bf16.mxu0 0
    %650 = vmatpush1.bf16.msra.mxu0 0
    %651 = vmatprep.subr.bf16.mxu0 0
    %652 = vmatpush1.bf16.msra.mxu0 0
    %653 = vmatprep.subr.bf16.mxu0 0
    %654 = vmatpush1.bf16.msra.mxu0 0
    %655 = vmatprep.subr.bf16.mxu0 0
    %656 = vmatpush1.bf16.msra.mxu0 0
    %657 = vmatprep.subr.bf16.mxu0 0
    %658 = vmatpush1.bf16.msra.mxu0 0
    %659 = vmatprep.subr.bf16.mxu0 0
    %660 = vmatpush1.bf16.msra.mxu0 0
    %661 = vmatprep.mubr.bf16.mxu0 0
    %662 = vmatmul.mubr.bf16.gmra.mrb[0].mxu0 %v584
    %v663 = vpop.f32.mrb[0].mxu0
    %v664 = vadd.f32 %v105, %v663
    %v665 = vpop.f32.mrb[0].mxu0
    %v666 = vadd.f32 %v109, %v665
    %v667 = vpop.f32.mrb[0].mxu0
    %v668 = vadd.f32 %v105, %v667
    %v669 = vpop.f32.mrb[0].mxu0
    %v670 = vadd.f32 %v109, %v669
    %671 = vdwg.mxu0
    %673 = vset.pattern.permute.xlu0 0
    %674 = vperm.xlu0 %673, %v580
    %v675 = vpop.permute.xlu0 %674
    %678 = vset.pattern.permute.xlu0 0
    %679 = vperm.xlu0 %678, %v581
    %v680 = vpop.permute.xlu0 %679
    %v682 = vmul.f32 %v621, %v675
    %v683 = vmul.f32 %v623, %v675
    %v684 = vmul.f32 %v664, %v675
    %v685 = vmul.f32 %v666, %v675
    %v686 = vmul.f32 %v625, %v680
    %v687 = vmul.f32 %v627, %v680
    %v688 = vmul.f32 %v668, %v680
    %v689 = vmul.f32 %v670, %v680
    %v690 = vrot.slane %v682, 4
    %v691 = vmax.f32 %v682, %v690
    %v692 = vrot.slane %v691, 2
    %v693 = vmax.f32 %v691, %v692
    %v694 = vrot.slane %v693, 1
    %v695 = vmax.f32 %v693, %v694
    %v696 = vrot.slane %v683, 4
    %v697 = vmax.f32 %v683, %v696
    %v698 = vrot.slane %v697, 2
    %v699 = vmax.f32 %v697, %v698
    %v700 = vrot.slane %v699, 1
    %v701 = vmax.f32 %v699, %v700
    %v702 = vrot.slane %v684, 4
    %v703 = vmax.f32 %v684, %v702
    %v704 = vrot.slane %v703, 2
    %v705 = vmax.f32 %v703, %v704
    %v706 = vrot.slane %v705, 1
    %v707 = vmax.f32 %v705, %v706
    %v708 = vrot.slane %v685, 4
    %v709 = vmax.f32 %v685, %v708
    %v710 = vrot.slane %v709, 2
    %v711 = vmax.f32 %v709, %v710
    %v712 = vrot.slane %v711, 1
    %v713 = vmax.f32 %v711, %v712
    %v714 = vrot.slane %v686, 4
    %v715 = vmax.f32 %v686, %v714
    %v716 = vrot.slane %v715, 2
    %v717 = vmax.f32 %v715, %v716
    %v718 = vrot.slane %v717, 1
    %v719 = vmax.f32 %v717, %v718
    %v720 = vrot.slane %v687, 4
    %v721 = vmax.f32 %v687, %v720
    %v722 = vrot.slane %v721, 2
    %v723 = vmax.f32 %v721, %v722
    %v724 = vrot.slane %v723, 1
    %v725 = vmax.f32 %v723, %v724
    %v726 = vrot.slane %v688, 4
    %v727 = vmax.f32 %v688, %v726
    %v728 = vrot.slane %v727, 2
    %v729 = vmax.f32 %v727, %v728
    %v730 = vrot.slane %v729, 1
    %v731 = vmax.f32 %v729, %v730
    %v732 = vrot.slane %v689, 4
    %v733 = vmax.f32 %v689, %v732
    %v734 = vrot.slane %v733, 2
    %v735 = vmax.f32 %v733, %v734
    %v736 = vrot.slane %v735, 1
    %v737 = vmax.f32 %v735, %v736
    %v738 = vmax.f32 %v570, %v695
    %v739 = vmax.f32 %v571, %v701
    %v740 = vmax.f32 %v572, %v707
    %v741 = vmax.f32 %v573, %v713
    %v742 = vmax.f32 %v574, %v719
    %v743 = vmax.f32 %v575, %v725
    %v744 = vmax.f32 %v576, %v731
    %v745 = vmax.f32 %v577, %v737
    %v746 = vld [vmem:[%s0 + $0x18] sm:$0xff]
    %v747 = vld [vmem:[%s0 + $0x50] sm:$0xff]
    %v748 = vld [vmem:[%s1 + $0x18] sm:$0xff]
    %v749 = vld [vmem:[%s1 + $0x50] sm:$0xff]
    %v750 = vpack.c.bf16 %v747, %v746
    %v752 = vsel %vm254, %v750, 0
    %754 = vmatprep.subr.bf16.mxu0 %v199
    %755 = vmatpush1.bf16.msra.mxu0 %v198
    %756 = vmatprep.subr.bf16.mxu0 %v203
    %757 = vmatpush1.bf16.msra.mxu0 %v202
    %758 = vmatprep.subr.bf16.mxu0 %v207
    %759 = vmatpush1.bf16.msra.mxu0 %v206
    %760 = vmatprep.subr.bf16.mxu0 %v211
    %761 = vmatpush1.bf16.msra.mxu0 %v210
    %762 = vmatprep.subr.bf16.mxu0 %v215
    %763 = vmatpush1.bf16.msra.mxu0 %v214
    %764 = vmatprep.subr.bf16.mxu0 %v219
    %765 = vmatpush1.bf16.msra.mxu0 %v218
    %766 = vmatprep.subr.bf16.mxu0 %v223
    %767 = vmatpush1.bf16.msra.mxu0 %v222
    %768 = vmatprep.subr.bf16.mxu0 0
    %769 = vmatpush1.bf16.msra.mxu0 0
    %770 = vmatprep.subr.bf16.mxu0 0
    %771 = vmatpush1.bf16.msra.mxu0 0
    %772 = vmatprep.subr.bf16.mxu0 0
    %773 = vmatpush1.bf16.msra.mxu0 0
    %774 = vmatprep.subr.bf16.mxu0 0
    %775 = vmatpush1.bf16.msra.mxu0 0
    %776 = vmatprep.subr.bf16.mxu0 0
    %777 = vmatpush1.bf16.msra.mxu0 0
    %778 = vmatprep.subr.bf16.mxu0 0
    %779 = vmatpush1.bf16.msra.mxu0 0
    %780 = vmatprep.subr.bf16.mxu0 0
    %781 = vmatpush1.bf16.msra.mxu0 0
    %782 = vmatprep.subr.bf16.mxu0 0
    %783 = vmatpush1.bf16.msra.mxu0 0
    %784 = vmatprep.subr.bf16.mxu0 0
    %785 = vmatpush1.bf16.msra.mxu0 0
    %786 = vmatprep.mubr.bf16.mxu0 0
    %787 = vmatmul.mubr.bf16.gmra.mrb[0].mxu0 %v752
    %v788 = vpop.f32.mrb[0].mxu0
    %v789 = vadd.f32 %v97, %v788
    %v790 = vpop.f32.mrb[0].mxu0
    %v791 = vadd.f32 %v101, %v790
    %v792 = vpop.f32.mrb[0].mxu0
    %v793 = vadd.f32 %v97, %v792
    %v794 = vpop.f32.mrb[0].mxu0
    %v795 = vadd.f32 %v101, %v794
    %796 = vdwg.mxu0
    %797 = vmatprep.subr.bf16.mxu0 %v201
    %798 = vmatpush1.bf16.msra.mxu0 %v200
    %799 = vmatprep.subr.bf16.mxu0 %v205
    %800 = vmatpush1.bf16.msra.mxu0 %v204
    %801 = vmatprep.subr.bf16.mxu0 %v209
    %802 = vmatpush1.bf16.msra.mxu0 %v208
    %803 = vmatprep.subr.bf16.mxu0 %v213
    %804 = vmatpush1.bf16.msra.mxu0 %v212
    %805 = vmatprep.subr.bf16.mxu0 %v217
    %806 = vmatpush1.bf16.msra.mxu0 %v216
    %807 = vmatprep.subr.bf16.mxu0 %v221
    %808 = vmatpush1.bf16.msra.mxu0 %v220
    %809 = vmatprep.subr.bf16.mxu0 %v225
    %810 = vmatpush1.bf16.msra.mxu0 %v224
    %811 = vmatprep.subr.bf16.mxu0 0
    %812 = vmatpush1.bf16.msra.mxu0 0
    %813 = vmatprep.subr.bf16.mxu0 0
    %814 = vmatpush1.bf16.msra.mxu0 0
    %815 = vmatprep.subr.bf16.mxu0 0
    %816 = vmatpush1.bf16.msra.mxu0 0
    %817 = vmatprep.subr.bf16.mxu0 0
    %818 = vmatpush1.bf16.msra.mxu0 0
    %819 = vmatprep.subr.bf16.mxu0 0
    %820 = vmatpush1.bf16.msra.mxu0 0
    %821 = vmatprep.subr.bf16.mxu0 0
    %822 = vmatpush1.bf16.msra.mxu0 0
    %823 = vmatprep.subr.bf16.mxu0 0
    %824 = vmatpush1.bf16.msra.mxu0 0
    %825 = vmatprep.subr.bf16.mxu0 0
    %826 = vmatpush1.bf16.msra.mxu0 0
    %827 = vmatprep.subr.bf16.mxu0 0
    %828 = vmatpush1.bf16.msra.mxu0 0
    %829 = vmatprep.mubr.bf16.mxu0 0
    %830 = vmatmul.mubr.bf16.gmra.mrb[0].mxu0 %v752
    %v831 = vpop.f32.mrb[0].mxu0
    %v832 = vadd.f32 %v105, %v831
    %v833 = vpop.f32.mrb[0].mxu0
    %v834 = vadd.f32 %v109, %v833
    %v835 = vpop.f32.mrb[0].mxu0
    %v836 = vadd.f32 %v105, %v835
    %v837 = vpop.f32.mrb[0].mxu0
    %v838 = vadd.f32 %v109, %v837
    %839 = vdwg.mxu0
    %841 = vset.pattern.permute.xlu0 0
    %842 = vperm.xlu0 %841, %v748
    %v843 = vpop.permute.xlu0 %842
    %846 = vset.pattern.permute.xlu0 0
    %847 = vperm.xlu0 %846, %v749
    %v848 = vpop.permute.xlu0 %847
    %v850 = vmul.f32 %v789, %v843
    %v851 = vmul.f32 %v791, %v843
    %v852 = vmul.f32 %v832, %v843
    %v853 = vmul.f32 %v834, %v843
    %v854 = vmul.f32 %v793, %v848
    %v855 = vmul.f32 %v795, %v848
    %v856 = vmul.f32 %v836, %v848
    %v857 = vmul.f32 %v838, %v848
    %v858 = vrot.slane %v850, 4
    %v859 = vmax.f32 %v850, %v858
    %v860 = vrot.slane %v859, 2
    %v861 = vmax.f32 %v859, %v860
    %v862 = vrot.slane %v861, 1
    %v863 = vmax.f32 %v861, %v862
    %v864 = vrot.slane %v851, 4
    %v865 = vmax.f32 %v851, %v864
    %v866 = vrot.slane %v865, 2
    %v867 = vmax.f32 %v865, %v866
    %v868 = vrot.slane %v867, 1
    %v869 = vmax.f32 %v867, %v868
    %v870 = vrot.slane %v852, 4
    %v871 = vmax.f32 %v852, %v870
    %v872 = vrot.slane %v871, 2
    %v873 = vmax.f32 %v871, %v872
    %v874 = vrot.slane %v873, 1
    %v875 = vmax.f32 %v873, %v874
    %v876 = vrot.slane %v853, 4
    %v877 = vmax.f32 %v853, %v876
    %v878 = vrot.slane %v877, 2
    %v879 = vmax.f32 %v877, %v878
    %v880 = vrot.slane %v879, 1
    %v881 = vmax.f32 %v879, %v880
    %v882 = vrot.slane %v854, 4
    %v883 = vmax.f32 %v854, %v882
    %v884 = vrot.slane %v883, 2
    %v885 = vmax.f32 %v883, %v884
    %v886 = vrot.slane %v885, 1
    %v887 = vmax.f32 %v885, %v886
    %v888 = vrot.slane %v855, 4
    %v889 = vmax.f32 %v855, %v888
    %v890 = vrot.slane %v889, 2
    %v891 = vmax.f32 %v889, %v890
    %v892 = vrot.slane %v891, 1
    %v893 = vmax.f32 %v891, %v892
    %v894 = vrot.slane %v856, 4
    %v895 = vmax.f32 %v856, %v894
    %v896 = vrot.slane %v895, 2
    %v897 = vmax.f32 %v895, %v896
    %v898 = vrot.slane %v897, 1
    %v899 = vmax.f32 %v897, %v898
    %v900 = vrot.slane %v857, 4
    %v901 = vmax.f32 %v857, %v900
    %v902 = vrot.slane %v901, 2
    %v903 = vmax.f32 %v901, %v902
    %v904 = vrot.slane %v903, 1
    %v905 = vmax.f32 %v903, %v904
    %v906 = vmax.f32 %v738, %v863
    %v907 = vmax.f32 %v739, %v869
    %v908 = vmax.f32 %v740, %v875
    %v909 = vmax.f32 %v741, %v881
    %v910 = vmax.f32 %v742, %v887
    %v911 = vmax.f32 %v743, %v893
    %v912 = vmax.f32 %v744, %v899
    %v913 = vmax.f32 %v745, %v905
    %v914 = vld [vmem:[%s0 + $0x20] sm:$0xff]
    %v915 = vld [vmem:[%s0 + $0x58] sm:$0xff]
    %v916 = vld [vmem:[%s1 + $0x20] sm:$0xff]
    %v917 = vld [vmem:[%s1 + $0x58] sm:$0xff]
    %v918 = vpack.c.bf16 %v915, %v914
    %v920 = vsel %vm254, %v918, 0
    %922 = vmatprep.subr.bf16.mxu0 %v199
    %923 = vmatpush1.bf16.msra.mxu0 %v198
    %924 = vmatprep.subr.bf16.mxu0 %v203
    %925 = vmatpush1.bf16.msra.mxu0 %v202
    %926 = vmatprep.subr.bf16.mxu0 %v207
    %927 = vmatpush1.bf16.msra.mxu0 %v206
    %928 = vmatprep.subr.bf16.mxu0 %v211
    %929 = vmatpush1.bf16.msra.mxu0 %v210
    %930 = vmatprep.subr.bf16.mxu0 %v215
    %931 = vmatpush1.bf16.msra.mxu0 %v214
    %932 = vmatprep.subr.bf16.mxu0 %v219
    %933 = vmatpush1.bf16.msra.mxu0 %v218
    %934 = vmatprep.subr.bf16.mxu0 %v223
    %935 = vmatpush1.bf16.msra.mxu0 %v222
    %936 = vmatprep.subr.bf16.mxu0 0
    %937 = vmatpush1.bf16.msra.mxu0 0
    %938 = vmatprep.subr.bf16.mxu0 0
    %939 = vmatpush1.bf16.msra.mxu0 0
    %940 = vmatprep.subr.bf16.mxu0 0
    %941 = vmatpush1.bf16.msra.mxu0 0
    %942 = vmatprep.subr.bf16.mxu0 0
    %943 = vmatpush1.bf16.msra.mxu0 0
    %944 = vmatprep.subr.bf16.mxu0 0
    %945 = vmatpush1.bf16.msra.mxu0 0
    %946 = vmatprep.subr.bf16.mxu0 0
    %947 = vmatpush1.bf16.msra.mxu0 0
    %948 = vmatprep.subr.bf16.mxu0 0
    %949 = vmatpush1.bf16.msra.mxu0 0
    %950 = vmatprep.subr.bf16.mxu0 0
    %951 = vmatpush1.bf16.msra.mxu0 0
    %952 = vmatprep.subr.bf16.mxu0 0
    %953 = vmatpush1.bf16.msra.mxu0 0
    %954 = vmatprep.mubr.bf16.mxu0 0
    %955 = vmatmul.mubr.bf16.gmra.mrb[0].mxu0 %v920
    %v956 = vpop.f32.mrb[0].mxu0
    %v957 = vadd.f32 %v97, %v956
    %v958 = vpop.f32.mrb[0].mxu0
    %v959 = vadd.f32 %v101, %v958
    %v960 = vpop.f32.mrb[0].mxu0
    %v961 = vadd.f32 %v97, %v960
    %v962 = vpop.f32.mrb[0].mxu0
    %v963 = vadd.f32 %v101, %v962
    %964 = vdwg.mxu0
    %965 = vmatprep.subr.bf16.mxu0 %v201
    %966 = vmatpush1.bf16.msra.mxu0 %v200
    %967 = vmatprep.subr.bf16.mxu0 %v205
    %968 = vmatpush1.bf16.msra.mxu0 %v204
    %969 = vmatprep.subr.bf16.mxu0 %v209
    %970 = vmatpush1.bf16.msra.mxu0 %v208
    %971 = vmatprep.subr.bf16.mxu0 %v213
    %972 = vmatpush1.bf16.msra.mxu0 %v212
    %973 = vmatprep.subr.bf16.mxu0 %v217
    %974 = vmatpush1.bf16.msra.mxu0 %v216
    %975 = vmatprep.subr.bf16.mxu0 %v221
    %976 = vmatpush1.bf16.msra.mxu0 %v220
    %977 = vmatprep.subr.bf16.mxu0 %v225
    %978 = vmatpush1.bf16.msra.mxu0 %v224
    %979 = vmatprep.subr.bf16.mxu0 0
    %980 = vmatpush1.bf16.msra.mxu0 0
    %981 = vmatprep.subr.bf16.mxu0 0
    %982 = vmatpush1.bf16.msra.mxu0 0
    %983 = vmatprep.subr.bf16.mxu0 0
    %984 = vmatpush1.bf16.msra.mxu0 0
    %985 = vmatprep.subr.bf16.mxu0 0
    %986 = vmatpush1.bf16.msra.mxu0 0
    %987 = vmatprep.subr.bf16.mxu0 0
    %988 = vmatpush1.bf16.msra.mxu0 0
    %989 = vmatprep.subr.bf16.mxu0 0
    %990 = vmatpush1.bf16.msra.mxu0 0
    %991 = vmatprep.subr.bf16.mxu0 0
    %992 = vmatpush1.bf16.msra.mxu0 0
    %993 = vmatprep.subr.bf16.mxu0 0
    %994 = vmatpush1.bf16.msra.mxu0 0
    %995 = vmatprep.subr.bf16.mxu0 0
    %996 = vmatpush1.bf16.msra.mxu0 0
    %997 = vmatprep.mubr.bf16.mxu0 0
    %998 = vmatmul.mubr.bf16.gmra.mrb[0].mxu0 %v920
    %v999 = vpop.f32.mrb[0].mxu0
    %v1000 = vadd.f32 %v105, %v999
    %v1001 = vpop.f32.mrb[0].mxu0
    %v1002 = vadd.f32 %v109, %v1001
    %v1003 = vpop.f32.mrb[0].mxu0
    %v1004 = vadd.f32 %v105, %v1003
    %v1005 = vpop.f32.mrb[0].mxu0
    %v1006 = vadd.f32 %v109, %v1005
    %1007 = vdwg.mxu0
    %1009 = vset.pattern.permute.xlu0 0
    %1010 = vperm.xlu0 %1009, %v916
    %v1011 = vpop.permute.xlu0 %1010
    %1014 = vset.pattern.permute.xlu0 0
    %1015 = vperm.xlu0 %1014, %v917
    %v1016 = vpop.permute.xlu0 %1015
    %v1018 = vmul.f32 %v957, %v1011
    %v1019 = vmul.f32 %v959, %v1011
    %v1020 = vmul.f32 %v1000, %v1011
    %v1021 = vmul.f32 %v1002, %v1011
    %v1022 = vmul.f32 %v961, %v1016
    %v1023 = vmul.f32 %v963, %v1016
    %v1024 = vmul.f32 %v1004, %v1016
    %v1025 = vmul.f32 %v1006, %v1016
    %v1026 = vrot.slane %v1018, 4
    %v1027 = vmax.f32 %v1018, %v1026
    %v1028 = vrot.slane %v1027, 2
    %v1029 = vmax.f32 %v1027, %v1028
    %v1030 = vrot.slane %v1029, 1
    %v1031 = vmax.f32 %v1029, %v1030
    %v1032 = vrot.slane %v1019, 4
    %v1033 = vmax.f32 %v1019, %v1032
    %v1034 = vrot.slane %v1033, 2
    %v1035 = vmax.f32 %v1033, %v1034
    %v1036 = vrot.slane %v1035, 1
    %v1037 = vmax.f32 %v1035, %v1036
    %v1038 = vrot.slane %v1020, 4
    %v1039 = vmax.f32 %v1020, %v1038
    %v1040 = vrot.slane %v1039, 2
    %v1041 = vmax.f32 %v1039, %v1040
    %v1042 = vrot.slane %v1041, 1
    %v1043 = vmax.f32 %v1041, %v1042
    %v1044 = vrot.slane %v1021, 4
    %v1045 = vmax.f32 %v1021, %v1044
    %v1046 = vrot.slane %v1045, 2
    %v1047 = vmax.f32 %v1045, %v1046
    %v1048 = vrot.slane %v1047, 1
    %v1049 = vmax.f32 %v1047, %v1048
    %v1050 = vrot.slane %v1022, 4
    %v1051 = vmax.f32 %v1022, %v1050
    %v1052 = vrot.slane %v1051, 2
    %v1053 = vmax.f32 %v1051, %v1052
    %v1054 = vrot.slane %v1053, 1
    %v1055 = vmax.f32 %v1053, %v1054
    %v1056 = vrot.slane %v1023, 4
    %v1057 = vmax.f32 %v1023, %v1056
    %v1058 = vrot.slane %v1057, 2
    %v1059 = vmax.f32 %v1057, %v1058
    %v1060 = vrot.slane %v1059, 1
    %v1061 = vmax.f32 %v1059, %v1060
    %v1062 = vrot.slane %v1024, 4
    %v1063 = vmax.f32 %v1024, %v1062
    %v1064 = vrot.slane %v1063, 2
    %v1065 = vmax.f32 %v1063, %v1064
    %v1066 = vrot.slane %v1065, 1
    %v1067 = vmax.f32 %v1065, %v1066
    %v1068 = vrot.slane %v1025, 4
    %v1069 = vmax.f32 %v1025, %v1068
    %v1070 = vrot.slane %v1069, 2
    %v1071 = vmax.f32 %v1069, %v1070
    %v1072 = vrot.slane %v1071, 1
    %v1073 = vmax.f32 %v1071, %v1072
    %v1074 = vmax.f32 %v906, %v1031
    %v1075 = vmax.f32 %v907, %v1037
    %v1076 = vmax.f32 %v908, %v1043
    %v1077 = vmax.f32 %v909, %v1049
    %v1078 = vmax.f32 %v910, %v1055
    %v1079 = vmax.f32 %v911, %v1061
    %v1080 = vmax.f32 %v912, %v1067
    %v1081 = vmax.f32 %v913, %v1073
    %v1082 = vld [vmem:[%s0 + $0x28] sm:$0xff]
    %v1083 = vld [vmem:[%s0 + $0x60] sm:$0xff]
    %v1084 = vld [vmem:[%s1 + $0x28] sm:$0xff]
    %v1085 = vld [vmem:[%s1 + $0x60] sm:$0xff]
    %v1086 = vpack.c.bf16 %v1083, %v1082
    %v1088 = vsel %vm254, %v1086, 0
    %1090 = vmatprep.subr.bf16.mxu0 %v199
    %1091 = vmatpush1.bf16.msra.mxu0 %v198
    %1092 = vmatprep.subr.bf16.mxu0 %v203
    %1093 = vmatpush1.bf16.msra.mxu0 %v202
    %1094 = vmatprep.subr.bf16.mxu0 %v207
    %1095 = vmatpush1.bf16.msra.mxu0 %v206
    %1096 = vmatprep.subr.bf16.mxu0 %v211
    %1097 = vmatpush1.bf16.msra.mxu0 %v210
    %1098 = vmatprep.subr.bf16.mxu0 %v215
    %1099 = vmatpush1.bf16.msra.mxu0 %v214
    %1100 = vmatprep.subr.bf16.mxu0 %v219
    %1101 = vmatpush1.bf16.msra.mxu0 %v218
    %1102 = vmatprep.subr.bf16.mxu0 %v223
    %1103 = vmatpush1.bf16.msra.mxu0 %v222
    %1104 = vmatprep.subr.bf16.mxu0 0
    %1105 = vmatpush1.bf16.msra.mxu0 0
    %1106 = vmatprep.subr.bf16.mxu0 0
    %1107 = vmatpush1.bf16.msra.mxu0 0
    %1108 = vmatprep.subr.bf16.mxu0 0
    %1109 = vmatpush1.bf16.msra.mxu0 0
    %1110 = vmatprep.subr.bf16.mxu0 0
    %1111 = vmatpush1.bf16.msra.mxu0 0
    %1112 = vmatprep.subr.bf16.mxu0 0
    %1113 = vmatpush1.bf16.msra.mxu0 0
    %1114 = vmatprep.subr.bf16.mxu0 0
    %1115 = vmatpush1.bf16.msra.mxu0 0
    %1116 = vmatprep.subr.bf16.mxu0 0
    %1117 = vmatpush1.bf16.msra.mxu0 0
    %1118 = vmatprep.subr.bf16.mxu0 0
    %1119 = vmatpush1.bf16.msra.mxu0 0
    %1120 = vmatprep.subr.bf16.mxu0 0
    %1121 = vmatpush1.bf16.msra.mxu0 0
    %1122 = vmatprep.mubr.bf16.mxu0 0
    %1123 = vmatmul.mubr.bf16.gmra.mrb[0].mxu0 %v1088
    %v1124 = vpop.f32.mrb[0].mxu0
    %v1125 = vadd.f32 %v97, %v1124
    %v1126 = vpop.f32.mrb[0].mxu0
    %v1127 = vadd.f32 %v101, %v1126
    %v1128 = vpop.f32.mrb[0].mxu0
    %v1129 = vadd.f32 %v97, %v1128
    %v1130 = vpop.f32.mrb[0].mxu0
    %v1131 = vadd.f32 %v101, %v1130
    %1132 = vdwg.mxu0
    %1133 = vmatprep.subr.bf16.mxu0 %v201
    %1134 = vmatpush1.bf16.msra.mxu0 %v200
    %1135 = vmatprep.subr.bf16.mxu0 %v205
    %1136 = vmatpush1.bf16.msra.mxu0 %v204
    %1137 = vmatprep.subr.bf16.mxu0 %v209
    %1138 = vmatpush1.bf16.msra.mxu0 %v208
    %1139 = vmatprep.subr.bf16.mxu0 %v213
    %1140 = vmatpush1.bf16.msra.mxu0 %v212
    %1141 = vmatprep.subr.bf16.mxu0 %v217
    %1142 = vmatpush1.bf16.msra.mxu0 %v216
    %1143 = vmatprep.subr.bf16.mxu0 %v221
    %1144 = vmatpush1.bf16.msra.mxu0 %v220
    %1145 = vmatprep.subr.bf16.mxu0 %v225
    %1146 = vmatpush1.bf16.msra.mxu0 %v224
    %1147 = vmatprep.subr.bf16.mxu0 0
    %1148 = vmatpush1.bf16.msra.mxu0 0
    %1149 = vmatprep.subr.bf16.mxu0 0
    %1150 = vmatpush1.bf16.msra.mxu0 0
    %1151 = vmatprep.subr.bf16.mxu0 0
    %1152 = vmatpush1.bf16.msra.mxu0 0
    %1153 = vmatprep.subr.bf16.mxu0 0
    %1154 = vmatpush1.bf16.msra.mxu0 0
    %1155 = vmatprep.subr.bf16.mxu0 0
    %1156 = vmatpush1.bf16.msra.mxu0 0
    %1157 = vmatprep.subr.bf16.mxu0 0
    %1158 = vmatpush1.bf16.msra.mxu0 0
    %1159 = vmatprep.subr.bf16.mxu0 0
    %1160 = vmatpush1.bf16.msra.mxu0 0
    %1161 = vmatprep.subr.bf16.mxu0 0
    %1162 = vmatpush1.bf16.msra.mxu0 0
    %1163 = vmatprep.subr.bf16.mxu0 0
    %1164 = vmatpush1.bf16.msra.mxu0 0
    %1165 = vmatprep.mubr.bf16.mxu0 0
    %1166 = vmatmul.mubr.bf16.gmra.mrb[0].mxu0 %v1088
    %v1167 = vpop.f32.mrb[0].mxu0
    %v1168 = vadd.f32 %v105, %v1167
    %v1169 = vpop.f32.mrb[0].mxu0
    %v1170 = vadd.f32 %v109, %v1169
    %v1171 = vpop.f32.mrb[0].mxu0
    %v1172 = vadd.f32 %v105, %v1171
    %v1173 = vpop.f32.mrb[0].mxu0
    %v1174 = vadd.f32 %v109, %v1173
    %1175 = vdwg.mxu0
    %1177 = vset.pattern.permute.xlu0 0
    %1178 = vperm.xlu0 %1177, %v1084
    %v1179 = vpop.permute.xlu0 %1178
    %1182 = vset.pattern.permute.xlu0 0
    %1183 = vperm.xlu0 %1182, %v1085
    %v1184 = vpop.permute.xlu0 %1183
    %v1186 = vmul.f32 %v1125, %v1179
    %v1187 = vmul.f32 %v1127, %v1179
    %v1188 = vmul.f32 %v1168, %v1179
    %v1189 = vmul.f32 %v1170, %v1179
    %v1190 = vmul.f32 %v1129, %v1184
    %v1191 = vmul.f32 %v1131, %v1184
    %v1192 = vmul.f32 %v1172, %v1184
    %v1193 = vmul.f32 %v1174, %v1184
    %v1194 = vrot.slane %v1186, 4
    %v1195 = vmax.f32 %v1186, %v1194
    %v1196 = vrot.slane %v1195, 2
    %v1197 = vmax.f32 %v1195, %v1196
    %v1198 = vrot.slane %v1197, 1
    %v1199 = vmax.f32 %v1197, %v1198
    %v1200 = vrot.slane %v1187, 4
    %v1201 = vmax.f32 %v1187, %v1200
    %v1202 = vrot.slane %v1201, 2
    %v1203 = vmax.f32 %v1201, %v1202
    %v1204 = vrot.slane %v1203, 1
    %v1205 = vmax.f32 %v1203, %v1204
    %v1206 = vrot.slane %v1188, 4
    %v1207 = vmax.f32 %v1188, %v1206
    %v1208 = vrot.slane %v1207, 2
    %v1209 = vmax.f32 %v1207, %v1208
    %v1210 = vrot.slane %v1209, 1
    %v1211 = vmax.f32 %v1209, %v1210
    %v1212 = vrot.slane %v1189, 4
    %v1213 = vmax.f32 %v1189, %v1212
    %v1214 = vrot.slane %v1213, 2
    %v1215 = vmax.f32 %v1213, %v1214
    %v1216 = vrot.slane %v1215, 1
    %v1217 = vmax.f32 %v1215, %v1216
    %v1218 = vrot.slane %v1190, 4
    %v1219 = vmax.f32 %v1190, %v1218
    %v1220 = vrot.slane %v1219, 2
    %v1221 = vmax.f32 %v1219, %v1220
    %v1222 = vrot.slane %v1221, 1
    %v1223 = vmax.f32 %v1221, %v1222
    %v1224 = vrot.slane %v1191, 4
    %v1225 = vmax.f32 %v1191, %v1224
    %v1226 = vrot.slane %v1225, 2
    %v1227 = vmax.f32 %v1225, %v1226
    %v1228 = vrot.slane %v1227, 1
    %v1229 = vmax.f32 %v1227, %v1228
    %v1230 = vrot.slane %v1192, 4
    %v1231 = vmax.f32 %v1192, %v1230
    %v1232 = vrot.slane %v1231, 2
    %v1233 = vmax.f32 %v1231, %v1232
    %v1234 = vrot.slane %v1233, 1
    %v1235 = vmax.f32 %v1233, %v1234
    %v1236 = vrot.slane %v1193, 4
    %v1237 = vmax.f32 %v1193, %v1236
    %v1238 = vrot.slane %v1237, 2
    %v1239 = vmax.f32 %v1237, %v1238
    %v1240 = vrot.slane %v1239, 1
    %v1241 = vmax.f32 %v1239, %v1240
    %v1242 = vmax.f32 %v1074, %v1199
    %v1243 = vmax.f32 %v1075, %v1205
    %v1244 = vmax.f32 %v1076, %v1211
    %v1245 = vmax.f32 %v1077, %v1217
    %v1246 = vmax.f32 %v1078, %v1223
    %v1247 = vmax.f32 %v1079, %v1229
    %v1248 = vmax.f32 %v1080, %v1235
    %v1249 = vmax.f32 %v1081, %v1241
    %v1250 = vld [vmem:[%s0 + $0x29] sm:$0xff]
    %v1251 = vld [vmem:[%s0 + $0x61] sm:$0xff]
    %v1252 = vld [vmem:[%s1 + $0x29] sm:$0xff]
    %v1253 = vld [vmem:[%s1 + $0x61] sm:$0xff]
    %v1254 = vpack.c.bf16 %v1251, %v1250
    %v1256 = vsel %vm254, %v1254, 0
    %1258 = vmatprep.subr.bf16.mxu0 %v199
    %1259 = vmatpush1.bf16.msra.mxu0 %v198
    %1260 = vmatprep.subr.bf16.mxu0 %v203
    %1261 = vmatpush1.bf16.msra.mxu0 %v202
    %1262 = vmatprep.subr.bf16.mxu0 %v207
    %1263 = vmatpush1.bf16.msra.mxu0 %v206
    %1264 = vmatprep.subr.bf16.mxu0 %v211
    %1265 = vmatpush1.bf16.msra.mxu0 %v210
    %1266 = vmatprep.subr.bf16.mxu0 %v215
    %1267 = vmatpush1.bf16.msra.mxu0 %v214
    %1268 = vmatprep.subr.bf16.mxu0 %v219
    %1269 = vmatpush1.bf16.msra.mxu0 %v218
    %1270 = vmatprep.subr.bf16.mxu0 %v223
    %1271 = vmatpush1.bf16.msra.mxu0 %v222
    %1272 = vmatprep.subr.bf16.mxu0 0
    %1273 = vmatpush1.bf16.msra.mxu0 0
    %1274 = vmatprep.subr.bf16.mxu0 0
    %1275 = vmatpush1.bf16.msra.mxu0 0
    %1276 = vmatprep.subr.bf16.mxu0 0
    %1277 = vmatpush1.bf16.msra.mxu0 0
    %1278 = vmatprep.subr.bf16.mxu0 0
    %1279 = vmatpush1.bf16.msra.mxu0 0
    %1280 = vmatprep.subr.bf16.mxu0 0
    %1281 = vmatpush1.bf16.msra.mxu0 0
    %1282 = vmatprep.subr.bf16.mxu0 0
    %1283 = vmatpush1.bf16.msra.mxu0 0
    %1284 = vmatprep.subr.bf16.mxu0 0
    %1285 = vmatpush1.bf16.msra.mxu0 0
    %1286 = vmatprep.subr.bf16.mxu0 0
    %1287 = vmatpush1.bf16.msra.mxu0 0
    %1288 = vmatprep.subr.bf16.mxu0 0
    %1289 = vmatpush1.bf16.msra.mxu0 0
    %1290 = vmatprep.mubr.bf16.mxu0 0
    %1291 = vmatmul.mubr.bf16.gmra.mrb[0].mxu0 %v1256
    %v1292 = vpop.f32.mrb[0].mxu0
    %v1293 = vadd.f32 %v97, %v1292
    %v1294 = vpop.f32.mrb[0].mxu0
    %v1295 = vadd.f32 %v101, %v1294
    %v1296 = vpop.f32.mrb[0].mxu0
    %v1297 = vadd.f32 %v97, %v1296
    %v1298 = vpop.f32.mrb[0].mxu0
    %v1299 = vadd.f32 %v101, %v1298
    %1300 = vdwg.mxu0
    %1301 = vmatprep.subr.bf16.mxu0 %v201
    %1302 = vmatpush1.bf16.msra.mxu0 %v200
    %1303 = vmatprep.subr.bf16.mxu0 %v205
    %1304 = vmatpush1.bf16.msra.mxu0 %v204
    %1305 = vmatprep.subr.bf16.mxu0 %v209
    %1306 = vmatpush1.bf16.msra.mxu0 %v208
    %1307 = vmatprep.subr.bf16.mxu0 %v213
    %1308 = vmatpush1.bf16.msra.mxu0 %v212
    %1309 = vmatprep.subr.bf16.mxu0 %v217
    %1310 = vmatpush1.bf16.msra.mxu0 %v216
    %1311 = vmatprep.subr.bf16.mxu0 %v221
    %1312 = vmatpush1.bf16.msra.mxu0 %v220
    %1313 = vmatprep.subr.bf16.mxu0 %v225
    %1314 = vmatpush1.bf16.msra.mxu0 %v224
    %1315 = vmatprep.subr.bf16.mxu0 0
    %1316 = vmatpush1.bf16.msra.mxu0 0
    %1317 = vmatprep.subr.bf16.mxu0 0
    %1318 = vmatpush1.bf16.msra.mxu0 0
    %1319 = vmatprep.subr.bf16.mxu0 0
    %1320 = vmatpush1.bf16.msra.mxu0 0
    %1321 = vmatprep.subr.bf16.mxu0 0
    %1322 = vmatpush1.bf16.msra.mxu0 0
    %1323 = vmatprep.subr.bf16.mxu0 0
    %1324 = vmatpush1.bf16.msra.mxu0 0
    %1325 = vmatprep.subr.bf16.mxu0 0
    %1326 = vmatpush1.bf16.msra.mxu0 0
    %1327 = vmatprep.subr.bf16.mxu0 0
    %1328 = vmatpush1.bf16.msra.mxu0 0
    %1329 = vmatprep.subr.bf16.mxu0 0
    %1330 = vmatpush1.bf16.msra.mxu0 0
    %1331 = vmatprep.subr.bf16.mxu0 0
    %1332 = vmatpush1.bf16.msra.mxu0 0
    %1333 = vmatprep.mubr.bf16.mxu0 0
    %1334 = vmatmul.mubr.bf16.gmra.mrb[0].mxu0 %v1256
    %v1335 = vpop.f32.mrb[0].mxu0
    %v1336 = vadd.f32 %v105, %v1335
    %v1337 = vpop.f32.mrb[0].mxu0
    %v1338 = vadd.f32 %v109, %v1337
    %v1339 = vpop.f32.mrb[0].mxu0
    %v1340 = vadd.f32 %v105, %v1339
    %v1341 = vpop.f32.mrb[0].mxu0
    %v1342 = vadd.f32 %v109, %v1341
    %1343 = vdwg.mxu0
    %1345 = vset.pattern.permute.xlu0 0
    %1346 = vperm.xlu0 %1345, %v1252
    %v1347 = vpop.permute.xlu0 %1346
    %1350 = vset.pattern.permute.xlu0 0
    %1351 = vperm.xlu0 %1350, %v1253
    %v1352 = vpop.permute.xlu0 %1351
    %v1354 = vmul.f32 %v1293, %v1347
    %v1355 = vmul.f32 %v1295, %v1347
    %v1356 = vmul.f32 %v1336, %v1347
    %v1357 = vmul.f32 %v1338, %v1347
    %v1358 = vmul.f32 %v1297, %v1352
    %v1359 = vmul.f32 %v1299, %v1352
    %v1360 = vmul.f32 %v1340, %v1352
    %v1361 = vmul.f32 %v1342, %v1352
    %v1362 = vrot.slane %v1354, 4
    %v1363 = vmax.f32 %v1354, %v1362
    %v1364 = vrot.slane %v1363, 2
    %v1365 = vmax.f32 %v1363, %v1364
    %v1366 = vrot.slane %v1365, 1
    %v1367 = vmax.f32 %v1365, %v1366
    %v1368 = vrot.slane %v1355, 4
    %v1369 = vmax.f32 %v1355, %v1368
    %v1370 = vrot.slane %v1369, 2
    %v1371 = vmax.f32 %v1369, %v1370
    %v1372 = vrot.slane %v1371, 1
    %v1373 = vmax.f32 %v1371, %v1372
    %v1374 = vrot.slane %v1356, 4
    %v1375 = vmax.f32 %v1356, %v1374
    %v1376 = vrot.slane %v1375, 2
    %v1377 = vmax.f32 %v1375, %v1376
    %v1378 = vrot.slane %v1377, 1
    %v1379 = vmax.f32 %v1377, %v1378
    %v1380 = vrot.slane %v1357, 4
    %v1381 = vmax.f32 %v1357, %v1380
    %v1382 = vrot.slane %v1381, 2
    %v1383 = vmax.f32 %v1381, %v1382
    %v1384 = vrot.slane %v1383, 1
    %v1385 = vmax.f32 %v1383, %v1384
    %v1386 = vrot.slane %v1358, 4
    %v1387 = vmax.f32 %v1358, %v1386
    %v1388 = vrot.slane %v1387, 2
    %v1389 = vmax.f32 %v1387, %v1388
    %v1390 = vrot.slane %v1389, 1
    %v1391 = vmax.f32 %v1389, %v1390
    %v1392 = vrot.slane %v1359, 4
    %v1393 = vmax.f32 %v1359, %v1392
    %v1394 = vrot.slane %v1393, 2
    %v1395 = vmax.f32 %v1393, %v1394
    %v1396 = vrot.slane %v1395, 1
    %v1397 = vmax.f32 %v1395, %v1396
    %v1398 = vrot.slane %v1360, 4
    %v1399 = vmax.f32 %v1360, %v1398
    %v1400 = vrot.slane %v1399, 2
    %v1401 = vmax.f32 %v1399, %v1400
    %v1402 = vrot.slane %v1401, 1
    %v1403 = vmax.f32 %v1401, %v1402
    %v1404 = vrot.slane %v1361, 4
    %v1405 = vmax.f32 %v1361, %v1404
    %v1406 = vrot.slane %v1405, 2
    %v1407 = vmax.f32 %v1405, %v1406
    %v1408 = vrot.slane %v1407, 1
    %v1409 = vmax.f32 %v1407, %v1408
    %v1410 = vmax.f32 %v1242, %v1367
    %v1411 = vmax.f32 %v1243, %v1373
    %v1412 = vmax.f32 %v1244, %v1379
    %v1413 = vmax.f32 %v1245, %v1385
    %v1414 = vmax.f32 %v1246, %v1391
    %v1415 = vmax.f32 %v1247, %v1397
    %v1416 = vmax.f32 %v1248, %v1403
    %v1417 = vmax.f32 %v1249, %v1409
    %v1418 = vpack.c.bf16 %v1410, %v1410
    %v1419 = vpack.c.bf16 %v1411, %v1411
    %v1420 = vpack.c.bf16 %v1412, %v1412
    %v1421 = vpack.c.bf16 %v1413, %v1413
    %v1422 = vpack.c.bf16 %v1414, %v1414
    %v1423 = vpack.c.bf16 %v1415, %v1415
    %v1424 = vpack.c.bf16 %v1416, %v1416
    %v1425 = vpack.c.bf16 %v1417, %v1417
    %v1426 = vld [vmem:[#allocation2] sm:$0xff]
    %v1427 = vld [vmem:[#allocation2 + $0x8] sm:$0xff]
    %v1428 = vld [vmem:[#allocation2 + $0x10] sm:$0xff]
    %v1429 = vld [vmem:[#allocation2 + $0x18] sm:$0xff]
    %v1430 = vld [vmem:[#allocation2 + $0x20] sm:$0xff]
    %v1431 = vld [vmem:[#allocation2 + $0x28] sm:$0xff]
    %v1432 = vld [vmem:[#allocation2 + $0x30] sm:$0xff]
    %v1433 = vld [vmem:[#allocation2 + $0x38] sm:$0xff]
    %v1434 = vld [vmem:[#allocation2 + $0x40] sm:$0xff]
    %v1435 = vld [vmem:[#allocation2 + $0x48] sm:$0xff]
    %v1436 = vld [vmem:[#allocation2 + $0x50] sm:$0xff]
    %v1437 = vld [vmem:[#allocation2 + $0x58] sm:$0xff]
    %v1438 = vld [vmem:[#allocation2 + $0x60] sm:$0xff]
    %v1439 = vld [vmem:[#allocation2 + $0x68] sm:$0xff]
    %v1440 = vld [vmem:[#allocation2 + $0x70] sm:$0xff]
    %v1441 = vld [vmem:[#allocation2 + $0x78] sm:$0xff]
    %v1442 = vld [vmem:[#allocation2 + $0x80] sm:$0xff]
    %v1443 = vld [vmem:[#allocation2 + $0x88] sm:$0xff]
    %v1444 = vld [vmem:[#allocation2 + $0x90] sm:$0xff]
    %v1445 = vld [vmem:[#allocation2 + $0x98] sm:$0xff]
    %v1446 = vld [vmem:[#allocation2 + $0xa0] sm:$0xff]
    %v1447 = vld [vmem:[#allocation2 + $0xa8] sm:$0xff]
    %v1448 = vld [vmem:[#allocation2 + $0xb0] sm:$0xff]
    %v1449 = vld [vmem:[#allocation2 + $0xb8] sm:$0xff]
    %v1450 = vld [vmem:[#allocation2 + $0xc0] sm:$0xff]
    %v1451 = vld [vmem:[#allocation2 + $0xc8] sm:$0xff]
    %v1452 = vld [vmem:[#allocation2 + $0xd0] sm:$0xff]
    %v1453 = vld [vmem:[#allocation2 + $0xd8] sm:$0xff]
    %v1454 = vld [vmem:[#allocation2 + $0xe0] sm:$0xff]
    %v1455 = vld [vmem:[#allocation2 + $0xe8] sm:$0xff]
    %v1456 = vld [vmem:[#allocation2 + $0xf0] sm:$0xff]
    %v1457 = vld [vmem:[#allocation2 + $0xf8] sm:$0xff]
    %v1458 = vld [vmem:[#allocation2 + $0x100] sm:$0xff]
    %v1459 = vld [vmem:[#allocation2 + $0x108] sm:$0xff]
    %v1460 = vld [vmem:[#allocation2 + $0x110] sm:$0xff]
    %v1461 = vld [vmem:[#allocation2 + $0x118] sm:$0xff]
    %v1462 = vld [vmem:[#allocation2 + $0x120] sm:$0xff]
    %v1463 = vld [vmem:[#allocation2 + $0x128] sm:$0xff]
    %v1464 = vld [vmem:[#allocation2 + $0x130] sm:$0xff]
    %v1465 = vld [vmem:[#allocation2 + $0x138] sm:$0xff]
    %v1466 = vld [vmem:[#allocation2 + $0x140] sm:$0xff]
    %v1467 = vld [vmem:[#allocation2 + $0x148] sm:$0xff]
    %v1468 = vld [vmem:[#allocation2 + $0x150] sm:$0xff]
    %v1469 = vld [vmem:[#allocation2 + $0x158] sm:$0xff]
    %v1470 = vld [vmem:[#allocation2 + $0x160] sm:$0xff]
    %v1471 = vld [vmem:[#allocation2 + $0x168] sm:$0xff]
    %v1472 = vld [vmem:[#allocation2 + $0x170] sm:$0xff]
    %v1473 = vld [vmem:[#allocation2 + $0x178] sm:$0xff]
    %v1474 = vld [vmem:[#allocation2 + $0x180] sm:$0xff]
    %v1475 = vld [vmem:[#allocation2 + $0x188] sm:$0xff]
    %v1476 = vld [vmem:[#allocation2 + $0x190] sm:$0xff]
    %v1477 = vld [vmem:[#allocation2 + $0x198] sm:$0xff]
    %v1478 = vld [vmem:[#allocation2 + $0x1a0] sm:$0xff]
    %v1479 = vld [vmem:[#allocation2 + $0x1a8] sm:$0xff]
    %v1480 = vld [vmem:[#allocation2 + $0x1b0] sm:$0xff]
    %v1481 = vld [vmem:[#allocation2 + $0x1b8] sm:$0xff]
    %v1482 = vld [vmem:[#allocation2 + $0x1c0] sm:$0xff]
    %v1483 = vld [vmem:[#allocation2 + $0x1c8] sm:$0xff]
    %v1484 = vld [vmem:[#allocation2 + $0x1d0] sm:$0xff]
    %v1485 = vld [vmem:[#allocation2 + $0x1d8] sm:$0xff]
    %v1486 = vld [vmem:[#allocation2 + $0x1e0] sm:$0xff]
    %v1487 = vld [vmem:[#allocation2 + $0x1e8] sm:$0xff]
    %v1488 = vld [vmem:[#allocation2 + $0x1f0] sm:$0xff]
    %v1489 = vld [vmem:[#allocation2 + $0x1f8] sm:$0xff]
    %v1490 = vld [vmem:[#allocation2 + $0x200] sm:$0xff]
    %v1491 = vld [vmem:[#allocation2 + $0x208] sm:$0xff]
    %v1492 = vld [vmem:[#allocation2 + $0x210] sm:$0xff]
    %v1493 = vld [vmem:[#allocation2 + $0x218] sm:$0xff]
    %v1494 = vld [vmem:[#allocation2 + $0x220] sm:$0xff]
    %v1495 = vld [vmem:[#allocation2 + $0x228] sm:$0xff]
    %v1496 = vld [vmem:[#allocation2 + $0x230] sm:$0xff]
    %v1497 = vld [vmem:[#allocation2 + $0x238] sm:$0xff]
    %v1498 = vld [vmem:[#allocation2 + $0x240] sm:$0xff]
    %v1499 = vld [vmem:[#allocation2 + $0x248] sm:$0xff]
    %v1500 = vld [vmem:[#allocation2 + $0x250] sm:$0xff]
    %v1501 = vld [vmem:[#allocation2 + $0x258] sm:$0xff]
    %v1502 = vld [vmem:[#allocation2 + $0x260] sm:$0xff]
    %v1503 = vld [vmem:[#allocation2 + $0x268] sm:$0xff]
    %v1504 = vld [vmem:[#allocation2 + $0x270] sm:$0xff]
    %v1505 = vld [vmem:[#allocation2 + $0x278] sm:$0xff]
    %v1506 = vld [vmem:[#allocation2 + $0x280] sm:$0xff]
    %v1507 = vld [vmem:[#allocation2 + $0x288] sm:$0xff]
    %v1508 = vld [vmem:[#allocation2 + $0x290] sm:$0xff]
    %v1509 = vld [vmem:[#allocation2 + $0x298] sm:$0xff]
    %v1510 = vld [vmem:[#allocation2 + $0x2a0] sm:$0xff]
    %v1511 = vld [vmem:[#allocation2 + $0x2a8] sm:$0xff]
    %v1512 = vld [vmem:[#allocation2 + $0x2b0] sm:$0xff]
    %v1513 = vld [vmem:[#allocation2 + $0x2b8] sm:$0xff]
    %v1514 = vld [vmem:[#allocation2 + $0x2c0] sm:$0xff]
    %v1515 = vld [vmem:[#allocation2 + $0x2c8] sm:$0xff]
    %v1516 = vld [vmem:[#allocation2 + $0x2d0] sm:$0xff]
    %v1517 = vld [vmem:[#allocation2 + $0x2d8] sm:$0xff]
    %v1518 = vld [vmem:[#allocation2 + $0x2e0] sm:$0xff]
    %v1519 = vld [vmem:[#allocation2 + $0x2e8] sm:$0xff]
    %v1520 = vld [vmem:[#allocation2 + $0x2f0] sm:$0xff]
    %v1521 = vld [vmem:[#allocation2 + $0x2f8] sm:$0xff]
    %v1522 = vld [vmem:[#allocation2 + $0x300] sm:$0xff]
    %v1523 = vld [vmem:[#allocation2 + $0x308] sm:$0xff]
    %v1524 = vld [vmem:[#allocation2 + $0x310] sm:$0xff]
    %v1525 = vld [vmem:[#allocation2 + $0x318] sm:$0xff]
    %v1526 = vld [vmem:[#allocation2 + $0x320] sm:$0xff]
    %v1527 = vld [vmem:[#allocation2 + $0x328] sm:$0xff]
    %v1528 = vld [vmem:[#allocation2 + $0x330] sm:$0xff]
    %v1529 = vld [vmem:[#allocation2 + $0x338] sm:$0xff]
    %v1530 = vld [vmem:[#allocation2 + $0x340] sm:$0xff]
    %v1531 = vld [vmem:[#allocation2 + $0x348] sm:$0xff]
    %v1532 = vld [vmem:[#allocation2 + $0x350] sm:$0xff]
    %v1533 = vld [vmem:[#allocation2 + $0x358] sm:$0xff]
    %v1534 = vld [vmem:[#allocation2 + $0x360] sm:$0xff]
    %v1535 = vld [vmem:[#allocation2 + $0x368] sm:$0xff]
    %v1536 = vld [vmem:[#allocation2 + $0x370] sm:$0xff]
    %v1537 = vld [vmem:[#allocation2 + $0x378] sm:$0xff]
    %v1538 = vld [vmem:[#allocation2 + $0x380] sm:$0xff]
    %v1539 = vld [vmem:[#allocation2 + $0x388] sm:$0xff]
    %v1540 = vld [vmem:[#allocation2 + $0x390] sm:$0xff]
    %v1541 = vld [vmem:[#allocation2 + $0x398] sm:$0xff]
    %v1542 = vld [vmem:[#allocation2 + $0x3a0] sm:$0xff]
    %v1543 = vld [vmem:[#allocation2 + $0x3a8] sm:$0xff]
    %v1544 = vld [vmem:[#allocation2 + $0x3b0] sm:$0xff]
    %v1545 = vld [vmem:[#allocation2 + $0x3b8] sm:$0xff]
    %v1546 = vld [vmem:[#allocation2 + $0x3c0] sm:$0xff]
    %v1547 = vld [vmem:[#allocation2 + $0x3c8] sm:$0xff]
    %v1548 = vld [vmem:[#allocation2 + $0x3d0] sm:$0xff]
    %v1549 = vld [vmem:[#allocation2 + $0x3d8] sm:$0xff]
    %v1550 = vld [vmem:[#allocation2 + $0x3e0] sm:$0xff]
    %v1551 = vld [vmem:[#allocation2 + $0x3e8] sm:$0xff]
    %v1552 = vld [vmem:[#allocation2 + $0x3f0] sm:$0xff]
    %v1553 = vld [vmem:[#allocation2 + $0x3f8] sm:$0xff]
    %v1554 = vld [vmem:[%s5] sm:$0xf]
    %v1556 = vlaneseq
    %v1557 = vshrl.u32 %v1556, 7
    %v1558 = vsub.s32 0, %v1557
    %v1559 = vrot.slane %v1554, %v1558
    %v1560 = vlaneseq
    %v1561 = vshrl.u32 %v1560, 7
    %v1562 = vsub.s32 1, %v1561
    %v1563 = vrot.slane %v1554, %v1562
    %v1564 = vlaneseq
    %v1565 = vshrl.u32 %v1564, 7
    %v1566 = vsub.s32 2, %v1565
    %v1567 = vrot.slane %v1554, %v1566
    %v1568 = vlaneseq
    %v1569 = vshrl.u32 %v1568, 7
    %v1570 = vsub.s32 3, %v1569
    %v1571 = vrot.slane %v1554, %v1570
    %v1584 = vunpack.c.l.b16 %v1418
    %v1585 = vunpack.c.l.b16 %v1419
    %v1586 = vunpack.c.l.b16 %v1420
    %v1587 = vunpack.c.l.b16 %v1421
    %v1588 = vunpack.c.l.b16 %v1422
    %v1589 = vunpack.c.l.b16 %v1423
    %v1590 = vunpack.c.l.b16 %v1424
    %v1591 = vunpack.c.l.b16 %v1425
    %vm1592 = vcmask 1041409
    %v1593 = vsel %vm1592, %v1588, %v1584
    %v1594 = vsel %vm1592, %v1589, %v1585
    %v1595 = vsel %vm1592, %v1590, %v1586
    %v1596 = vsel %vm1592, %v1591, %v1587
    %v1597 = vpack.c.b16 %v1593, %v1593
    %v1598 = vpack.c.b16 %v1594, %v1594
    %v1599 = vpack.c.b16 %v1595, %v1595
    %v1600 = vpack.c.b16 %v1596, %v1596
    %v1733 = vunpack.c.l.b16 %v1426
    %v1734 = vunpack.c.h.b16 %v1426
    %v1735 = vunpack.c.l.b16 %v1427
    %v1736 = vunpack.c.h.b16 %v1427
    %v1737 = vunpack.c.l.b16 %v1428
    %v1738 = vunpack.c.h.b16 %v1428
    %v1739 = vunpack.c.l.b16 %v1429
    %v1740 = vunpack.c.h.b16 %v1429
    %v1741 = vunpack.c.l.b16 %v1430
    %v1742 = vunpack.c.h.b16 %v1430
    %v1743 = vunpack.c.l.b16 %v1431
    %v1744 = vunpack.c.h.b16 %v1431
    %v1745 = vunpack.c.l.b16 %v1432
    %v1746 = vunpack.c.h.b16 %v1432
    %v1747 = vunpack.c.l.b16 %v1433
    %v1748 = vunpack.c.h.b16 %v1433
    %v1749 = vunpack.c.l.b16 %v1434
    %v1750 = vunpack.c.h.b16 %v1434
    %v1751 = vunpack.c.l.b16 %v1435
    %v1752 = vunpack.c.h.b16 %v1435
    %v1753 = vunpack.c.l.b16 %v1436
    %v1754 = vunpack.c.h.b16 %v1436
    %v1755 = vunpack.c.l.b16 %v1437
    %v1756 = vunpack.c.h.b16 %v1437
    %v1757 = vunpack.c.l.b16 %v1438
    %v1758 = vunpack.c.h.b16 %v1438
    %v1759 = vunpack.c.l.b16 %v1439
    %v1760 = vunpack.c.h.b16 %v1439
    %v1761 = vunpack.c.l.b16 %v1440
    %v1762 = vunpack.c.h.b16 %v1440
    %v1763 = vunpack.c.l.b16 %v1441
    %v1764 = vunpack.c.h.b16 %v1441
    %v1765 = vunpack.c.l.b16 %v1442
    %v1766 = vunpack.c.h.b16 %v1442
    %v1767 = vunpack.c.l.b16 %v1443
    %v1768 = vunpack.c.h.b16 %v1443
    %v1769 = vunpack.c.l.b16 %v1444
    %v1770 = vunpack.c.h.b16 %v1444
    %v1771 = vunpack.c.l.b16 %v1445
    %v1772 = vunpack.c.h.b16 %v1445
    %v1773 = vunpack.c.l.b16 %v1446
    %v1774 = vunpack.c.h.b16 %v1446
    %v1775 = vunpack.c.l.b16 %v1447
    %v1776 = vunpack.c.h.b16 %v1447
    %v1777 = vunpack.c.l.b16 %v1448
    %v1778 = vunpack.c.h.b16 %v1448
    %v1779 = vunpack.c.l.b16 %v1449
    %v1780 = vunpack.c.h.b16 %v1449
    %v1781 = vunpack.c.l.b16 %v1450
    %v1782 = vunpack.c.h.b16 %v1450
    %v1783 = vunpack.c.l.b16 %v1451
    %v1784 = vunpack.c.h.b16 %v1451
    %v1785 = vunpack.c.l.b16 %v1452
    %v1786 = vunpack.c.h.b16 %v1452
    %v1787 = vunpack.c.l.b16 %v1453
    %v1788 = vunpack.c.h.b16 %v1453
    %v1789 = vunpack.c.l.b16 %v1454
    %v1790 = vunpack.c.h.b16 %v1454
    %v1791 = vunpack.c.l.b16 %v1455
    %v1792 = vunpack.c.h.b16 %v1455
    %v1793 = vunpack.c.l.b16 %v1456
    %v1794 = vunpack.c.h.b16 %v1456
    %v1795 = vunpack.c.l.b16 %v1457
    %v1796 = vunpack.c.h.b16 %v1457
    %v1797 = vunpack.c.l.b16 %v1458
    %v1798 = vunpack.c.h.b16 %v1458
    %v1799 = vunpack.c.l.b16 %v1459
    %v1800 = vunpack.c.h.b16 %v1459
    %v1801 = vunpack.c.l.b16 %v1460
    %v1802 = vunpack.c.h.b16 %v1460
    %v1803 = vunpack.c.l.b16 %v1461
    %v1804 = vunpack.c.h.b16 %v1461
    %v1805 = vunpack.c.l.b16 %v1462
    %v1806 = vunpack.c.h.b16 %v1462
    %v1807 = vunpack.c.l.b16 %v1463
    %v1808 = vunpack.c.h.b16 %v1463
    %v1809 = vunpack.c.l.b16 %v1464
    %v1810 = vunpack.c.h.b16 %v1464
    %v1811 = vunpack.c.l.b16 %v1465
    %v1812 = vunpack.c.h.b16 %v1465
    %v1813 = vunpack.c.l.b16 %v1466
    %v1814 = vunpack.c.h.b16 %v1466
    %v1815 = vunpack.c.l.b16 %v1467
    %v1816 = vunpack.c.h.b16 %v1467
    %v1817 = vunpack.c.l.b16 %v1468
    %v1818 = vunpack.c.h.b16 %v1468
    %v1819 = vunpack.c.l.b16 %v1469
    %v1820 = vunpack.c.h.b16 %v1469
    %v1821 = vunpack.c.l.b16 %v1470
    %v1822 = vunpack.c.h.b16 %v1470
    %v1823 = vunpack.c.l.b16 %v1471
    %v1824 = vunpack.c.h.b16 %v1471
    %v1825 = vunpack.c.l.b16 %v1472
    %v1826 = vunpack.c.h.b16 %v1472
    %v1827 = vunpack.c.l.b16 %v1473
    %v1828 = vunpack.c.h.b16 %v1473
    %v1829 = vunpack.c.l.b16 %v1474
    %v1830 = vunpack.c.h.b16 %v1474
    %v1831 = vunpack.c.l.b16 %v1475
    %v1832 = vunpack.c.h.b16 %v1475
    %v1833 = vunpack.c.l.b16 %v1476
    %v1834 = vunpack.c.h.b16 %v1476
    %v1835 = vunpack.c.l.b16 %v1477
    %v1836 = vunpack.c.h.b16 %v1477
    %v1837 = vunpack.c.l.b16 %v1478
    %v1838 = vunpack.c.h.b16 %v1478
    %v1839 = vunpack.c.l.b16 %v1479
    %v1840 = vunpack.c.h.b16 %v1479
    %v1841 = vunpack.c.l.b16 %v1480
    %v1842 = vunpack.c.h.b16 %v1480
    %v1843 = vunpack.c.l.b16 %v1481
    %v1844 = vunpack.c.h.b16 %v1481
    %v1845 = vunpack.c.l.b16 %v1482
    %v1846 = vunpack.c.h.b16 %v1482
    %v1847 = vunpack.c.l.b16 %v1483
    %v1848 = vunpack.c.h.b16 %v1483
    %v1849 = vunpack.c.l.b16 %v1484
    %v1850 = vunpack.c.h.b16 %v1484
    %v1851 = vunpack.c.l.b16 %v1485
    %v1852 = vunpack.c.h.b16 %v1485
    %v1853 = vunpack.c.l.b16 %v1486
    %v1854 = vunpack.c.h.b16 %v1486
    %v1855 = vunpack.c.l.b16 %v1487
    %v1856 = vunpack.c.h.b16 %v1487
    %v1857 = vunpack.c.l.b16 %v1488
    %v1858 = vunpack.c.h.b16 %v1488
    %v1859 = vunpack.c.l.b16 %v1489
    %v1860 = vunpack.c.h.b16 %v1489
    %v1861 = vunpack.c.l.b16 %v1490
    %v1862 = vunpack.c.h.b16 %v1490
    %v1863 = vunpack.c.l.b16 %v1491
    %v1864 = vunpack.c.h.b16 %v1491
    %v1865 = vunpack.c.l.b16 %v1492
    %v1866 = vunpack.c.h.b16 %v1492
    %v1867 = vunpack.c.l.b16 %v1493
    %v1868 = vunpack.c.h.b16 %v1493
    %v1869 = vunpack.c.l.b16 %v1494
    %v1870 = vunpack.c.h.b16 %v1494
    %v1871 = vunpack.c.l.b16 %v1495
    %v1872 = vunpack.c.h.b16 %v1495
    %v1873 = vunpack.c.l.b16 %v1496
    %v1874 = vunpack.c.h.b16 %v1496
    %v1875 = vunpack.c.l.b16 %v1497
    %v1876 = vunpack.c.h.b16 %v1497
    %v1877 = vunpack.c.l.b16 %v1498
    %v1878 = vunpack.c.h.b16 %v1498
    %v1879 = vunpack.c.l.b16 %v1499
    %v1880 = vunpack.c.h.b16 %v1499
    %v1881 = vunpack.c.l.b16 %v1500
    %v1882 = vunpack.c.h.b16 %v1500
    %v1883 = vunpack.c.l.b16 %v1501
    %v1884 = vunpack.c.h.b16 %v1501
    %v1885 = vunpack.c.l.b16 %v1502
    %v1886 = vunpack.c.h.b16 %v1502
    %v1887 = vunpack.c.l.b16 %v1503
    %v1888 = vunpack.c.h.b16 %v1503
    %v1889 = vunpack.c.l.b16 %v1504
    %v1890 = vunpack.c.h.b16 %v1504
    %v1891 = vunpack.c.l.b16 %v1505
    %v1892 = vunpack.c.h.b16 %v1505
    %v1893 = vunpack.c.l.b16 %v1506
    %v1894 = vunpack.c.h.b16 %v1506
    %v1895 = vunpack.c.l.b16 %v1507
    %v1896 = vunpack.c.h.b16 %v1507
    %v1897 = vunpack.c.l.b16 %v1508
    %v1898 = vunpack.c.h.b16 %v1508
    %v1899 = vunpack.c.l.b16 %v1509
    %v1900 = vunpack.c.h.b16 %v1509
    %v1901 = vunpack.c.l.b16 %v1510
    %v1902 = vunpack.c.h.b16 %v1510
    %v1903 = vunpack.c.l.b16 %v1511
    %v1904 = vunpack.c.h.b16 %v1511
    %v1905 = vunpack.c.l.b16 %v1512
    %v1906 = vunpack.c.h.b16 %v1512
    %v1907 = vunpack.c.l.b16 %v1513
    %v1908 = vunpack.c.h.b16 %v1513
    %v1909 = vunpack.c.l.b16 %v1514
    %v1910 = vunpack.c.h.b16 %v1514
    %v1911 = vunpack.c.l.b16 %v1515
    %v1912 = vunpack.c.h.b16 %v1515
    %v1913 = vunpack.c.l.b16 %v1516
    %v1914 = vunpack.c.h.b16 %v1516
    %v1915 = vunpack.c.l.b16 %v1517
    %v1916 = vunpack.c.h.b16 %v1517
    %v1917 = vunpack.c.l.b16 %v1518
    %v1918 = vunpack.c.h.b16 %v1518
    %v1919 = vunpack.c.l.b16 %v1519
    %v1920 = vunpack.c.h.b16 %v1519
    %v1921 = vunpack.c.l.b16 %v1520
    %v1922 = vunpack.c.h.b16 %v1520
    %v1923 = vunpack.c.l.b16 %v1521
    %v1924 = vunpack.c.h.b16 %v1521
    %v1925 = vunpack.c.l.b16 %v1522
    %v1926 = vunpack.c.h.b16 %v1522
    %v1927 = vunpack.c.l.b16 %v1523
    %v1928 = vunpack.c.h.b16 %v1523
    %v1929 = vunpack.c.l.b16 %v1524
    %v1930 = vunpack.c.h.b16 %v1524
    %v1931 = vunpack.c.l.b16 %v1525
    %v1932 = vunpack.c.h.b16 %v1525
    %v1933 = vunpack.c.l.b16 %v1526
    %v1934 = vunpack.c.h.b16 %v1526
    %v1935 = vunpack.c.l.b16 %v1527
    %v1936 = vunpack.c.h.b16 %v1527
    %v1937 = vunpack.c.l.b16 %v1528
    %v1938 = vunpack.c.h.b16 %v1528
    %v1939 = vunpack.c.l.b16 %v1529
    %v1940 = vunpack.c.h.b16 %v1529
    %v1941 = vunpack.c.l.b16 %v1530
    %v1942 = vunpack.c.h.b16 %v1530
    %v1943 = vunpack.c.l.b16 %v1531
    %v1944 = vunpack.c.h.b16 %v1531
    %v1945 = vunpack.c.l.b16 %v1532
    %v1946 = vunpack.c.h.b16 %v1532
    %v1947 = vunpack.c.l.b16 %v1533
    %v1948 = vunpack.c.h.b16 %v1533
    %v1949 = vunpack.c.l.b16 %v1534
    %v1950 = vunpack.c.h.b16 %v1534
    %v1951 = vunpack.c.l.b16 %v1535
    %v1952 = vunpack.c.h.b16 %v1535
    %v1953 = vunpack.c.l.b16 %v1536
    %v1954 = vunpack.c.h.b16 %v1536
    %v1955 = vunpack.c.l.b16 %v1537
    %v1956 = vunpack.c.h.b16 %v1537
    %v1957 = vunpack.c.l.b16 %v1538
    %v1958 = vunpack.c.h.b16 %v1538
    %v1959 = vunpack.c.l.b16 %v1539
    %v1960 = vunpack.c.h.b16 %v1539
    %v1961 = vunpack.c.l.b16 %v1540
    %v1962 = vunpack.c.h.b16 %v1540
    %v1963 = vunpack.c.l.b16 %v1541
    %v1964 = vunpack.c.h.b16 %v1541
    %v1965 = vunpack.c.l.b16 %v1542
    %v1966 = vunpack.c.h.b16 %v1542
    %v1967 = vunpack.c.l.b16 %v1543
    %v1968 = vunpack.c.h.b16 %v1543
    %v1969 = vunpack.c.l.b16 %v1544
    %v1970 = vunpack.c.h.b16 %v1544
    %v1971 = vunpack.c.l.b16 %v1545
    %v1972 = vunpack.c.h.b16 %v1545
    %v1973 = vunpack.c.l.b16 %v1546
    %v1974 = vunpack.c.h.b16 %v1546
    %v1975 = vunpack.c.l.b16 %v1547
    %v1976 = vunpack.c.h.b16 %v1547
    %v1977 = vunpack.c.l.b16 %v1548
    %v1978 = vunpack.c.h.b16 %v1548
    %v1979 = vunpack.c.l.b16 %v1549
    %v1980 = vunpack.c.h.b16 %v1549
    %v1981 = vunpack.c.l.b16 %v1550
    %v1982 = vunpack.c.h.b16 %v1550
    %v1983 = vunpack.c.l.b16 %v1551
    %v1984 = vunpack.c.h.b16 %v1551
    %v1985 = vunpack.c.l.b16 %v1552
    %v1986 = vunpack.c.h.b16 %v1552
    %v1987 = vunpack.c.l.b16 %v1553
    %v1988 = vunpack.c.h.b16 %v1553
    %v1989 = vpack.c.b16 %v1737, %v1733
    %v1990 = vpack.c.b16 %v1738, %v1734
    %v1991 = vpack.c.b16 %v1739, %v1735
    %v1992 = vpack.c.b16 %v1740, %v1736
    %v1993 = vpack.c.b16 %v1745, %v1741
    %v1994 = vpack.c.b16 %v1746, %v1742
    %v1995 = vpack.c.b16 %v1747, %v1743
    %v1996 = vpack.c.b16 %v1748, %v1744
    %v1997 = vpack.c.b16 %v1753, %v1749
    %v1998 = vpack.c.b16 %v1754, %v1750
    %v1999 = vpack.c.b16 %v1755, %v1751
    %v2000 = vpack.c.b16 %v1756, %v1752
    %v2001 = vpack.c.b16 %v1761, %v1757
    %v2002 = vpack.c.b16 %v1762, %v1758
    %v2003 = vpack.c.b16 %v1763, %v1759
    %v2004 = vpack.c.b16 %v1764, %v1760
    %v2005 = vpack.c.b16 %v1769, %v1765
    %v2006 = vpack.c.b16 %v1770, %v1766
    %v2007 = vpack.c.b16 %v1771, %v1767
    %v2008 = vpack.c.b16 %v1772, %v1768
    %v2009 = vpack.c.b16 %v1777, %v1773
    %v2010 = vpack.c.b16 %v1778, %v1774
    %v2011 = vpack.c.b16 %v1779, %v1775
    %v2012 = vpack.c.b16 %v1780, %v1776
    %v2013 = vpack.c.b16 %v1785, %v1781
    %v2014 = vpack.c.b16 %v1786, %v1782
    %v2015 = vpack.c.b16 %v1787, %v1783
    %v2016 = vpack.c.b16 %v1788, %v1784
    %v2017 = vpack.c.b16 %v1793, %v1789
    %v2018 = vpack.c.b16 %v1794, %v1790
    %v2019 = vpack.c.b16 %v1795, %v1791
    %v2020 = vpack.c.b16 %v1796, %v1792
    %v2021 = vpack.c.b16 %v1801, %v1797
    %v2022 = vpack.c.b16 %v1802, %v1798
    %v2023 = vpack.c.b16 %v1803, %v1799
    %v2024 = vpack.c.b16 %v1804, %v1800
    %v2025 = vpack.c.b16 %v1809, %v1805
    %v2026 = vpack.c.b16 %v1810, %v1806
    %v2027 = vpack.c.b16 %v1811, %v1807
    %v2028 = vpack.c.b16 %v1812, %v1808
    %v2029 = vpack.c.b16 %v1817, %v1813
    %v2030 = vpack.c.b16 %v1818, %v1814
    %v2031 = vpack.c.b16 %v1819, %v1815
    %v2032 = vpack.c.b16 %v1820, %v1816
    %v2033 = vpack.c.b16 %v1825, %v1821
    %v2034 = vpack.c.b16 %v1826, %v1822
    %v2035 = vpack.c.b16 %v1827, %v1823
    %v2036 = vpack.c.b16 %v1828, %v1824
    %v2037 = vpack.c.b16 %v1833, %v1829
    %v2038 = vpack.c.b16 %v1834, %v1830
    %v2039 = vpack.c.b16 %v1835, %v1831
    %v2040 = vpack.c.b16 %v1836, %v1832
    %v2041 = vpack.c.b16 %v1841, %v1837
    %v2042 = vpack.c.b16 %v1842, %v1838
    %v2043 = vpack.c.b16 %v1843, %v1839
    %v2044 = vpack.c.b16 %v1844, %v1840
    %v2045 = vpack.c.b16 %v1849, %v1845
    %v2046 = vpack.c.b16 %v1850, %v1846
    %v2047 = vpack.c.b16 %v1851, %v1847
    %v2048 = vpack.c.b16 %v1852, %v1848
    %v2049 = vpack.c.b16 %v1857, %v1853
    %v2050 = vpack.c.b16 %v1858, %v1854
    %v2051 = vpack.c.b16 %v1859, %v1855
    %v2052 = vpack.c.b16 %v1860, %v1856
    %v2053 = vpack.c.b16 %v1865, %v1861
    %v2054 = vpack.c.b16 %v1866, %v1862
    %v2055 = vpack.c.b16 %v1867, %v1863
    %v2056 = vpack.c.b16 %v1868, %v1864
    %v2057 = vpack.c.b16 %v1873, %v1869
    %v2058 = vpack.c.b16 %v1874, %v1870
    %v2059 = vpack.c.b16 %v1875, %v1871
    %v2060 = vpack.c.b16 %v1876, %v1872
    %v2061 = vpack.c.b16 %v1881, %v1877
    %v2062 = vpack.c.b16 %v1882, %v1878
    %v2063 = vpack.c.b16 %v1883, %v1879
    %v2064 = vpack.c.b16 %v1884, %v1880
    %v2065 = vpack.c.b16 %v1889, %v1885
    %v2066 = vpack.c.b16 %v1890, %v1886
    %v2067 = vpack.c.b16 %v1891, %v1887
    %v2068 = vpack.c.b16 %v1892, %v1888
    %v2069 = vpack.c.b16 %v1897, %v1893
    %v2070 = vpack.c.b16 %v1898, %v1894
    %v2071 = vpack.c.b16 %v1899, %v1895
    %v2072 = vpack.c.b16 %v1900, %v1896
    %v2073 = vpack.c.b16 %v1905, %v1901
    %v2074 = vpack.c.b16 %v1906, %v1902
    %v2075 = vpack.c.b16 %v1907, %v1903
    %v2076 = vpack.c.b16 %v1908, %v1904
    %v2077 = vpack.c.b16 %v1913, %v1909
    %v2078 = vpack.c.b16 %v1914, %v1910
    %v2079 = vpack.c.b16 %v1915, %v1911
    %v2080 = vpack.c.b16 %v1916, %v1912
    %v2081 = vpack.c.b16 %v1921, %v1917
    %v2082 = vpack.c.b16 %v1922, %v1918
    %v2083 = vpack.c.b16 %v1923, %v1919
    %v2084 = vpack.c.b16 %v1924, %v1920
    %v2085 = vpack.c.b16 %v1929, %v1925
    %v2086 = vpack.c.b16 %v1930, %v1926
    %v2087 = vpack.c.b16 %v1931, %v1927
    %v2088 = vpack.c.b16 %v1932, %v1928
    %v2089 = vpack.c.b16 %v1937, %v1933
    %v2090 = vpack.c.b16 %v1938, %v1934
    %v2091 = vpack.c.b16 %v1939, %v1935
    %v2092 = vpack.c.b16 %v1940, %v1936
    %v2093 = vpack.c.b16 %v1945, %v1941
    %v2094 = vpack.c.b16 %v1946, %v1942
    %v2095 = vpack.c.b16 %v1947, %v1943
    %v2096 = vpack.c.b16 %v1948, %v1944
    %v2097 = vpack.c.b16 %v1953, %v1949
    %v2098 = vpack.c.b16 %v1954, %v1950
    %v2099 = vpack.c.b16 %v1955, %v1951
    %v2100 = vpack.c.b16 %v1956, %v1952
    %v2101 = vpack.c.b16 %v1961, %v1957
    %v2102 = vpack.c.b16 %v1962, %v1958
    %v2103 = vpack.c.b16 %v1963, %v1959
    %v2104 = vpack.c.b16 %v1964, %v1960
    %v2105 = vpack.c.b16 %v1969, %v1965
    %v2106 = vpack.c.b16 %v1970, %v1966
    %v2107 = vpack.c.b16 %v1971, %v1967
    %v2108 = vpack.c.b16 %v1972, %v1968
    %v2109 = vpack.c.b16 %v1977, %v1973
    %v2110 = vpack.c.b16 %v1978, %v1974
    %v2111 = vpack.c.b16 %v1979, %v1975
    %v2112 = vpack.c.b16 %v1980, %v1976
    %v2113 = vpack.c.b16 %v1985, %v1981
    %v2114 = vpack.c.b16 %v1986, %v1982
    %v2115 = vpack.c.b16 %v1987, %v1983
    %v2116 = vpack.c.b16 %v1988, %v1984
    %2245 = vmatprep.subr.bf16.mxu0 %v1990
    %2246 = vmatpush1.bf16.msra.mxu0 %v1989
    %2247 = vmatprep.subr.bf16.mxu0 %v1994
    %2248 = vmatpush1.bf16.msra.mxu0 %v1993
    %2249 = vmatprep.subr.bf16.mxu0 %v1998
    %2250 = vmatpush1.bf16.msra.mxu0 %v1997
    %2251 = vmatprep.subr.bf16.mxu0 %v2002
    %2252 = vmatpush1.bf16.msra.mxu0 %v2001
    %2253 = vmatprep.subr.bf16.mxu0 %v2006
    %2254 = vmatpush1.bf16.msra.mxu0 %v2005
    %2255 = vmatprep.subr.bf16.mxu0 %v2010
    %2256 = vmatpush1.bf16.msra.mxu0 %v2009
    %2257 = vmatprep.subr.bf16.mxu0 %v2014
    %2258 = vmatpush1.bf16.msra.mxu0 %v2013
    %2259 = vmatprep.subr.bf16.mxu0 %v2018
    %2260 = vmatpush1.bf16.msra.mxu0 %v2017
    %2261 = vmatprep.subr.bf16.mxu0 %v2022
    %2262 = vmatpush1.bf16.msra.mxu0 %v2021
    %2263 = vmatprep.subr.bf16.mxu0 %v2026
    %2264 = vmatpush1.bf16.msra.mxu0 %v2025
    %2265 = vmatprep.subr.bf16.mxu0 %v2030
    %2266 = vmatpush1.bf16.msra.mxu0 %v2029
    %2267 = vmatprep.subr.bf16.mxu0 %v2034
    %2268 = vmatpush1.bf16.msra.mxu0 %v2033
    %2269 = vmatprep.subr.bf16.mxu0 %v2038
    %2270 = vmatpush1.bf16.msra.mxu0 %v2037
    %2271 = vmatprep.subr.bf16.mxu0 %v2042
    %2272 = vmatpush1.bf16.msra.mxu0 %v2041
    %2273 = vmatprep.subr.bf16.mxu0 %v2046
    %2274 = vmatpush1.bf16.msra.mxu0 %v2045
    %2275 = vmatprep.subr.bf16.mxu0 %v2050
    %2276 = vmatpush1.bf16.msra.mxu0 %v2049
    %2277 = vmatprep.mubr.bf16.mxu0 %v1598
    %2278 = vmatmul.mubr.bf16.gmra.mrb[0].mxu0 %v1597
    %v2279 = vpop.f32.mrb[0].mxu0
    %v2280 = vadd.f32 %v1559, %v2279
    %v2281 = vpop.f32.mrb[0].mxu0
    %v2282 = vadd.f32 %v1563, %v2281
    %v2283 = vpop.f32.mrb[0].mxu0
    %v2284 = vpop.f32.mrb[0].mxu0
    %2285 = vdwg.mxu0
    %2286 = vmatprep.subr.bf16.mxu0 %v2054
    %2287 = vmatpush1.bf16.msra.mxu0 %v2053
    %2288 = vmatprep.subr.bf16.mxu0 %v2058
    %2289 = vmatpush1.bf16.msra.mxu0 %v2057
    %2290 = vmatprep.subr.bf16.mxu0 %v2062
    %2291 = vmatpush1.bf16.msra.mxu0 %v2061
    %2292 = vmatprep.subr.bf16.mxu0 %v2066
    %2293 = vmatpush1.bf16.msra.mxu0 %v2065
    %2294 = vmatprep.subr.bf16.mxu0 %v2070
    %2295 = vmatpush1.bf16.msra.mxu0 %v2069
    %2296 = vmatprep.subr.bf16.mxu0 %v2074
    %2297 = vmatpush1.bf16.msra.mxu0 %v2073
    %2298 = vmatprep.subr.bf16.mxu0 %v2078
    %2299 = vmatpush1.bf16.msra.mxu0 %v2077
    %2300 = vmatprep.subr.bf16.mxu0 %v2082
    %2301 = vmatpush1.bf16.msra.mxu0 %v2081
    %2302 = vmatprep.subr.bf16.mxu0 %v2086
    %2303 = vmatpush1.bf16.msra.mxu0 %v2085
    %2304 = vmatprep.subr.bf16.mxu0 %v2090
    %2305 = vmatpush1.bf16.msra.mxu0 %v2089
    %2306 = vmatprep.subr.bf16.mxu0 %v2094
    %2307 = vmatpush1.bf16.msra.mxu0 %v2093
    %2308 = vmatprep.subr.bf16.mxu0 %v2098
    %2309 = vmatpush1.bf16.msra.mxu0 %v2097
    %2310 = vmatprep.subr.bf16.mxu0 %v2102
    %2311 = vmatpush1.bf16.msra.mxu0 %v2101
    %2312 = vmatprep.subr.bf16.mxu0 %v2106
    %2313 = vmatpush1.bf16.msra.mxu0 %v2105
    %2314 = vmatprep.subr.bf16.mxu0 %v2110
    %2315 = vmatpush1.bf16.msra.mxu0 %v2109
    %2316 = vmatprep.subr.bf16.mxu0 %v2114
    %2317 = vmatpush1.bf16.msra.mxu0 %v2113
    %2318 = vmatprep.mubr.bf16.mxu0 %v1600
    %2319 = vmatmul.mubr.bf16.gmra.mrb[0].mxu0 %v1599
    %v2320 = vpop.f32.mrb[0].mxu0
    %v2321 = vadd.f32 %v2280, %v2320
    %v2322 = vpop.f32.mrb[0].mxu0
    %v2323 = vadd.f32 %v2282, %v2322
    %v2324 = vpop.f32.mrb[0].mxu0
    %v2325 = vpop.f32.mrb[0].mxu0
    %2326 = vdwg.mxu0
    %2327 = vmatprep.subr.bf16.mxu0 %v1992
    %2328 = vmatpush1.bf16.msra.mxu0 %v1991
    %2329 = vmatprep.subr.bf16.mxu0 %v1996
    %2330 = vmatpush1.bf16.msra.mxu0 %v1995
    %2331 = vmatprep.subr.bf16.mxu0 %v2000
    %2332 = vmatpush1.bf16.msra.mxu0 %v1999
    %2333 = vmatprep.subr.bf16.mxu0 %v2004
    %2334 = vmatpush1.bf16.msra.mxu0 %v2003
    %2335 = vmatprep.subr.bf16.mxu0 %v2008
    %2336 = vmatpush1.bf16.msra.mxu0 %v2007
    %2337 = vmatprep.subr.bf16.mxu0 %v2012
    %2338 = vmatpush1.bf16.msra.mxu0 %v2011
    %2339 = vmatprep.subr.bf16.mxu0 %v2016
    %2340 = vmatpush1.bf16.msra.mxu0 %v2015
    %2341 = vmatprep.subr.bf16.mxu0 %v2020
    %2342 = vmatpush1.bf16.msra.mxu0 %v2019
    %2343 = vmatprep.subr.bf16.mxu0 %v2024
    %2344 = vmatpush1.bf16.msra.mxu0 %v2023
    %2345 = vmatprep.subr.bf16.mxu0 %v2028
    %2346 = vmatpush1.bf16.msra.mxu0 %v2027
    %2347 = vmatprep.subr.bf16.mxu0 %v2032
    %2348 = vmatpush1.bf16.msra.mxu0 %v2031
    %2349 = vmatprep.subr.bf16.mxu0 %v2036
    %2350 = vmatpush1.bf16.msra.mxu0 %v2035
    %2351 = vmatprep.subr.bf16.mxu0 %v2040
    %2352 = vmatpush1.bf16.msra.mxu0 %v2039
    %2353 = vmatprep.subr.bf16.mxu0 %v2044
    %2354 = vmatpush1.bf16.msra.mxu0 %v2043
    %2355 = vmatprep.subr.bf16.mxu0 %v2048
    %2356 = vmatpush1.bf16.msra.mxu0 %v2047
    %2357 = vmatprep.subr.bf16.mxu0 %v2052
    %2358 = vmatpush1.bf16.msra.mxu0 %v2051
    %2359 = vmatprep.mubr.bf16.mxu0 %v1598
    %2360 = vmatmul.mubr.bf16.gmra.mrb[0].mxu0 %v1597
    %v2361 = vpop.f32.mrb[0].mxu0
    %v2362 = vadd.f32 %v1567, %v2361
    %v2363 = vpop.f32.mrb[0].mxu0
    %v2364 = vadd.f32 %v1571, %v2363
    %v2365 = vpop.f32.mrb[0].mxu0
    %v2366 = vpop.f32.mrb[0].mxu0
    %2367 = vdwg.mxu0
    %2368 = vmatprep.subr.bf16.mxu0 %v2056
    %2369 = vmatpush1.bf16.msra.mxu0 %v2055
    %2370 = vmatprep.subr.bf16.mxu0 %v2060
    %2371 = vmatpush1.bf16.msra.mxu0 %v2059
    %2372 = vmatprep.subr.bf16.mxu0 %v2064
    %2373 = vmatpush1.bf16.msra.mxu0 %v2063
    %2374 = vmatprep.subr.bf16.mxu0 %v2068
    %2375 = vmatpush1.bf16.msra.mxu0 %v2067
    %2376 = vmatprep.subr.bf16.mxu0 %v2072
    %2377 = vmatpush1.bf16.msra.mxu0 %v2071
    %2378 = vmatprep.subr.bf16.mxu0 %v2076
    %2379 = vmatpush1.bf16.msra.mxu0 %v2075
    %2380 = vmatprep.subr.bf16.mxu0 %v2080
    %2381 = vmatpush1.bf16.msra.mxu0 %v2079
    %2382 = vmatprep.subr.bf16.mxu0 %v2084
    %2383 = vmatpush1.bf16.msra.mxu0 %v2083
    %2384 = vmatprep.subr.bf16.mxu0 %v2088
    %2385 = vmatpush1.bf16.msra.mxu0 %v2087
    %2386 = vmatprep.subr.bf16.mxu0 %v2092
    %2387 = vmatpush1.bf16.msra.mxu0 %v2091
    %2388 = vmatprep.subr.bf16.mxu0 %v2096
    %2389 = vmatpush1.bf16.msra.mxu0 %v2095
    %2390 = vmatprep.subr.bf16.mxu0 %v2100
    %2391 = vmatpush1.bf16.msra.mxu0 %v2099
    %2392 = vmatprep.subr.bf16.mxu0 %v2104
    %2393 = vmatpush1.bf16.msra.mxu0 %v2103
    %2394 = vmatprep.subr.bf16.mxu0 %v2108
    %2395 = vmatpush1.bf16.msra.mxu0 %v2107
    %2396 = vmatprep.subr.bf16.mxu0 %v2112
    %2397 = vmatpush1.bf16.msra.mxu0 %v2111
    %2398 = vmatprep.subr.bf16.mxu0 %v2116
    %2399 = vmatpush1.bf16.msra.mxu0 %v2115
    %2400 = vmatprep.mubr.bf16.mxu0 %v1600
    %2401 = vmatmul.mubr.bf16.gmra.mrb[0].mxu0 %v1599
    %v2402 = vpop.f32.mrb[0].mxu0
    %v2403 = vadd.f32 %v2362, %v2402
    %v2404 = vpop.f32.mrb[0].mxu0
    %v2405 = vadd.f32 %v2364, %v2404
    %v2406 = vpop.f32.mrb[0].mxu0
    %v2407 = vpop.f32.mrb[0].mxu0
    %2408 = vdwg.mxu0
    %v2409 = vmax.f32 %v2321, 0.0
    %v2410 = vmax.f32 %v2323, 0.0
    %v2411 = vmax.f32 %v2403, 0.0
    %v2412 = vmax.f32 %v2405, 0.0
    %v2413 = vpack.c.bf16 %v2409, %v2409
    %v2414 = vpack.c.bf16 %v2410, %v2410
    %v2415 = vpack.c.bf16 %v2411, %v2411
    %v2416 = vpack.c.bf16 %v2412, %v2412
    %v2417 = vld [vmem:[#allocation5] sm:$0xff]
    %v2418 = vld [vmem:[#allocation5 + $0x8] sm:$0xff]
    %v2419 = vld [vmem:[#allocation5 + $0x10] sm:$0xff]
    %v2420 = vld [vmem:[#allocation5 + $0x18] sm:$0xff]
    %v2421 = vld [vmem:[#allocation5 + $0x20] sm:$0xff]
    %v2422 = vld [vmem:[#allocation5 + $0x28] sm:$0xff]
    %v2423 = vld [vmem:[#allocation5 + $0x30] sm:$0xff]
    %v2424 = vld [vmem:[#allocation5 + $0x38] sm:$0xff]
    %v2425 = vld [vmem:[#allocation5 + $0x40] sm:$0xff]
    %v2426 = vld [vmem:[#allocation5 + $0x48] sm:$0xff]
    %v2427 = vld [vmem:[#allocation5 + $0x50] sm:$0xff]
    %v2428 = vld [vmem:[#allocation5 + $0x58] sm:$0xff]
    %v2429 = vld [vmem:[#allocation5 + $0x60] sm:$0xff]
    %v2430 = vld [vmem:[#allocation5 + $0x68] sm:$0xff]
    %v2431 = vld [vmem:[#allocation5 + $0x70] sm:$0xff]
    %v2432 = vld [vmem:[#allocation5 + $0x78] sm:$0xff]
    %v2433 = vld [vmem:[#allocation5 + $0x80] sm:$0xff]
    %v2434 = vld [vmem:[#allocation5 + $0x88] sm:$0xff]
    %v2435 = vld [vmem:[#allocation5 + $0x90] sm:$0xff]
    %v2436 = vld [vmem:[#allocation5 + $0x98] sm:$0xff]
    %v2437 = vld [vmem:[#allocation5 + $0xa0] sm:$0xff]
    %v2438 = vld [vmem:[#allocation5 + $0xa8] sm:$0xff]
    %v2439 = vld [vmem:[#allocation5 + $0xb0] sm:$0xff]
    %v2440 = vld [vmem:[#allocation5 + $0xb8] sm:$0xff]
    %v2441 = vld [vmem:[#allocation5 + $0xc0] sm:$0xff]
    %v2442 = vld [vmem:[#allocation5 + $0xc8] sm:$0xff]
    %v2443 = vld [vmem:[#allocation5 + $0xd0] sm:$0xff]
    %v2444 = vld [vmem:[#allocation5 + $0xd8] sm:$0xff]
    %v2445 = vld [vmem:[#allocation5 + $0xe0] sm:$0xff]
    %v2446 = vld [vmem:[#allocation5 + $0xe8] sm:$0xff]
    %v2447 = vld [vmem:[#allocation5 + $0xf0] sm:$0xff]
    %v2448 = vld [vmem:[#allocation5 + $0xf8] sm:$0xff]
    %v2449 = vld [vmem:[#allocation5 + $0x100] sm:$0xff]
    %v2450 = vld [vmem:[#allocation5 + $0x108] sm:$0xff]
    %v2451 = vld [vmem:[#allocation5 + $0x110] sm:$0xff]
    %v2452 = vld [vmem:[#allocation5 + $0x118] sm:$0xff]
    %v2453 = vld [vmem:[#allocation5 + $0x120] sm:$0xff]
    %v2454 = vld [vmem:[#allocation5 + $0x128] sm:$0xff]
    %v2455 = vld [vmem:[#allocation5 + $0x130] sm:$0xff]
    %v2456 = vld [vmem:[#allocation5 + $0x138] sm:$0xff]
    %v2457 = vld [vmem:[#allocation5 + $0x140] sm:$0xff]
    %v2458 = vld [vmem:[#allocation5 + $0x148] sm:$0xff]
    %v2459 = vld [vmem:[#allocation5 + $0x150] sm:$0xff]
    %v2460 = vld [vmem:[#allocation5 + $0x158] sm:$0xff]
    %v2461 = vld [vmem:[#allocation5 + $0x160] sm:$0xff]
    %v2462 = vld [vmem:[#allocation5 + $0x168] sm:$0xff]
    %v2463 = vld [vmem:[#allocation5 + $0x170] sm:$0xff]
    %v2464 = vld [vmem:[#allocation5 + $0x178] sm:$0xff]
    %v2465 = vld [vmem:[#allocation5 + $0x180] sm:$0xff]
    %v2466 = vld [vmem:[#allocation5 + $0x188] sm:$0xff]
    %v2467 = vld [vmem:[#allocation5 + $0x190] sm:$0xff]
    %v2468 = vld [vmem:[#allocation5 + $0x198] sm:$0xff]
    %v2469 = vld [vmem:[#allocation5 + $0x1a0] sm:$0xff]
    %v2470 = vld [vmem:[#allocation5 + $0x1a8] sm:$0xff]
    %v2471 = vld [vmem:[#allocation5 + $0x1b0] sm:$0xff]
    %v2472 = vld [vmem:[#allocation5 + $0x1b8] sm:$0xff]
    %v2473 = vld [vmem:[#allocation5 + $0x1c0] sm:$0xff]
    %v2474 = vld [vmem:[#allocation5 + $0x1c8] sm:$0xff]
    %v2475 = vld [vmem:[#allocation5 + $0x1d0] sm:$0xff]
    %v2476 = vld [vmem:[#allocation5 + $0x1d8] sm:$0xff]
    %v2477 = vld [vmem:[#allocation5 + $0x1e0] sm:$0xff]
    %v2478 = vld [vmem:[#allocation5 + $0x1e8] sm:$0xff]
    %v2479 = vld [vmem:[#allocation5 + $0x1f0] sm:$0xff]
    %v2480 = vld [vmem:[#allocation5 + $0x1f8] sm:$0xff]
    %v2481 = vld [vmem:[#allocation5 + $0x200] sm:$0xff]
    %v2482 = vld [vmem:[#allocation5 + $0x208] sm:$0xff]
    %v2483 = vld [vmem:[#allocation5 + $0x210] sm:$0xff]
    %v2484 = vld [vmem:[#allocation5 + $0x218] sm:$0xff]
    %v2485 = vld [vmem:[#allocation5 + $0x220] sm:$0xff]
    %v2486 = vld [vmem:[#allocation5 + $0x228] sm:$0xff]
    %v2487 = vld [vmem:[#allocation5 + $0x230] sm:$0xff]
    %v2488 = vld [vmem:[#allocation5 + $0x238] sm:$0xff]
    %v2489 = vld [vmem:[#allocation5 + $0x240] sm:$0xff]
    %v2490 = vld [vmem:[#allocation5 + $0x248] sm:$0xff]
    %v2491 = vld [vmem:[#allocation5 + $0x250] sm:$0xff]
    %v2492 = vld [vmem:[#allocation5 + $0x258] sm:$0xff]
    %v2493 = vld [vmem:[#allocation5 + $0x260] sm:$0xff]
    %v2494 = vld [vmem:[#allocation5 + $0x268] sm:$0xff]
    %v2495 = vld [vmem:[#allocation5 + $0x270] sm:$0xff]
    %v2496 = vld [vmem:[#allocation5 + $0x278] sm:$0xff]
    %v2497 = vld [vmem:[#allocation5 + $0x280] sm:$0xff]
    %v2498 = vld [vmem:[#allocation5 + $0x288] sm:$0xff]
    %v2499 = vld [vmem:[#allocation5 + $0x290] sm:$0xff]
    %v2500 = vld [vmem:[#allocation5 + $0x298] sm:$0xff]
    %v2501 = vld [vmem:[#allocation5 + $0x2a0] sm:$0xff]
    %v2502 = vld [vmem:[#allocation5 + $0x2a8] sm:$0xff]
    %v2503 = vld [vmem:[#allocation5 + $0x2b0] sm:$0xff]
    %v2504 = vld [vmem:[#allocation5 + $0x2b8] sm:$0xff]
    %v2505 = vld [vmem:[#allocation5 + $0x2c0] sm:$0xff]
    %v2506 = vld [vmem:[#allocation5 + $0x2c8] sm:$0xff]
    %v2507 = vld [vmem:[#allocation5 + $0x2d0] sm:$0xff]
    %v2508 = vld [vmem:[#allocation5 + $0x2d8] sm:$0xff]
    %v2509 = vld [vmem:[#allocation5 + $0x2e0] sm:$0xff]
    %v2510 = vld [vmem:[#allocation5 + $0x2e8] sm:$0xff]
    %v2511 = vld [vmem:[#allocation5 + $0x2f0] sm:$0xff]
    %v2512 = vld [vmem:[#allocation5 + $0x2f8] sm:$0xff]
    %v2513 = vld [vmem:[#allocation5 + $0x300] sm:$0xff]
    %v2514 = vld [vmem:[#allocation5 + $0x308] sm:$0xff]
    %v2515 = vld [vmem:[#allocation5 + $0x310] sm:$0xff]
    %v2516 = vld [vmem:[#allocation5 + $0x318] sm:$0xff]
    %v2517 = vld [vmem:[#allocation5 + $0x320] sm:$0xff]
    %v2518 = vld [vmem:[#allocation5 + $0x328] sm:$0xff]
    %v2519 = vld [vmem:[#allocation5 + $0x330] sm:$0xff]
    %v2520 = vld [vmem:[#allocation5 + $0x338] sm:$0xff]
    %v2521 = vld [vmem:[#allocation5 + $0x340] sm:$0xff]
    %v2522 = vld [vmem:[#allocation5 + $0x348] sm:$0xff]
    %v2523 = vld [vmem:[#allocation5 + $0x350] sm:$0xff]
    %v2524 = vld [vmem:[#allocation5 + $0x358] sm:$0xff]
    %v2525 = vld [vmem:[#allocation5 + $0x360] sm:$0xff]
    %v2526 = vld [vmem:[#allocation5 + $0x368] sm:$0xff]
    %v2527 = vld [vmem:[#allocation5 + $0x370] sm:$0xff]
    %v2528 = vld [vmem:[#allocation5 + $0x378] sm:$0xff]
    %v2529 = vld [vmem:[#allocation5 + $0x380] sm:$0xff]
    %v2530 = vld [vmem:[#allocation5 + $0x388] sm:$0xff]
    %v2531 = vld [vmem:[#allocation5 + $0x390] sm:$0xff]
    %v2532 = vld [vmem:[#allocation5 + $0x398] sm:$0xff]
    %v2533 = vld [vmem:[#allocation5 + $0x3a0] sm:$0xff]
    %v2534 = vld [vmem:[#allocation5 + $0x3a8] sm:$0xff]
    %v2535 = vld [vmem:[#allocation5 + $0x3b0] sm:$0xff]
    %v2536 = vld [vmem:[#allocation5 + $0x3b8] sm:$0xff]
    %v2537 = vld [vmem:[#allocation5 + $0x3c0] sm:$0xff]
    %v2538 = vld [vmem:[#allocation5 + $0x3c8] sm:$0xff]
    %v2539 = vld [vmem:[#allocation5 + $0x3d0] sm:$0xff]
    %v2540 = vld [vmem:[#allocation5 + $0x3d8] sm:$0xff]
    %v2541 = vld [vmem:[#allocation5 + $0x3e0] sm:$0xff]
    %v2542 = vld [vmem:[#allocation5 + $0x3e8] sm:$0xff]
    %v2543 = vld [vmem:[#allocation5 + $0x3f0] sm:$0xff]
    %v2544 = vld [vmem:[#allocation5 + $0x3f8] sm:$0xff]
    %v2545 = vld [vmem:[%s7] sm:$0xf]
    %v2547 = vlaneseq
    %v2548 = vshrl.u32 %v2547, 7
    %v2549 = vsub.s32 0, %v2548
    %v2550 = vrot.slane %v2545, %v2549
    %v2551 = vlaneseq
    %v2552 = vshrl.u32 %v2551, 7
    %v2553 = vsub.s32 1, %v2552
    %v2554 = vrot.slane %v2545, %v2553
    %v2555 = vlaneseq
    %v2556 = vshrl.u32 %v2555, 7
    %v2557 = vsub.s32 2, %v2556
    %v2558 = vrot.slane %v2545, %v2557
    %v2559 = vlaneseq
    %v2560 = vshrl.u32 %v2559, 7
    %v2561 = vsub.s32 3, %v2560
    %v2562 = vrot.slane %v2545, %v2561
    %v2695 = vunpack.c.l.b16 %v2417
    %v2696 = vunpack.c.h.b16 %v2417
    %v2697 = vunpack.c.l.b16 %v2418
    %v2698 = vunpack.c.h.b16 %v2418
    %v2699 = vunpack.c.l.b16 %v2419
    %v2700 = vunpack.c.h.b16 %v2419
    %v2701 = vunpack.c.l.b16 %v2420
    %v2702 = vunpack.c.h.b16 %v2420
    %v2703 = vunpack.c.l.b16 %v2421
    %v2704 = vunpack.c.h.b16 %v2421
    %v2705 = vunpack.c.l.b16 %v2422
    %v2706 = vunpack.c.h.b16 %v2422
    %v2707 = vunpack.c.l.b16 %v2423
    %v2708 = vunpack.c.h.b16 %v2423
    %v2709 = vunpack.c.l.b16 %v2424
    %v2710 = vunpack.c.h.b16 %v2424
    %v2711 = vunpack.c.l.b16 %v2425
    %v2712 = vunpack.c.h.b16 %v2425
    %v2713 = vunpack.c.l.b16 %v2426
    %v2714 = vunpack.c.h.b16 %v2426
    %v2715 = vunpack.c.l.b16 %v2427
    %v2716 = vunpack.c.h.b16 %v2427
    %v2717 = vunpack.c.l.b16 %v2428
    %v2718 = vunpack.c.h.b16 %v2428
    %v2719 = vunpack.c.l.b16 %v2429
    %v2720 = vunpack.c.h.b16 %v2429
    %v2721 = vunpack.c.l.b16 %v2430
    %v2722 = vunpack.c.h.b16 %v2430
    %v2723 = vunpack.c.l.b16 %v2431
    %v2724 = vunpack.c.h.b16 %v2431
    %v2725 = vunpack.c.l.b16 %v2432
    %v2726 = vunpack.c.h.b16 %v2432
    %v2727 = vunpack.c.l.b16 %v2433
    %v2728 = vunpack.c.h.b16 %v2433
    %v2729 = vunpack.c.l.b16 %v2434
    %v2730 = vunpack.c.h.b16 %v2434
    %v2731 = vunpack.c.l.b16 %v2435
    %v2732 = vunpack.c.h.b16 %v2435
    %v2733 = vunpack.c.l.b16 %v2436
    %v2734 = vunpack.c.h.b16 %v2436
    %v2735 = vunpack.c.l.b16 %v2437
    %v2736 = vunpack.c.h.b16 %v2437
    %v2737 = vunpack.c.l.b16 %v2438
    %v2738 = vunpack.c.h.b16 %v2438
    %v2739 = vunpack.c.l.b16 %v2439
    %v2740 = vunpack.c.h.b16 %v2439
    %v2741 = vunpack.c.l.b16 %v2440
    %v2742 = vunpack.c.h.b16 %v2440
    %v2743 = vunpack.c.l.b16 %v2441
    %v2744 = vunpack.c.h.b16 %v2441
    %v2745 = vunpack.c.l.b16 %v2442
    %v2746 = vunpack.c.h.b16 %v2442
    %v2747 = vunpack.c.l.b16 %v2443
    %v2748 = vunpack.c.h.b16 %v2443
    %v2749 = vunpack.c.l.b16 %v2444
    %v2750 = vunpack.c.h.b16 %v2444
    %v2751 = vunpack.c.l.b16 %v2445
    %v2752 = vunpack.c.h.b16 %v2445
    %v2753 = vunpack.c.l.b16 %v2446
    %v2754 = vunpack.c.h.b16 %v2446
    %v2755 = vunpack.c.l.b16 %v2447
    %v2756 = vunpack.c.h.b16 %v2447
    %v2757 = vunpack.c.l.b16 %v2448
    %v2758 = vunpack.c.h.b16 %v2448
    %v2759 = vunpack.c.l.b16 %v2449
    %v2760 = vunpack.c.h.b16 %v2449
    %v2761 = vunpack.c.l.b16 %v2450
    %v2762 = vunpack.c.h.b16 %v2450
    %v2763 = vunpack.c.l.b16 %v2451
    %v2764 = vunpack.c.h.b16 %v2451
    %v2765 = vunpack.c.l.b16 %v2452
    %v2766 = vunpack.c.h.b16 %v2452
    %v2767 = vunpack.c.l.b16 %v2453
    %v2768 = vunpack.c.h.b16 %v2453
    %v2769 = vunpack.c.l.b16 %v2454
    %v2770 = vunpack.c.h.b16 %v2454
    %v2771 = vunpack.c.l.b16 %v2455
    %v2772 = vunpack.c.h.b16 %v2455
    %v2773 = vunpack.c.l.b16 %v2456
    %v2774 = vunpack.c.h.b16 %v2456
    %v2775 = vunpack.c.l.b16 %v2457
    %v2776 = vunpack.c.h.b16 %v2457
    %v2777 = vunpack.c.l.b16 %v2458
    %v2778 = vunpack.c.h.b16 %v2458
    %v2779 = vunpack.c.l.b16 %v2459
    %v2780 = vunpack.c.h.b16 %v2459
    %v2781 = vunpack.c.l.b16 %v2460
    %v2782 = vunpack.c.h.b16 %v2460
    %v2783 = vunpack.c.l.b16 %v2461
    %v2784 = vunpack.c.h.b16 %v2461
    %v2785 = vunpack.c.l.b16 %v2462
    %v2786 = vunpack.c.h.b16 %v2462
    %v2787 = vunpack.c.l.b16 %v2463
    %v2788 = vunpack.c.h.b16 %v2463
    %v2789 = vunpack.c.l.b16 %v2464
    %v2790 = vunpack.c.h.b16 %v2464
    %v2791 = vunpack.c.l.b16 %v2465
    %v2792 = vunpack.c.h.b16 %v2465
    %v2793 = vunpack.c.l.b16 %v2466
    %v2794 = vunpack.c.h.b16 %v2466
    %v2795 = vunpack.c.l.b16 %v2467
    %v2796 = vunpack.c.h.b16 %v2467
    %v2797 = vunpack.c.l.b16 %v2468
    %v2798 = vunpack.c.h.b16 %v2468
    %v2799 = vunpack.c.l.b16 %v2469
    %v2800 = vunpack.c.h.b16 %v2469
    %v2801 = vunpack.c.l.b16 %v2470
    %v2802 = vunpack.c.h.b16 %v2470
    %v2803 = vunpack.c.l.b16 %v2471
    %v2804 = vunpack.c.h.b16 %v2471
    %v2805 = vunpack.c.l.b16 %v2472
    %v2806 = vunpack.c.h.b16 %v2472
    %v2807 = vunpack.c.l.b16 %v2473
    %v2808 = vunpack.c.h.b16 %v2473
    %v2809 = vunpack.c.l.b16 %v2474
    %v2810 = vunpack.c.h.b16 %v2474
    %v2811 = vunpack.c.l.b16 %v2475
    %v2812 = vunpack.c.h.b16 %v2475
    %v2813 = vunpack.c.l.b16 %v2476
    %v2814 = vunpack.c.h.b16 %v2476
    %v2815 = vunpack.c.l.b16 %v2477
    %v2816 = vunpack.c.h.b16 %v2477
    %v2817 = vunpack.c.l.b16 %v2478
    %v2818 = vunpack.c.h.b16 %v2478
    %v2819 = vunpack.c.l.b16 %v2479
    %v2820 = vunpack.c.h.b16 %v2479
    %v2821 = vunpack.c.l.b16 %v2480
    %v2822 = vunpack.c.h.b16 %v2480
    %v2823 = vunpack.c.l.b16 %v2481
    %v2824 = vunpack.c.h.b16 %v2481
    %v2825 = vunpack.c.l.b16 %v2482
    %v2826 = vunpack.c.h.b16 %v2482
    %v2827 = vunpack.c.l.b16 %v2483
    %v2828 = vunpack.c.h.b16 %v2483
    %v2829 = vunpack.c.l.b16 %v2484
    %v2830 = vunpack.c.h.b16 %v2484
    %v2831 = vunpack.c.l.b16 %v2485
    %v2832 = vunpack.c.h.b16 %v2485
    %v2833 = vunpack.c.l.b16 %v2486
    %v2834 = vunpack.c.h.b16 %v2486
    %v2835 = vunpack.c.l.b16 %v2487
    %v2836 = vunpack.c.h.b16 %v2487
    %v2837 = vunpack.c.l.b16 %v2488
    %v2838 = vunpack.c.h.b16 %v2488
    %v2839 = vunpack.c.l.b16 %v2489
    %v2840 = vunpack.c.h.b16 %v2489
    %v2841 = vunpack.c.l.b16 %v2490
    %v2842 = vunpack.c.h.b16 %v2490
    %v2843 = vunpack.c.l.b16 %v2491
    %v2844 = vunpack.c.h.b16 %v2491
    %v2845 = vunpack.c.l.b16 %v2492
    %v2846 = vunpack.c.h.b16 %v2492
    %v2847 = vunpack.c.l.b16 %v2493
    %v2848 = vunpack.c.h.b16 %v2493
    %v2849 = vunpack.c.l.b16 %v2494
    %v2850 = vunpack.c.h.b16 %v2494
    %v2851 = vunpack.c.l.b16 %v2495
    %v2852 = vunpack.c.h.b16 %v2495
    %v2853 = vunpack.c.l.b16 %v2496
    %v2854 = vunpack.c.h.b16 %v2496
    %v2855 = vunpack.c.l.b16 %v2497
    %v2856 = vunpack.c.h.b16 %v2497
    %v2857 = vunpack.c.l.b16 %v2498
    %v2858 = vunpack.c.h.b16 %v2498
    %v2859 = vunpack.c.l.b16 %v2499
    %v2860 = vunpack.c.h.b16 %v2499
    %v2861 = vunpack.c.l.b16 %v2500
    %v2862 = vunpack.c.h.b16 %v2500
    %v2863 = vunpack.c.l.b16 %v2501
    %v2864 = vunpack.c.h.b16 %v2501
    %v2865 = vunpack.c.l.b16 %v2502
    %v2866 = vunpack.c.h.b16 %v2502
    %v2867 = vunpack.c.l.b16 %v2503
    %v2868 = vunpack.c.h.b16 %v2503
    %v2869 = vunpack.c.l.b16 %v2504
    %v2870 = vunpack.c.h.b16 %v2504
    %v2871 = vunpack.c.l.b16 %v2505
    %v2872 = vunpack.c.h.b16 %v2505
    %v2873 = vunpack.c.l.b16 %v2506
    %v2874 = vunpack.c.h.b16 %v2506
    %v2875 = vunpack.c.l.b16 %v2507
    %v2876 = vunpack.c.h.b16 %v2507
    %v2877 = vunpack.c.l.b16 %v2508
    %v2878 = vunpack.c.h.b16 %v2508
    %v2879 = vunpack.c.l.b16 %v2509
    %v2880 = vunpack.c.h.b16 %v2509
    %v2881 = vunpack.c.l.b16 %v2510
    %v2882 = vunpack.c.h.b16 %v2510
    %v2883 = vunpack.c.l.b16 %v2511
    %v2884 = vunpack.c.h.b16 %v2511
    %v2885 = vunpack.c.l.b16 %v2512
    %v2886 = vunpack.c.h.b16 %v2512
    %v2887 = vunpack.c.l.b16 %v2513
    %v2888 = vunpack.c.h.b16 %v2513
    %v2889 = vunpack.c.l.b16 %v2514
    %v2890 = vunpack.c.h.b16 %v2514
    %v2891 = vunpack.c.l.b16 %v2515
    %v2892 = vunpack.c.h.b16 %v2515
    %v2893 = vunpack.c.l.b16 %v2516
    %v2894 = vunpack.c.h.b16 %v2516
    %v2895 = vunpack.c.l.b16 %v2517
    %v2896 = vunpack.c.h.b16 %v2517
    %v2897 = vunpack.c.l.b16 %v2518
    %v2898 = vunpack.c.h.b16 %v2518
    %v2899 = vunpack.c.l.b16 %v2519
    %v2900 = vunpack.c.h.b16 %v2519
    %v2901 = vunpack.c.l.b16 %v2520
    %v2902 = vunpack.c.h.b16 %v2520
    %v2903 = vunpack.c.l.b16 %v2521
    %v2904 = vunpack.c.h.b16 %v2521
    %v2905 = vunpack.c.l.b16 %v2522
    %v2906 = vunpack.c.h.b16 %v2522
    %v2907 = vunpack.c.l.b16 %v2523
    %v2908 = vunpack.c.h.b16 %v2523
    %v2909 = vunpack.c.l.b16 %v2524
    %v2910 = vunpack.c.h.b16 %v2524
    %v2911 = vunpack.c.l.b16 %v2525
    %v2912 = vunpack.c.h.b16 %v2525
    %v2913 = vunpack.c.l.b16 %v2526
    %v2914 = vunpack.c.h.b16 %v2526
    %v2915 = vunpack.c.l.b16 %v2527
    %v2916 = vunpack.c.h.b16 %v2527
    %v2917 = vunpack.c.l.b16 %v2528
    %v2918 = vunpack.c.h.b16 %v2528
    %v2919 = vunpack.c.l.b16 %v2529
    %v2920 = vunpack.c.h.b16 %v2529
    %v2921 = vunpack.c.l.b16 %v2530
    %v2922 = vunpack.c.h.b16 %v2530
    %v2923 = vunpack.c.l.b16 %v2531
    %v2924 = vunpack.c.h.b16 %v2531
    %v2925 = vunpack.c.l.b16 %v2532
    %v2926 = vunpack.c.h.b16 %v2532
    %v2927 = vunpack.c.l.b16 %v2533
    %v2928 = vunpack.c.h.b16 %v2533
    %v2929 = vunpack.c.l.b16 %v2534
    %v2930 = vunpack.c.h.b16 %v2534
    %v2931 = vunpack.c.l.b16 %v2535
    %v2932 = vunpack.c.h.b16 %v2535
    %v2933 = vunpack.c.l.b16 %v2536
    %v2934 = vunpack.c.h.b16 %v2536
    %v2935 = vunpack.c.l.b16 %v2537
    %v2936 = vunpack.c.h.b16 %v2537
    %v2937 = vunpack.c.l.b16 %v2538
    %v2938 = vunpack.c.h.b16 %v2538
    %v2939 = vunpack.c.l.b16 %v2539
    %v2940 = vunpack.c.h.b16 %v2539
    %v2941 = vunpack.c.l.b16 %v2540
    %v2942 = vunpack.c.h.b16 %v2540
    %v2943 = vunpack.c.l.b16 %v2541
    %v2944 = vunpack.c.h.b16 %v2541
    %v2945 = vunpack.c.l.b16 %v2542
    %v2946 = vunpack.c.h.b16 %v2542
    %v2947 = vunpack.c.l.b16 %v2543
    %v2948 = vunpack.c.h.b16 %v2543
    %v2949 = vunpack.c.l.b16 %v2544
    %v2950 = vunpack.c.h.b16 %v2544
    %v2951 = vpack.c.b16 %v2699, %v2695
    %v2952 = vpack.c.b16 %v2700, %v2696
    %v2953 = vpack.c.b16 %v2701, %v2697
    %v2954 = vpack.c.b16 %v2702, %v2698
    %v2955 = vpack.c.b16 %v2707, %v2703
    %v2956 = vpack.c.b16 %v2708, %v2704
    %v2957 = vpack.c.b16 %v2709, %v2705
    %v2958 = vpack.c.b16 %v2710, %v2706
    %v2959 = vpack.c.b16 %v2715, %v2711
    %v2960 = vpack.c.b16 %v2716, %v2712
    %v2961 = vpack.c.b16 %v2717, %v2713
    %v2962 = vpack.c.b16 %v2718, %v2714
    %v2963 = vpack.c.b16 %v2723, %v2719
    %v2964 = vpack.c.b16 %v2724, %v2720
    %v2965 = vpack.c.b16 %v2725, %v2721
    %v2966 = vpack.c.b16 %v2726, %v2722
    %v2967 = vpack.c.b16 %v2731, %v2727
    %v2968 = vpack.c.b16 %v2732, %v2728
    %v2969 = vpack.c.b16 %v2733, %v2729
    %v2970 = vpack.c.b16 %v2734, %v2730
    %v2971 = vpack.c.b16 %v2739, %v2735
    %v2972 = vpack.c.b16 %v2740, %v2736
    %v2973 = vpack.c.b16 %v2741, %v2737
    %v2974 = vpack.c.b16 %v2742, %v2738
    %v2975 = vpack.c.b16 %v2747, %v2743
    %v2976 = vpack.c.b16 %v2748, %v2744
    %v2977 = vpack.c.b16 %v2749, %v2745
    %v2978 = vpack.c.b16 %v2750, %v2746
    %v2979 = vpack.c.b16 %v2755, %v2751
    %v2980 = vpack.c.b16 %v2756, %v2752
    %v2981 = vpack.c.b16 %v2757, %v2753
    %v2982 = vpack.c.b16 %v2758, %v2754
    %v2983 = vpack.c.b16 %v2763, %v2759
    %v2984 = vpack.c.b16 %v2764, %v2760
    %v2985 = vpack.c.b16 %v2765, %v2761
    %v2986 = vpack.c.b16 %v2766, %v2762
    %v2987 = vpack.c.b16 %v2771, %v2767
    %v2988 = vpack.c.b16 %v2772, %v2768
    %v2989 = vpack.c.b16 %v2773, %v2769
    %v2990 = vpack.c.b16 %v2774, %v2770
    %v2991 = vpack.c.b16 %v2779, %v2775
    %v2992 = vpack.c.b16 %v2780, %v2776
    %v2993 = vpack.c.b16 %v2781, %v2777
    %v2994 = vpack.c.b16 %v2782, %v2778
    %v2995 = vpack.c.b16 %v2787, %v2783
    %v2996 = vpack.c.b16 %v2788, %v2784
    %v2997 = vpack.c.b16 %v2789, %v2785
    %v2998 = vpack.c.b16 %v2790, %v2786
    %v2999 = vpack.c.b16 %v2795, %v2791
    %v3000 = vpack.c.b16 %v2796, %v2792
    %v3001 = vpack.c.b16 %v2797, %v2793
    %v3002 = vpack.c.b16 %v2798, %v2794
    %v3003 = vpack.c.b16 %v2803, %v2799
    %v3004 = vpack.c.b16 %v2804, %v2800
    %v3005 = vpack.c.b16 %v2805, %v2801
    %v3006 = vpack.c.b16 %v2806, %v2802
    %v3007 = vpack.c.b16 %v2811, %v2807
    %v3008 = vpack.c.b16 %v2812, %v2808
    %v3009 = vpack.c.b16 %v2813, %v2809
    %v3010 = vpack.c.b16 %v2814, %v2810
    %v3011 = vpack.c.b16 %v2819, %v2815
    %v3012 = vpack.c.b16 %v2820, %v2816
    %v3013 = vpack.c.b16 %v2821, %v2817
    %v3014 = vpack.c.b16 %v2822, %v2818
    %v3015 = vpack.c.b16 %v2827, %v2823
    %v3016 = vpack.c.b16 %v2828, %v2824
    %v3017 = vpack.c.b16 %v2829, %v2825
    %v3018 = vpack.c.b16 %v2830, %v2826
    %v3019 = vpack.c.b16 %v2835, %v2831
    %v3020 = vpack.c.b16 %v2836, %v2832
    %v3021 = vpack.c.b16 %v2837, %v2833
    %v3022 = vpack.c.b16 %v2838, %v2834
    %v3023 = vpack.c.b16 %v2843, %v2839
    %v3024 = vpack.c.b16 %v2844, %v2840
    %v3025 = vpack.c.b16 %v2845, %v2841
    %v3026 = vpack.c.b16 %v2846, %v2842
    %v3027 = vpack.c.b16 %v2851, %v2847
    %v3028 = vpack.c.b16 %v2852, %v2848
    %v3029 = vpack.c.b16 %v2853, %v2849
    %v3030 = vpack.c.b16 %v2854, %v2850
    %v3031 = vpack.c.b16 %v2859, %v2855
    %v3032 = vpack.c.b16 %v2860, %v2856
    %v3033 = vpack.c.b16 %v2861, %v2857
    %v3034 = vpack.c.b16 %v2862, %v2858
    %v3035 = vpack.c.b16 %v2867, %v2863
    %v3036 = vpack.c.b16 %v2868, %v2864
    %v3037 = vpack.c.b16 %v2869, %v2865
    %v3038 = vpack.c.b16 %v2870, %v2866
    %v3039 = vpack.c.b16 %v2875, %v2871
    %v3040 = vpack.c.b16 %v2876, %v2872
    %v3041 = vpack.c.b16 %v2877, %v2873
    %v3042 = vpack.c.b16 %v2878, %v2874
    %v3043 = vpack.c.b16 %v2883, %v2879
    %v3044 = vpack.c.b16 %v2884, %v2880
    %v3045 = vpack.c.b16 %v2885, %v2881
    %v3046 = vpack.c.b16 %v2886, %v2882
    %v3047 = vpack.c.b16 %v2891, %v2887
    %v3048 = vpack.c.b16 %v2892, %v2888
    %v3049 = vpack.c.b16 %v2893, %v2889
    %v3050 = vpack.c.b16 %v2894, %v2890
    %v3051 = vpack.c.b16 %v2899, %v2895
    %v3052 = vpack.c.b16 %v2900, %v2896
    %v3053 = vpack.c.b16 %v2901, %v2897
    %v3054 = vpack.c.b16 %v2902, %v2898
    %v3055 = vpack.c.b16 %v2907, %v2903
    %v3056 = vpack.c.b16 %v2908, %v2904
    %v3057 = vpack.c.b16 %v2909, %v2905
    %v3058 = vpack.c.b16 %v2910, %v2906
    %v3059 = vpack.c.b16 %v2915, %v2911
    %v3060 = vpack.c.b16 %v2916, %v2912
    %v3061 = vpack.c.b16 %v2917, %v2913
    %v3062 = vpack.c.b16 %v2918, %v2914
    %v3063 = vpack.c.b16 %v2923, %v2919
    %v3064 = vpack.c.b16 %v2924, %v2920
    %v3065 = vpack.c.b16 %v2925, %v2921
    %v3066 = vpack.c.b16 %v2926, %v2922
    %v3067 = vpack.c.b16 %v2931, %v2927
    %v3068 = vpack.c.b16 %v2932, %v2928
    %v3069 = vpack.c.b16 %v2933, %v2929
    %v3070 = vpack.c.b16 %v2934, %v2930
    %v3071 = vpack.c.b16 %v2939, %v2935
    %v3072 = vpack.c.b16 %v2940, %v2936
    %v3073 = vpack.c.b16 %v2941, %v2937
    %v3074 = vpack.c.b16 %v2942, %v2938
    %v3075 = vpack.c.b16 %v2947, %v2943
    %v3076 = vpack.c.b16 %v2948, %v2944
    %v3077 = vpack.c.b16 %v2949, %v2945
    %v3078 = vpack.c.b16 %v2950, %v2946
    %3207 = vmatprep.subr.bf16.mxu0 %v2952
    %3208 = vmatpush1.bf16.msra.mxu0 %v2951
    %3209 = vmatprep.subr.bf16.mxu0 %v2956
    %3210 = vmatpush1.bf16.msra.mxu0 %v2955
    %3211 = vmatprep.subr.bf16.mxu0 %v2960
    %3212 = vmatpush1.bf16.msra.mxu0 %v2959
    %3213 = vmatprep.subr.bf16.mxu0 %v2964
    %3214 = vmatpush1.bf16.msra.mxu0 %v2963
    %3215 = vmatprep.subr.bf16.mxu0 %v2968
    %3216 = vmatpush1.bf16.msra.mxu0 %v2967
    %3217 = vmatprep.subr.bf16.mxu0 %v2972
    %3218 = vmatpush1.bf16.msra.mxu0 %v2971
    %3219 = vmatprep.subr.bf16.mxu0 %v2976
    %3220 = vmatpush1.bf16.msra.mxu0 %v2975
    %3221 = vmatprep.subr.bf16.mxu0 %v2980
    %3222 = vmatpush1.bf16.msra.mxu0 %v2979
    %3223 = vmatprep.subr.bf16.mxu0 %v2984
    %3224 = vmatpush1.bf16.msra.mxu0 %v2983
    %3225 = vmatprep.subr.bf16.mxu0 %v2988
    %3226 = vmatpush1.bf16.msra.mxu0 %v2987
    %3227 = vmatprep.subr.bf16.mxu0 %v2992
    %3228 = vmatpush1.bf16.msra.mxu0 %v2991
    %3229 = vmatprep.subr.bf16.mxu0 %v2996
    %3230 = vmatpush1.bf16.msra.mxu0 %v2995
    %3231 = vmatprep.subr.bf16.mxu0 %v3000
    %3232 = vmatpush1.bf16.msra.mxu0 %v2999
    %3233 = vmatprep.subr.bf16.mxu0 %v3004
    %3234 = vmatpush1.bf16.msra.mxu0 %v3003
    %3235 = vmatprep.subr.bf16.mxu0 %v3008
    %3236 = vmatpush1.bf16.msra.mxu0 %v3007
    %3237 = vmatprep.subr.bf16.mxu0 %v3012
    %3238 = vmatpush1.bf16.msra.mxu0 %v3011
    %3239 = vmatprep.mubr.bf16.mxu0 %v2414
    %3240 = vmatmul.mubr.bf16.gmra.mrb[0].mxu0 %v2413
    %v3241 = vpop.f32.mrb[0].mxu0
    %v3242 = vadd.f32 %v2550, %v3241
    %v3243 = vpop.f32.mrb[0].mxu0
    %v3244 = vadd.f32 %v2554, %v3243
    %v3245 = vpop.f32.mrb[0].mxu0
    %v3246 = vpop.f32.mrb[0].mxu0
    %3247 = vdwg.mxu0
    %3248 = vmatprep.subr.bf16.mxu0 %v3016
    %3249 = vmatpush1.bf16.msra.mxu0 %v3015
    %3250 = vmatprep.subr.bf16.mxu0 %v3020
    %3251 = vmatpush1.bf16.msra.mxu0 %v3019
    %3252 = vmatprep.subr.bf16.mxu0 %v3024
    %3253 = vmatpush1.bf16.msra.mxu0 %v3023
    %3254 = vmatprep.subr.bf16.mxu0 %v3028
    %3255 = vmatpush1.bf16.msra.mxu0 %v3027
    %3256 = vmatprep.subr.bf16.mxu0 %v3032
    %3257 = vmatpush1.bf16.msra.mxu0 %v3031
    %3258 = vmatprep.subr.bf16.mxu0 %v3036
    %3259 = vmatpush1.bf16.msra.mxu0 %v3035
    %3260 = vmatprep.subr.bf16.mxu0 %v3040
    %3261 = vmatpush1.bf16.msra.mxu0 %v3039
    %3262 = vmatprep.subr.bf16.mxu0 %v3044
    %3263 = vmatpush1.bf16.msra.mxu0 %v3043
    %3264 = vmatprep.subr.bf16.mxu0 %v3048
    %3265 = vmatpush1.bf16.msra.mxu0 %v3047
    %3266 = vmatprep.subr.bf16.mxu0 %v3052
    %3267 = vmatpush1.bf16.msra.mxu0 %v3051
    %3268 = vmatprep.subr.bf16.mxu0 %v3056
    %3269 = vmatpush1.bf16.msra.mxu0 %v3055
    %3270 = vmatprep.subr.bf16.mxu0 %v3060
    %3271 = vmatpush1.bf16.msra.mxu0 %v3059
    %3272 = vmatprep.subr.bf16.mxu0 %v3064
    %3273 = vmatpush1.bf16.msra.mxu0 %v3063
    %3274 = vmatprep.subr.bf16.mxu0 %v3068
    %3275 = vmatpush1.bf16.msra.mxu0 %v3067
    %3276 = vmatprep.subr.bf16.mxu0 %v3072
    %3277 = vmatpush1.bf16.msra.mxu0 %v3071
    %3278 = vmatprep.subr.bf16.mxu0 %v3076
    %3279 = vmatpush1.bf16.msra.mxu0 %v3075
    %3280 = vmatprep.mubr.bf16.mxu0 %v2416
    %3281 = vmatmul.mubr.bf16.gmra.mrb[0].mxu0 %v2415
    %v3282 = vpop.f32.mrb[0].mxu0
    %v3283 = vadd.f32 %v3242, %v3282
    %v3284 = vpop.f32.mrb[0].mxu0
    %v3285 = vadd.f32 %v3244, %v3284
    %v3286 = vpop.f32.mrb[0].mxu0
    %v3287 = vpop.f32.mrb[0].mxu0
    %3288 = vdwg.mxu0
    %3289 = vmatprep.subr.bf16.mxu0 %v2954
    %3290 = vmatpush1.bf16.msra.mxu0 %v2953
    %3291 = vmatprep.subr.bf16.mxu0 %v2958
    %3292 = vmatpush1.bf16.msra.mxu0 %v2957
    %3293 = vmatprep.subr.bf16.mxu0 %v2962
    %3294 = vmatpush1.bf16.msra.mxu0 %v2961
    %3295 = vmatprep.subr.bf16.mxu0 %v2966
    %3296 = vmatpush1.bf16.msra.mxu0 %v2965
    %3297 = vmatprep.subr.bf16.mxu0 %v2970
    %3298 = vmatpush1.bf16.msra.mxu0 %v2969
    %3299 = vmatprep.subr.bf16.mxu0 %v2974
    %3300 = vmatpush1.bf16.msra.mxu0 %v2973
    %3301 = vmatprep.subr.bf16.mxu0 %v2978
    %3302 = vmatpush1.bf16.msra.mxu0 %v2977
    %3303 = vmatprep.subr.bf16.mxu0 %v2982
    %3304 = vmatpush1.bf16.msra.mxu0 %v2981
    %3305 = vmatprep.subr.bf16.mxu0 %v2986
    %3306 = vmatpush1.bf16.msra.mxu0 %v2985
    %3307 = vmatprep.subr.bf16.mxu0 %v2990
    %3308 = vmatpush1.bf16.msra.mxu0 %v2989
    %3309 = vmatprep.subr.bf16.mxu0 %v2994
    %3310 = vmatpush1.bf16.msra.mxu0 %v2993
    %3311 = vmatprep.subr.bf16.mxu0 %v2998
    %3312 = vmatpush1.bf16.msra.mxu0 %v2997
    %3313 = vmatprep.subr.bf16.mxu0 %v3002
    %3314 = vmatpush1.bf16.msra.mxu0 %v3001
    %3315 = vmatprep.subr.bf16.mxu0 %v3006
    %3316 = vmatpush1.bf16.msra.mxu0 %v3005
    %3317 = vmatprep.subr.bf16.mxu0 %v3010
    %3318 = vmatpush1.bf16.msra.mxu0 %v3009
    %3319 = vmatprep.subr.bf16.mxu0 %v3014
    %3320 = vmatpush1.bf16.msra.mxu0 %v3013
    %3321 = vmatprep.mubr.bf16.mxu0 %v2414
    %3322 = vmatmul.mubr.bf16.gmra.mrb[0].mxu0 %v2413
    %v3323 = vpop.f32.mrb[0].mxu0
    %v3324 = vadd.f32 %v2558, %v3323
    %v3325 = vpop.f32.mrb[0].mxu0
    %v3326 = vadd.f32 %v2562, %v3325
    %v3327 = vpop.f32.mrb[0].mxu0
    %v3328 = vpop.f32.mrb[0].mxu0
    %3329 = vdwg.mxu0
    %3330 = vmatprep.subr.bf16.mxu0 %v3018
    %3331 = vmatpush1.bf16.msra.mxu0 %v3017
    %3332 = vmatprep.subr.bf16.mxu0 %v3022
    %3333 = vmatpush1.bf16.msra.mxu0 %v3021
    %3334 = vmatprep.subr.bf16.mxu0 %v3026
    %3335 = vmatpush1.bf16.msra.mxu0 %v3025
    %3336 = vmatprep.subr.bf16.mxu0 %v3030
    %3337 = vmatpush1.bf16.msra.mxu0 %v3029
    %3338 = vmatprep.subr.bf16.mxu0 %v3034
    %3339 = vmatpush1.bf16.msra.mxu0 %v3033
    %3340 = vmatprep.subr.bf16.mxu0 %v3038
    %3341 = vmatpush1.bf16.msra.mxu0 %v3037
    %3342 = vmatprep.subr.bf16.mxu0 %v3042
    %3343 = vmatpush1.bf16.msra.mxu0 %v3041
    %3344 = vmatprep.subr.bf16.mxu0 %v3046
    %3345 = vmatpush1.bf16.msra.mxu0 %v3045
    %3346 = vmatprep.subr.bf16.mxu0 %v3050
    %3347 = vmatpush1.bf16.msra.mxu0 %v3049
    %3348 = vmatprep.subr.bf16.mxu0 %v3054
    %3349 = vmatpush1.bf16.msra.mxu0 %v3053
    %3350 = vmatprep.subr.bf16.mxu0 %v3058
    %3351 = vmatpush1.bf16.msra.mxu0 %v3057
    %3352 = vmatprep.subr.bf16.mxu0 %v3062
    %3353 = vmatpush1.bf16.msra.mxu0 %v3061
    %3354 = vmatprep.subr.bf16.mxu0 %v3066
    %3355 = vmatpush1.bf16.msra.mxu0 %v3065
    %3356 = vmatprep.subr.bf16.mxu0 %v3070
    %3357 = vmatpush1.bf16.msra.mxu0 %v3069
    %3358 = vmatprep.subr.bf16.mxu0 %v3074
    %3359 = vmatpush1.bf16.msra.mxu0 %v3073
    %3360 = vmatprep.subr.bf16.mxu0 %v3078
    %3361 = vmatpush1.bf16.msra.mxu0 %v3077
    %3362 = vmatprep.mubr.bf16.mxu0 %v2416
    %3363 = vmatmul.mubr.bf16.gmra.mrb[0].mxu0 %v2415
    %v3364 = vpop.f32.mrb[0].mxu0
    %v3365 = vadd.f32 %v3324, %v3364
    %v3366 = vpop.f32.mrb[0].mxu0
    %v3367 = vadd.f32 %v3326, %v3366
    %v3368 = vpop.f32.mrb[0].mxu0
    %v3369 = vpop.f32.mrb[0].mxu0
    %3370 = vdwg.mxu0
    %v3375 = vcombine.low %v3283, %v3285
    %v3376 = vcombine.low %v3365, %v3367
    %v3378 = vunpack.c.l.s4 1983009808
    %v3379 = vunpack.c.0.s8 %v3378
    %v3380 = vlaneseq
    %v3381 = vshrl.u32 %v3380, 7
    %v3382 = vsub.s32 %v3379, %v3381
    %v3383 = vrot.slane %v3375, %v3382
    %v3385 = vunpack.c.l.s4 1983009808
    %v3386 = vunpack.c.0.s8 %v3385
    %v3387 = vlaneseq
    %v3388 = vshrl.u32 %v3387, 7
    %v3389 = vsub.s32 %v3386, %v3388
    %v3390 = vrot.slane %v3376, %v3389
    %v3391 = vcombine.low %v3383, %v3390
    %3393 = vst [vmem:[#allocation7] sm:$0xff] %v3391
    // Predicated region
    $region42: #{tpu_custom_call.1} parent=1 // pred_check
      _
    $region43: #{tpu_custom_call.1} parent=1 // pred_check_branch
      %3395 = sbr.rel (0) target = $region45
    $region44: #{tpu_custom_call.1} parent=1 // pred_region
      %s3397 = ssub.s32 128, 128
      %3398 = vsyncadd [#allocation4], %s3397
      %s3400 = sshll.u32 [#allocation7], 4
      %s3401 = int_to_ptr.vmem [resolvable:$true] %s3400
      %3403 = dma.vmem_to_hbm [thread:$0]  %s3401, 128, %s8, [#allocation4]
    $region45: #{tpu_custom_call.1} parent=1 // pred_fallthru
      _
    // Predicated region
    $region46: #{tpu_custom_call.1} parent=1 // pred_check
      _
    $region47: #{tpu_custom_call.1} parent=1 // pred_check_branch
      %3405 = sbr.rel (0) target = $region49
    $region48: #{tpu_custom_call.1} parent=1 // pred_region
      %3406 = dma.done [#allocation4], 128
    $region49: #{tpu_custom_call.1} parent=1 // pred_fallthru
      _
    %3407 = vsyncpa [#allocation3], 1
    %3408 = vsyncpa [#allocation6], 1
    %3409 = vsyncpa [#allocation4], 1

</llo_original>
